<compile_context>
chip_gen: v7x
topology: tpu7x:2x2x1
jax: 0.10.0
libtpu: 0.0.40
codegen_flags: <defaults>
</compile_context>

<pallas_src>
import numpy as np
import jax
import jax.numpy as jnp
from jax import lax
from jax.experimental import pallas as pl
from jax.experimental.pallas import tpu as pltpu

H = 16
W = 16
CIN = 32              # in_channels
CMID = CIN // 2       # 16
WC = W * CIN          # 512 lanes per image row (kernel input / output)
WM = W * CMID         # 256 lanes per image row (intermediates)
PADR = 8              # sublane-aligned row padding of the staging buffer


def scfm_kernel(x_ref, mA_ref, mB_ref, bB_ref, mC_ref, bC_ref,
                pool_ref, w2_ref, ob_ref, out_ref, ybuf):
    bb = x_ref.shape[0]              # samples in this batch block
    R = bb * H                       # buffer rows (one per image row)

    x = x_ref[...].reshape(R, WC)    # (R, 512) lane-dense

    # dy = +-1 validity per buffer row (row index inside its own sample).
    ry = lax.broadcasted_iota(jnp.int32, (R, 1), 0) % H
    up_ok = ry > 0                   # dy = -1 stays inside the image
    dn_ok = ry < H - 1               # dy = +1 stays inside the image

    # Zero the pad rows so any stray read there is well defined (the dy masks
    # below already kill them; keep selects — never turn masks into multiplies).
    ybuf[0:PADR, :] = jnp.zeros((PADR, 3 * WM), jnp.float32)
    ybuf[PADR + R:PADR + R + PADR, :] = jnp.zeros((PADR, 3 * WM), jnp.float32)

    def shift_add(y0):
        # conv output = dy=0 block + row-shifted dy=-1 / dy=+1 blocks.
        # Both staged reads are full 256-lane slabs (dense), only +-1 row off.
        ym = ybuf[PADR - 1:PADR - 1 + R, 0:WM]        # dy=-1 block read at r-1
        yp = ybuf[PADR + 1:PADR + 1 + R, WM:2 * WM]   # dy=+1 block read at r+1
        return y0 + jnp.where(up_ok, ym, 0.0) + jnp.where(dn_ok, yp, 0.0)

    # --- stage A: conv_first_r{,2,3,4} fused (banded per-row weights, dx taps
    #     pre-folded) with conv_h appended as a 4th output block -> one matmul.
    yA = jnp.dot(x, mA_ref[...], preferred_element_type=jnp.float32)   # (R, 4*WM)
    ybuf[PADR:PADR + R, 0:2 * WM] = yA[:, 0:2 * WM]          # dy=-1 | dy=+1
    ybuf[PADR:PADR + R, 2 * WM:3 * WM] = yA[:, 3 * WM:4 * WM]  # conv_h skip
    x1 = shift_add(yA[:, 2 * WM:3 * WM])

    # NOTE: from here on only ybuf columns [0, 2*WM) may be written; the
    # conv_h skip block must survive in columns [2*WM, 3*WM) until the
    # instance norm below.

    # --- stage B: conv0 (3x3, groups=4) with the 1x1 conv1 folded in.
    yB = jnp.dot(x1, mB_ref[...], preferred_element_type=jnp.float32)  # (R, 3*WM)
    ybuf[PADR:PADR + R, 0:2 * WM] = yB[:, 0:2 * WM]
    x1 = shift_add(yB[:, 2 * WM:3 * WM]) + bB_ref[...]

    # --- stage C: conv2 (3x3, groups=4, bias).
    yC = jnp.dot(x1, mC_ref[...], preferred_element_type=jnp.float32)
    ybuf[PADR:PADR + R, 0:2 * WM] = yC[:, 0:2 * WM]
    x1 = shift_add(yC[:, 2 * WM:3 * WM]) + bC_ref[...]

    # --- InstanceNorm2d(CMID) on the conv_h skip branch: per sample, per
    #     channel over HxW, biased variance, eps=1e-5 (affine folded in w2/ob).
    #     pool = kron(ones(W,W), I_CMID)/(H*W): reduces over the 16 pixel
    #     groups of a row and broadcasts the per-channel result back to lanes.
    skip = ybuf[PADR:PADR + R, 2 * WM:3 * WM]
    s3 = skip.reshape(bb, H, WM)
    mean_b = jnp.dot(jnp.sum(s3, axis=1), pool_ref[...],
                     preferred_element_type=jnp.float32)               # (bb, WM)
    cent = s3 - mean_b[:, None, :]
    var_b = jnp.dot(jnp.sum(cent * cent, axis=1), pool_ref[...],
                    preferred_element_type=jnp.float32)
    inst = (cent * lax.rsqrt(var_b + 1e-5)[:, None, :]).reshape(R, WM)

    # --- conv_2 (1x1 over concat([x_1, inst])) + ReLU as ONE K=512 matmul.
    cat = jnp.concatenate([x1, inst], axis=-1)                          # (R, 2*WM)
    out = jnp.dot(cat, w2_ref[...], preferred_element_type=jnp.float32) + ob_ref[...]
    out_ref[...] = jnp.maximum(out, 0.0).reshape(bb, H, WC)


def scfm_forward(x_nhwc, params, block_b=32):
    """x_nhwc: (B, H, W, CIN) float32. Returns (B, H, W, CIN) float32."""
    B = x_nhwc.shape[0]
    bb = min(block_b, B)
    nblk = -(-B // bb)
    Bp = nblk * bb
    x = x_nhwc.reshape(B, H, WC)                 # lane-dense I/O (last dim 512)
    if Bp != B:
        x = jnp.pad(x, ((0, Bp - B), (0, 0), (0, 0)))

    def full_spec(a):
        zeros = (0,) * a.ndim
        return pl.BlockSpec(a.shape, lambda i, z=zeros: z)

    R = bb * H
    out = pl.pallas_call(
        scfm_kernel,
        out_shape=jax.ShapeDtypeStruct((Bp, H, WC), jnp.float32),
        grid=(nblk,),
        in_specs=([pl.BlockSpec((bb, H, WC), lambda i: (i, 0, 0))]
                  + [full_spec(a) for a in params]),
        out_specs=pl.BlockSpec((bb, H, WC), lambda i: (i, 0, 0)),
        scratch_shapes=[pltpu.VMEM((R + 2 * PADR, 3 * WM), jnp.float32)],
        compiler_params=pltpu.CompilerParams(
            dimension_semantics=("parallel",),
            vmem_limit_bytes=48 * 1024 * 1024),
    )(x, *params)
    return out[:B].reshape(B, H, W, CIN)


# ----------------------------- parameter glue -------------------------------

def _grouped_tap_dense(w_oihw, groups):
    """torch grouped conv weight (O, I/groups, kh, kw) -> dense (kh*kw, I, O)."""
    w = np.asarray(w_oihw, np.float32)
    O, Ig, kh, kw = w.shape
    I = Ig * groups
    Og = O // groups
    dense = np.zeros((kh * kw, I, O), np.float32)
    for g in range(groups):
        blk = np.transpose(w[g * Og:(g + 1) * Og], (2, 3, 1, 0)).reshape(kh * kw, Ig, Og)
        dense[:, g * Ig:(g + 1) * Ig, g * Og:(g + 1) * Og] = blk
    return dense


def _banded(taps_by_dx):
    """Per-row conv matrix: M[(q+dx)*Ci+i, q*Co+o] = taps[dx][i,o] (dx borders
    zero-padded by simply omitting the out-of-range blocks)."""
    out = None
    for dx, wt in taps_by_dx.items():
        m = np.kron(np.eye(W, k=-dx, dtype=np.float32), wt.astype(np.float32))
        out = m if out is None else out + m
    return out


def _kron_pix(w_io):
    """Per-pixel 1x1 mixing replicated across the W pixels of a row."""
    return np.kron(np.eye(W, dtype=np.float32), np.asarray(w_io, np.float32))


def _dy_banded_blocks(dense_taps, compose=None):
    blocks = {}
    for dy in (-1, 0, 1):
        taps = {}
        for dx in (-1, 0, 1):
            t = (dy + 1) * 3 + (dx + 1)
            wt = dense_taps[t]
            if compose is not None:
                wt = wt @ compose
            taps[dx] = wt
        blocks[dy] = _banded(taps)
    return blocks


def build_kernel_params(wts):
    dfirst = np.concatenate(
        [_grouped_tap_dense(wts[k], 2) for k in ('r1', 'r2', 'r3', 'r4')],
        axis=-1)                                         # (9, CIN, CMID)
    dense0 = _grouped_tap_dense(wts['c0'], 4)            # (9, CMID, CMID)
    dense2 = _grouped_tap_dense(wts['c2'], 4)
    w1 = np.asarray(wts['c1'], np.float32)[:, :, 0, 0].T   # (CMID, CMID) in->out
    wh = np.asarray(wts['h'], np.float32)[:, :, 0, 0].T    # (CIN, CMID)
    d2 = np.asarray(wts['c_2'], np.float32)[:, :, 0, 0].T  # (CIN, CIN)
    gam = np.asarray(wts['g'], np.float32)
    bet = np.asarray(wts['b'], np.float32)
    c0b = np.asarray(wts['c0b'], np.float32)
    c1b = np.asarray(wts['c1b'], np.float32)
    c2b = np.asarray(wts['c2b'], np.float32)

    # Column order everywhere: [dy=-1 | dy=+1 | dy=0 (| skip)] to match the
    # kernel's staging layout (only dy=+-1 blocks are staged; dy=0 is a value).
    bA = _dy_banded_blocks(dfirst)
    mA = np.concatenate([bA[-1], bA[1], bA[0], _kron_pix(wh)], axis=1)   # (WC, 4*WM)
    bBd = _dy_banded_blocks(dense0, compose=w1)
    mB = np.concatenate([bBd[-1], bBd[1], bBd[0]], axis=1)               # (WM, 3*WM)
    biasB = np.tile((c0b @ w1 + c1b).reshape(1, -1), (1, W))             # (1, WM)
    bCd = _dy_banded_blocks(dense2)
    mC = np.concatenate([bCd[-1], bCd[1], bCd[0]], axis=1)               # (WM, 3*WM)
    biasC = np.tile(c2b.reshape(1, -1), (1, W))                          # (1, WM)
    pool = np.kron(np.ones((W, W), np.float32),
                   np.eye(CMID, dtype=np.float32)) / float(H * W)        # (WM, WM)
    w2a = d2[:CMID]                          # conv_2 half acting on x_1
    w2b = gam.reshape(-1, 1) * d2[CMID:]     # instance half, gamma folded
    w2 = np.concatenate([_kron_pix(w2a), _kron_pix(w2b)], axis=0)        # (2*WM, WC)
    ob = np.tile(bet.reshape(1, -1) @ d2[CMID:], (1, W))                 # (1, WC)

    return tuple(jnp.asarray(a, jnp.float32)
                 for a in (mA, mB, biasB, mC, biasC, pool, w2, ob))


# --------------------------- pure-JAX reference ------------------------------

def _conv(x, w, groups=1, padding=0, bias=None):
    y = lax.conv_general_dilated(
        x, w, window_strides=(1, 1), padding=[(padding, padding)] * 2,
        dimension_numbers=('NCHW', 'OIHW', 'NCHW'), feature_group_count=groups)
    if bias is not None:
        y = y + bias.reshape(1, -1, 1, 1)
    return y


def ref_forward(x_nchw, wts):
    x1 = _conv(x_nchw, wts['r1'], groups=2, padding=1)
    x2 = _conv(x_nchw, wts['r2'], groups=2, padding=1)
    x3 = _conv(x_nchw, wts['r3'], groups=2, padding=1)
    x4 = _conv(x_nchw, wts['r4'], groups=2, padding=1)
    x_1 = jnp.concatenate([x1, x2, x3, x4], axis=1)
    x_1 = _conv(x_1, wts['c0'], groups=4, padding=1, bias=wts['c0b'])
    x_1 = _conv(x_1, wts['c1'], padding=0, bias=wts['c1b'])
    x_1 = _conv(x_1, wts['c2'], groups=4, padding=1, bias=wts['c2b'])
    skip = _conv(x_nchw, wts['h'], padding=0)
    mean = skip.mean(axis=(2, 3), keepdims=True)
    var = ((skip - mean) ** 2).mean(axis=(2, 3), keepdims=True)
    inst = (skip - mean) / jnp.sqrt(var + 1e-5)
    inst = inst * wts['g'].reshape(1, -1, 1, 1) + wts['b'].reshape(1, -1, 1, 1)
    out = jnp.concatenate([x_1, inst], axis=1)
    out = _conv(out, wts['c_2'], padding=0)
    return jnp.maximum(out, 0.0)


# ----------------------------------- main ------------------------------------

if __name__ == "__main__":
    key = jax.random.PRNGKey(0)
    ks = jax.random.split(key, 20)

    def rnd(k, shape, scale=0.1):
        return (scale * jax.random.normal(k, shape)).astype(jnp.float32)

    # torch-layout weights (OIHW, I = Cin // groups), deterministic init
    wts = {
        'r1': rnd(ks[0], (CIN // 8, CIN // 2, 3, 3)),
        'r2': rnd(ks[1], (CIN // 8, CIN // 2, 3, 3)),
        'r3': rnd(ks[2], (CIN // 8, CIN // 2, 3, 3)),
        'r4': rnd(ks[3], (CIN // 8, CIN // 2, 3, 3)),
        'c0': rnd(ks[4], (CMID, CMID // 4, 3, 3)),
        'c0b': rnd(ks[5], (CMID,)),
        'c1': rnd(ks[6], (CMID, CMID, 1, 1)),
        'c1b': rnd(ks[7], (CMID,)),
        'c2': rnd(ks[8], (CMID, CMID // 4, 3, 3)),
        'c2b': rnd(ks[9], (CMID,)),
        'h': rnd(ks[10], (CMID, CIN, 1, 1)),
        'c_2': rnd(ks[11], (CIN, CIN, 1, 1)),
        'g': (1.0 + 0.1 * jax.random.normal(ks[12], (CMID,))).astype(jnp.float32),
        'b': rnd(ks[13], (CMID,)),
    }
    params = build_kernel_params(wts)

    B = 2
    x_nchw = jax.random.normal(ks[14], (B, CIN, H, W), jnp.float32)
    x_nhwc = jnp.transpose(x_nchw, (0, 2, 3, 1))

    y_nhwc = scfm_forward(x_nhwc, params)
    y_nhwc = jax.block_until_ready(y_nhwc)

    y_ref = ref_forward(x_nchw, wts)
    y_kernel_nchw = jnp.transpose(y_nhwc, (0, 3, 1, 2))
    max_err = float(jnp.max(jnp.abs(y_kernel_nchw - y_ref)))
    assert max_err < 1e-3, f"mismatch vs reference: max_err={max_err}"

    print("KERNEL_OK")
</pallas_src>

<mosaic_0001>
module attributes {stable_mosaic.version = 11 : i64} {
  func.func @scfm_kernel(%arg0: i32, %arg1: memref<2x16x512xf32, #tpu.memory_space<vmem>>, %arg2: memref<512x1024xf32, #tpu.memory_space<vmem>>, %arg3: memref<256x768xf32, #tpu.memory_space<vmem>>, %arg4: memref<1x256xf32, #tpu.memory_space<vmem>>, %arg5: memref<256x768xf32, #tpu.memory_space<vmem>>, %arg6: memref<1x256xf32, #tpu.memory_space<vmem>>, %arg7: memref<256x256xf32, #tpu.memory_space<vmem>>, %arg8: memref<512x512xf32, #tpu.memory_space<vmem>>, %arg9: memref<1x512xf32, #tpu.memory_space<vmem>>, %arg10: memref<2x16x512xf32, #tpu.memory_space<vmem>>, %arg11: memref<48x768xf32, #tpu.memory_space<vmem>>) attributes {dimension_semantics = [#tpu.dimension_semantics<parallel>], iteration_bounds = array<i64: 1>, scalar_prefetch = 0 : i64, scratch_operands = 1 : i64, tpu.core_type = #tpu.core_type<tc>, window_params = [{transform_indices = @transform_0, window_bounds = array<i64: 2, 16, 512>}, {pipeline_mode = #tpu.pipeline_mode<synchronous>, transform_indices = @transform_1, window_bounds = array<i64: 512, 1024>}, {pipeline_mode = #tpu.pipeline_mode<synchronous>, transform_indices = @transform_2, window_bounds = array<i64: 256, 768>}, {pipeline_mode = #tpu.pipeline_mode<synchronous>, transform_indices = @transform_3, window_bounds = array<i64: 1, 256>}, {pipeline_mode = #tpu.pipeline_mode<synchronous>, transform_indices = @transform_4, window_bounds = array<i64: 256, 768>}, {pipeline_mode = #tpu.pipeline_mode<synchronous>, transform_indices = @transform_5, window_bounds = array<i64: 1, 256>}, {pipeline_mode = #tpu.pipeline_mode<synchronous>, transform_indices = @transform_6, window_bounds = array<i64: 256, 256>}, {pipeline_mode = #tpu.pipeline_mode<synchronous>, transform_indices = @transform_7, window_bounds = array<i64: 512, 512>}, {pipeline_mode = #tpu.pipeline_mode<synchronous>, transform_indices = @transform_8, window_bounds = array<i64: 1, 512>}, {transform_indices = @transform_9, window_bounds = array<i64: 2, 16, 512>}]} {
    %c0 = arith.constant 0 : index
    %c0_0 = arith.constant 0 : index
    %c0_1 = arith.constant 0 : index
    %0 = vector.load %arg1[%c0, %c0_0, %c0_1] : memref<2x16x512xf32, #tpu.memory_space<vmem>>, vector<2x16x512xf32>
    %1 = vector.shape_cast %0 : vector<2x16x512xf32> to vector<32x512xf32>
    %2 = tpu.iota {dimensions = array<i32: 0>} : vector<32x1xi32>
    %c16_i32 = arith.constant 16 : i32
    %c0_i32 = arith.constant 0 : i32
    %3 = arith.cmpi eq, %c16_i32, %c0_i32 : i32
    %c1_i32 = arith.constant 1 : i32
    %4 = arith.select %3, %c1_i32, %c16_i32 : i32
    %5 = vector.broadcast %4 : i32 to vector<32x1xi32>
    %6 = arith.remsi %2, %5 : vector<32x1xi32>
    %c0_i32_2 = arith.constant 0 : i32
    %7 = vector.broadcast %c0_i32_2 : i32 to vector<32x1xi32>
    %8 = arith.cmpi ne, %6, %7 : vector<32x1xi32>
    %c0_i32_3 = arith.constant 0 : i32
    %9 = vector.broadcast %c0_i32_3 : i32 to vector<32x1xi32>
    %10 = arith.cmpi slt, %6, %9 : vector<32x1xi32>
    %c0_i32_4 = arith.constant 0 : i32
    %11 = arith.cmpi slt, %4, %c0_i32_4 : i32
    %12 = vector.broadcast %11 : i1 to vector<32x1xi1>
    %13 = vector.broadcast %12 : vector<32x1xi1> to vector<32x1xi1>
    %14 = arith.xori %10, %13 : vector<32x1xi1>
    %15 = arith.andi %14, %8 : vector<32x1xi1>
    %16 = vector.broadcast %4 : i32 to vector<32x1xi32>
    %17 = arith.addi %6, %16 : vector<32x1xi32>
    %18 = arith.select %15, %17, %6 : vector<32x1xi1>, vector<32x1xi32>
    %c0_i32_5 = arith.constant 0 : i32
    %19 = vector.broadcast %c0_i32_5 : i32 to vector<32x1xi32>
    %20 = arith.cmpi sgt, %18, %19 : vector<32x1xi32>
    %c15_i32 = arith.constant 15 : i32
    %21 = vector.broadcast %c15_i32 : i32 to vector<32x1xi32>
    %22 = arith.cmpi slt, %18, %21 : vector<32x1xi32>
    %cst = arith.constant 0.000000e+00 : f32
    %23 = vector.broadcast %cst : f32 to vector<8x768xf32>
    %c0_6 = arith.constant 0 : index
    %c0_7 = arith.constant 0 : index
    %24 = vector.load %arg11[%c0_6, %c0_7] : memref<48x768xf32, #tpu.memory_space<vmem>>, vector<8x768xf32>
    tpu.vector_store %arg11[%c0_6, %c0_7], %23 {strides = array<i32>} : memref<48x768xf32, #tpu.memory_space<vmem>>, vector<8x768xf32>,
    %cst_8 = arith.constant 0.000000e+00 : f32
    %25 = vector.broadcast %cst_8 : f32 to vector<8x768xf32>
    %c40 = arith.constant 40 : index
    %c0_9 = arith.constant 0 : index
    %26 = vector.load %arg11[%c40, %c0_9] : memref<48x768xf32, #tpu.memory_space<vmem>>, vector<8x768xf32>
    tpu.vector_store %arg11[%c40, %c0_9], %25 {strides = array<i32>} : memref<48x768xf32, #tpu.memory_space<vmem>>, vector<8x768xf32>,
    %c0_10 = arith.constant 0 : index
    %c0_11 = arith.constant 0 : index
    %27 = vector.load %arg2[%c0_10, %c0_11] : memref<512x1024xf32, #tpu.memory_space<vmem>>, vector<512x1024xf32>
    %cst_12 = arith.constant dense<0.000000e+00> : vector<32x1024xf32>
    %28 = tpu.matmul %1, %27, %cst_12 {dimension_numbers = #tpu.dot_dimension_numbers<[1], [0], [0], [1], [0, 0, 1, 1], [], []>} : vector<32x512xf32>, vector<512x1024xf32>, vector<32x1024xf32> -> vector<32x1024xf32>
    %29 = vector.extract_strided_slice %28 {offsets = [0, 0], sizes = [32, 512], strides = [1, 1]} : vector<32x1024xf32> to vector<32x512xf32>
    %c8 = arith.constant 8 : index
    %c0_13 = arith.constant 0 : index
    %30 = vector.load %arg11[%c8, %c0_13] : memref<48x768xf32, #tpu.memory_space<vmem>>, vector<32x512xf32>
    tpu.vector_store %arg11[%c8, %c0_13], %29 {strides = array<i32>} : memref<48x768xf32, #tpu.memory_space<vmem>>, vector<32x512xf32>,
    %31 = vector.extract_strided_slice %28 {offsets = [0, 768], sizes = [32, 256], strides = [1, 1]} : vector<32x1024xf32> to vector<32x256xf32>
    %c8_14 = arith.constant 8 : index
    %c512 = arith.constant 512 : index
    %32 = vector.load %arg11[%c8_14, %c512] : memref<48x768xf32, #tpu.memory_space<vmem>>, vector<32x256xf32>
    tpu.vector_store %arg11[%c8_14, %c512], %31 {strides = array<i32>} : memref<48x768xf32, #tpu.memory_space<vmem>>, vector<32x256xf32>,
    %33 = vector.extract_strided_slice %28 {offsets = [0, 512], sizes = [32, 256], strides = [1, 1]} : vector<32x1024xf32> to vector<32x256xf32>
    %c7 = arith.constant 7 : index
    %c0_15 = arith.constant 0 : index
    %34 = vector.load %arg11[%c7, %c0_15] : memref<48x768xf32, #tpu.memory_space<vmem>>, vector<32x256xf32>
    %c9 = arith.constant 9 : index
    %c256 = arith.constant 256 : index
    %35 = vector.load %arg11[%c9, %c256] : memref<48x768xf32, #tpu.memory_space<vmem>>, vector<32x256xf32>
    %cst_16 = arith.constant 0.000000e+00 : f32
    %36 = vector.shape_cast %20 : vector<32x1xi1> to vector<32x1xi1>
    %37 = vector.broadcast %36 : vector<32x1xi1> to vector<32x256xi1>
    %38 = vector.broadcast %cst_16 : f32 to vector<32x256xf32>
    %39 = arith.select %37, %34, %38 : vector<32x256xi1>, vector<32x256xf32>
    %40 = arith.addf %33, %39 : vector<32x256xf32>
    %cst_17 = arith.constant 0.000000e+00 : f32
    %41 = vector.shape_cast %22 : vector<32x1xi1> to vector<32x1xi1>
    %42 = vector.broadcast %41 : vector<32x1xi1> to vector<32x256xi1>
    %43 = vector.broadcast %cst_17 : f32 to vector<32x256xf32>
    %44 = arith.select %42, %35, %43 : vector<32x256xi1>, vector<32x256xf32>
    %45 = arith.addf %40, %44 : vector<32x256xf32>
    %c0_18 = arith.constant 0 : index
    %c0_19 = arith.constant 0 : index
    %46 = vector.load %arg3[%c0_18, %c0_19] : memref<256x768xf32, #tpu.memory_space<vmem>>, vector<256x768xf32>
    %cst_20 = arith.constant dense<0.000000e+00> : vector<32x768xf32>
    %47 = tpu.matmul %45, %46, %cst_20 {dimension_numbers = #tpu.dot_dimension_numbers<[1], [0], [0], [1], [0, 0, 1, 1], [], []>} : vector<32x256xf32>, vector<256x768xf32>, vector<32x768xf32> -> vector<32x768xf32>
    %48 = vector.extract_strided_slice %47 {offsets = [0, 0], sizes = [32, 512], strides = [1, 1]} : vector<32x768xf32> to vector<32x512xf32>
    %c8_21 = arith.constant 8 : index
    %c0_22 = arith.constant 0 : index
    %49 = vector.load %arg11[%c8_21, %c0_22] : memref<48x768xf32, #tpu.memory_space<vmem>>, vector<32x512xf32>
    tpu.vector_store %arg11[%c8_21, %c0_22], %48 {strides = array<i32>} : memref<48x768xf32, #tpu.memory_space<vmem>>, vector<32x512xf32>,
    %50 = vector.extract_strided_slice %47 {offsets = [0, 512], sizes = [32, 256], strides = [1, 1]} : vector<32x768xf32> to vector<32x256xf32>
    %c7_23 = arith.constant 7 : index
    %c0_24 = arith.constant 0 : index
    %51 = vector.load %arg11[%c7_23, %c0_24] : memref<48x768xf32, #tpu.memory_space<vmem>>, vector<32x256xf32>
    %c9_25 = arith.constant 9 : index
    %c256_26 = arith.constant 256 : index
    %52 = vector.load %arg11[%c9_25, %c256_26] : memref<48x768xf32, #tpu.memory_space<vmem>>, vector<32x256xf32>
    %cst_27 = arith.constant 0.000000e+00 : f32
    %53 = vector.shape_cast %20 : vector<32x1xi1> to vector<32x1xi1>
    %54 = vector.broadcast %53 : vector<32x1xi1> to vector<32x256xi1>
    %55 = vector.broadcast %cst_27 : f32 to vector<32x256xf32>
    %56 = arith.select %54, %51, %55 : vector<32x256xi1>, vector<32x256xf32>
    %57 = arith.addf %50, %56 : vector<32x256xf32>
    %cst_28 = arith.constant 0.000000e+00 : f32
    %58 = vector.shape_cast %22 : vector<32x1xi1> to vector<32x1xi1>
    %59 = vector.broadcast %58 : vector<32x1xi1> to vector<32x256xi1>
    %60 = vector.broadcast %cst_28 : f32 to vector<32x256xf32>
    %61 = arith.select %59, %52, %60 : vector<32x256xi1>, vector<32x256xf32>
    %62 = arith.addf %57, %61 : vector<32x256xf32>
    %c0_29 = arith.constant 0 : index
    %c0_30 = arith.constant 0 : index
    %63 = vector.load %arg4[%c0_29, %c0_30] : memref<1x256xf32, #tpu.memory_space<vmem>>, vector<1x256xf32>
    %64 = vector.broadcast %63 : vector<1x256xf32> to vector<32x256xf32>
    %65 = arith.addf %62, %64 : vector<32x256xf32>
    %c0_31 = arith.constant 0 : index
    %c0_32 = arith.constant 0 : index
    %66 = vector.load %arg5[%c0_31, %c0_32] : memref<256x768xf32, #tpu.memory_space<vmem>>, vector<256x768xf32>
    %cst_33 = arith.constant dense<0.000000e+00> : vector<32x768xf32>
    %67 = tpu.matmul %65, %66, %cst_33 {dimension_numbers = #tpu.dot_dimension_numbers<[1], [0], [0], [1], [0, 0, 1, 1], [], []>} : vector<32x256xf32>, vector<256x768xf32>, vector<32x768xf32> -> vector<32x768xf32>
    %68 = vector.extract_strided_slice %67 {offsets = [0, 0], sizes = [32, 512], strides = [1, 1]} : vector<32x768xf32> to vector<32x512xf32>
    %c8_34 = arith.constant 8 : index
    %c0_35 = arith.constant 0 : index
    %69 = vector.load %arg11[%c8_34, %c0_35] : memref<48x768xf32, #tpu.memory_space<vmem>>, vector<32x512xf32>
    tpu.vector_store %arg11[%c8_34, %c0_35], %68 {strides = array<i32>} : memref<48x768xf32, #tpu.memory_space<vmem>>, vector<32x512xf32>,
    %70 = vector.extract_strided_slice %67 {offsets = [0, 512], sizes = [32, 256], strides = [1, 1]} : vector<32x768xf32> to vector<32x256xf32>
    %c7_36 = arith.constant 7 : index
    %c0_37 = arith.constant 0 : index
    %71 = vector.load %arg11[%c7_36, %c0_37] : memref<48x768xf32, #tpu.memory_space<vmem>>, vector<32x256xf32>
    %c9_38 = arith.constant 9 : index
    %c256_39 = arith.constant 256 : index
    %72 = vector.load %arg11[%c9_38, %c256_39] : memref<48x768xf32, #tpu.memory_space<vmem>>, vector<32x256xf32>
    %cst_40 = arith.constant 0.000000e+00 : f32
    %73 = vector.shape_cast %20 : vector<32x1xi1> to vector<32x1xi1>
    %74 = vector.broadcast %73 : vector<32x1xi1> to vector<32x256xi1>
    %75 = vector.broadcast %cst_40 : f32 to vector<32x256xf32>
    %76 = arith.select %74, %71, %75 : vector<32x256xi1>, vector<32x256xf32>
    %77 = arith.addf %70, %76 : vector<32x256xf32>
    %cst_41 = arith.constant 0.000000e+00 : f32
    %78 = vector.shape_cast %22 : vector<32x1xi1> to vector<32x1xi1>
    %79 = vector.broadcast %78 : vector<32x1xi1> to vector<32x256xi1>
    %80 = vector.broadcast %cst_41 : f32 to vector<32x256xf32>
    %81 = arith.select %79, %72, %80 : vector<32x256xi1>, vector<32x256xf32>
    %82 = arith.addf %77, %81 : vector<32x256xf32>
    %c0_42 = arith.constant 0 : index
    %c0_43 = arith.constant 0 : index
    %83 = vector.load %arg6[%c0_42, %c0_43] : memref<1x256xf32, #tpu.memory_space<vmem>>, vector<1x256xf32>
    %84 = vector.broadcast %83 : vector<1x256xf32> to vector<32x256xf32>
    %85 = arith.addf %82, %84 : vector<32x256xf32>
    %c8_44 = arith.constant 8 : index
    %c512_45 = arith.constant 512 : index
    %86 = vector.load %arg11[%c8_44, %c512_45] : memref<48x768xf32, #tpu.memory_space<vmem>>, vector<32x256xf32>
    %87 = vector.shape_cast %86 : vector<32x256xf32> to vector<2x16x256xf32>
    %cst_46 = arith.constant dense<0.000000e+00> : vector<2x256xf32>
    %88 = vector.multi_reduction <add>, %87, %cst_46 [1] : vector<2x16x256xf32> to vector<2x256xf32>
    %c0_47 = arith.constant 0 : index
    %c0_48 = arith.constant 0 : index
    %89 = vector.load %arg7[%c0_47, %c0_48] : memref<256x256xf32, #tpu.memory_space<vmem>>, vector<256x256xf32>
    %cst_49 = arith.constant dense<0.000000e+00> : vector<2x256xf32>
    %90 = tpu.matmul %88, %89, %cst_49 {dimension_numbers = #tpu.dot_dimension_numbers<[1], [0], [0], [1], [0, 0, 1, 1], [], []>} : vector<2x256xf32>, vector<256x256xf32>, vector<2x256xf32> -> vector<2x256xf32>
    %91 = vector.shape_cast %90 : vector<2x256xf32> to vector<2x1x256xf32>
    %92 = vector.broadcast %91 : vector<2x1x256xf32> to vector<2x16x256xf32>
    %93 = arith.subf %87, %92 : vector<2x16x256xf32>
    %94 = arith.mulf %93, %93 : vector<2x16x256xf32>
    %cst_50 = arith.constant dense<0.000000e+00> : vector<2x256xf32>
    %95 = vector.multi_reduction <add>, %94, %cst_50 [1] : vector<2x16x256xf32> to vector<2x256xf32>
    %c0_51 = arith.constant 0 : index
    %c0_52 = arith.constant 0 : index
    %96 = vector.load %arg7[%c0_51, %c0_52] : memref<256x256xf32, #tpu.memory_space<vmem>>, vector<256x256xf32>
    %cst_53 = arith.constant dense<0.000000e+00> : vector<2x256xf32>
    %97 = tpu.matmul %95, %96, %cst_53 {dimension_numbers = #tpu.dot_dimension_numbers<[1], [0], [0], [1], [0, 0, 1, 1], [], []>} : vector<2x256xf32>, vector<256x256xf32>, vector<2x256xf32> -> vector<2x256xf32>
    %cst_54 = arith.constant 9.99999974E-6 : f32
    %98 = vector.broadcast %cst_54 : f32 to vector<2x256xf32>
    %99 = arith.addf %97, %98 : vector<2x256xf32>
    %100 = math.rsqrt %99 : vector<2x256xf32>
    %101 = vector.shape_cast %100 : vector<2x256xf32> to vector<2x1x256xf32>
    %102 = vector.broadcast %101 : vector<2x1x256xf32> to vector<2x16x256xf32>
    %103 = arith.mulf %93, %102 : vector<2x16x256xf32>
    %104 = vector.shape_cast %103 : vector<2x16x256xf32> to vector<32x256xf32>
    %105 = tpu.concatenate %85, %104 in 1 : vector<32x256xf32>, vector<32x256xf32> -> vector<32x512xf32>
    %c0_55 = arith.constant 0 : index
    %c0_56 = arith.constant 0 : index
    %106 = vector.load %arg8[%c0_55, %c0_56] : memref<512x512xf32, #tpu.memory_space<vmem>>, vector<512x512xf32>
    %cst_57 = arith.constant dense<0.000000e+00> : vector<32x512xf32>
    %107 = tpu.matmul %105, %106, %cst_57 {dimension_numbers = #tpu.dot_dimension_numbers<[1], [0], [0], [1], [0, 0, 1, 1], [], []>} : vector<32x512xf32>, vector<512x512xf32>, vector<32x512xf32> -> vector<32x512xf32>
    %c0_58 = arith.constant 0 : index
    %c0_59 = arith.constant 0 : index
    %108 = vector.load %arg9[%c0_58, %c0_59] : memref<1x512xf32, #tpu.memory_space<vmem>>, vector<1x512xf32>
    %109 = vector.broadcast %108 : vector<1x512xf32> to vector<32x512xf32>
    %110 = arith.addf %107, %109 : vector<32x512xf32>
    %cst_60 = arith.constant 0.000000e+00 : f32
    %111 = vector.broadcast %cst_60 : f32 to vector<32x512xf32>
    %112 = arith.maximumf %110, %111 : vector<32x512xf32>
    %113 = vector.shape_cast %112 : vector<32x512xf32> to vector<2x16x512xf32>
    %c0_61 = arith.constant 0 : index
    %c0_62 = arith.constant 0 : index
    %c0_63 = arith.constant 0 : index
    %114 = vector.load %arg10[%c0_61, %c0_62, %c0_63] : memref<2x16x512xf32, #tpu.memory_space<vmem>>, vector<2x16x512xf32>
    tpu.vector_store %arg10[%c0_61, %c0_62, %c0_63], %113 {strides = array<i32>} : memref<2x16x512xf32, #tpu.memory_space<vmem>>, vector<2x16x512xf32>,
    return
  }
  func.func @transform_0(%arg0: i32) -> (i32, i32, i32) {
    %c0_i32 = arith.constant 0 : i32
    %c0_i32_0 = arith.constant 0 : i32
    %c0_i32_1 = arith.constant 0 : i32
    return %arg0, %c0_i32, %c0_i32_0 : i32, i32, i32
  }
  func.func @transform_1(%arg0: i32) -> (i32, i32) {
    %c0_i32 = arith.constant 0 : i32
    %c0_i32_0 = arith.constant 0 : i32
    %c0_i32_1 = arith.constant 0 : i32
    return %c0_i32, %c0_i32_0 : i32, i32
  }
  func.func @transform_2(%arg0: i32) -> (i32, i32) {
    %c0_i32 = arith.constant 0 : i32
    %c0_i32_0 = arith.constant 0 : i32
    %c0_i32_1 = arith.constant 0 : i32
    return %c0_i32, %c0_i32_0 : i32, i32
  }
  func.func @transform_3(%arg0: i32) -> (i32, i32) {
    %c0_i32 = arith.constant 0 : i32
    %c0_i32_0 = arith.constant 0 : i32
    %c0_i32_1 = arith.constant 0 : i32
    return %c0_i32, %c0_i32_0 : i32, i32
  }
  func.func @transform_4(%arg0: i32) -> (i32, i32) {
    %c0_i32 = arith.constant 0 : i32
    %c0_i32_0 = arith.constant 0 : i32
    %c0_i32_1 = arith.constant 0 : i32
    return %c0_i32, %c0_i32_0 : i32, i32
  }
  func.func @transform_5(%arg0: i32) -> (i32, i32) {
    %c0_i32 = arith.constant 0 : i32
    %c0_i32_0 = arith.constant 0 : i32
    %c0_i32_1 = arith.constant 0 : i32
    return %c0_i32, %c0_i32_0 : i32, i32
  }
  func.func @transform_6(%arg0: i32) -> (i32, i32) {
    %c0_i32 = arith.constant 0 : i32
    %c0_i32_0 = arith.constant 0 : i32
    %c0_i32_1 = arith.constant 0 : i32
    return %c0_i32, %c0_i32_0 : i32, i32
  }
  func.func @transform_7(%arg0: i32) -> (i32, i32) {
    %c0_i32 = arith.constant 0 : i32
    %c0_i32_0 = arith.constant 0 : i32
    %c0_i32_1 = arith.constant 0 : i32
    return %c0_i32, %c0_i32_0 : i32, i32
  }
  func.func @transform_8(%arg0: i32) -> (i32, i32) {
    %c0_i32 = arith.constant 0 : i32
    %c0_i32_0 = arith.constant 0 : i32
    %c0_i32_1 = arith.constant 0 : i32
    return %c0_i32, %c0_i32_0 : i32, i32
  }
  func.func @transform_9(%arg0: i32) -> (i32, i32, i32) {
    %c0_i32 = arith.constant 0 : i32
    %c0_i32_0 = arith.constant 0 : i32
    %c0_i32_1 = arith.constant 0 : i32
    return %arg0, %c0_i32, %c0_i32_0 : i32, i32, i32
  }
}

</mosaic_0001>

<llo_original>
// kernel: tpu_custom_call.1
$region0: #{tpu_custom_call.1}
  #allocation0 [shape = 'u32[]', space=smem, size = 0x4, offset = 0x4, fixed_abs, tag = 'smem constant byte address 0x4 - core index']
  #allocation1 [shape = 'u32[144,128]{1,0:T(1,128)}', space=vmem, size = 0x12000, scoped, tag = 'internal scratch']
  #allocation2 [shape = 'f32[48,768]{1,0:T(8,128)}', space=vmem, size = 0x24000, scoped, tag = 'scratch operand']
  %s0 = inlined_call_operand.hbm [shape: f32[2,16,512], index: 0, kind: input, shape index: {}]
  %s1 = inlined_call_operand.hbm [shape: f32[512,1024], index: 1, kind: input, shape index: {}]
  %s2 = inlined_call_operand.hbm [shape: f32[256,768], index: 2, kind: input, shape index: {}]
  %s3 = inlined_call_operand.hbm [shape: f32[1,256], index: 3, kind: input, shape index: {}]
  %s4 = inlined_call_operand.hbm [shape: f32[256,768], index: 4, kind: input, shape index: {}]
  %s5 = inlined_call_operand.hbm [shape: f32[1,256], index: 5, kind: input, shape index: {}]
  %s6 = inlined_call_operand.hbm [shape: f32[256,256], index: 6, kind: input, shape index: {}]
  %s7 = inlined_call_operand.hbm [shape: f32[512,512], index: 7, kind: input, shape index: {}]
  %s8 = inlined_call_operand.hbm [shape: f32[1,512], index: 8, kind: input, shape index: {}]
  %s9 = inlined_call_operand.hbm [shape: f32[2,16,512], index: 9, kind: output, shape index: {}]
  %s10 = sld [smem:[#allocation0]]
  $region82: #{tpu_custom_call.1} parent=0
    _
  %s12 = ssub.s32 1, %s10
  %s13 = scalar_select 0, %s12, %s10
  $region1: #{tpu_custom_call.1} parent=0
    #allocation3 [shape = 'u8[65536]{0}', space=vmem, size = 0x10000, scoped, tag = 'input window, operand 0, single buffered']
    #allocation4 [shape = 's32[1]{0}', space=sflag, size = 0x4, scoped, tag = 'scoped memory for tpu_custom_call.1']
    #allocation5 [shape = 's32[1]{0}', space=sflag, size = 0x4, scoped, tag = 'scoped memory for tpu_custom_call.1']
    #allocation6 [shape = 'u8[2097152]{0}', space=vmem, size = 0x200000, scoped, tag = 'input window, operand 1, single buffered']
    #allocation7 [shape = 's32[1]{0}', space=sflag, size = 0x4, scoped, tag = 'scoped memory for tpu_custom_call.1']
    #allocation8 [shape = 'u8[786432]{0}', space=vmem, size = 0xc0000, scoped, tag = 'input window, operand 2, single buffered']
    #allocation9 [shape = 'u8[1024]{0}', space=vmem, size = 0x400, scoped, tag = 'input window, operand 3, single buffered']
    #allocation10 [shape = 's32[1]{0}', space=sflag, size = 0x4, scoped, tag = 'scoped memory for tpu_custom_call.1']
    #allocation11 [shape = 'u8[786432]{0}', space=vmem, size = 0xc0000, scoped, tag = 'input window, operand 4, single buffered']
    #allocation12 [shape = 'u8[1024]{0}', space=vmem, size = 0x400, scoped, tag = 'input window, operand 5, single buffered']
    #allocation13 [shape = 's32[1]{0}', space=sflag, size = 0x4, scoped, tag = 'scoped memory for tpu_custom_call.1']
    #allocation14 [shape = 'u8[262144]{0}', space=vmem, size = 0x40000, scoped, tag = 'input window, operand 6, single buffered']
    #allocation15 [shape = 'u8[1048576]{0}', space=vmem, size = 0x100000, scoped, tag = 'input window, operand 7, single buffered']
    #allocation16 [shape = 's32[1]{0}', space=sflag, size = 0x4, scoped, tag = 'scoped memory for tpu_custom_call.1']
    #allocation17 [shape = 'u8[2048]{0}', space=vmem, size = 0x800, scoped, tag = 'input window, operand 8, single buffered']
    #allocation18 [shape = 'u8[65536]{0}', space=vmem, size = 0x10000, scoped, tag = 'output window, operand 0, single buffered']
    %14 = vsyncpa [#allocation4], 0
    %15 = vsyncpa [#allocation7], 0
    %16 = vsyncpa [#allocation10], 0
    %17 = vsyncpa [#allocation13], 0
    %18 = vsyncpa [#allocation16], 0
    %19 = vsyncpa [#allocation5], 0
    // Predicated region
    $region2: #{tpu_custom_call.1} parent=1 // pred_check
      _
    $region3: #{tpu_custom_call.1} parent=1 // pred_check_branch
      %21 = sbr.rel (0) target = $region5
    $region4: #{tpu_custom_call.1} parent=1 // pred_region
      %s23 = ssub.s32 2048, 2048
      %24 = vsyncadd [#allocation4], %s23
      %s25 = sshll.u32 [#allocation3], 4
      %s26 = int_to_ptr.vmem [resolvable:$true] %s25
      %31 = dma.hbm_to_vmem [thread:$0]  %s0, 2048, %s26, [#allocation4], 512, 512, 32
    $region5: #{tpu_custom_call.1} parent=1 // pred_fallthru
      _
    // Predicated region
    $region6: #{tpu_custom_call.1} parent=1 // pred_check
      _
    $region7: #{tpu_custom_call.1} parent=1 // pred_check_branch
      %33 = sbr.rel (0) target = $region9
    $region8: #{tpu_custom_call.1} parent=1 // pred_region
      %s35 = ssub.s32 65536, 65536
      %36 = vsyncadd [#allocation7], %s35
      %s37 = sshll.u32 [#allocation6], 4
      %s38 = int_to_ptr.vmem [resolvable:$true] %s37
      %43 = dma.hbm_to_vmem [thread:$0]  %s1, 65536, %s38, [#allocation7], 1024, 1024, 64
    $region9: #{tpu_custom_call.1} parent=1 // pred_fallthru
      _
    // Predicated region
    $region10: #{tpu_custom_call.1} parent=1 // pred_check
      _
    $region11: #{tpu_custom_call.1} parent=1 // pred_check_branch
      %45 = sbr.rel (0) target = $region13
    $region12: #{tpu_custom_call.1} parent=1 // pred_region
      %s47 = ssub.s32 24576, 24576
      %48 = vsyncadd [#allocation7], %s47
      %s49 = sshll.u32 [#allocation8], 4
      %s50 = int_to_ptr.vmem [resolvable:$true] %s49
      %55 = dma.hbm_to_vmem [thread:$0]  %s2, 24576, %s50, [#allocation7], 768, 768, 48
    $region13: #{tpu_custom_call.1} parent=1 // pred_fallthru
      _
    // Predicated region
    $region14: #{tpu_custom_call.1} parent=1 // pred_check
      _
    $region15: #{tpu_custom_call.1} parent=1 // pred_check_branch
      %57 = sbr.rel (0) target = $region17
    $region16: #{tpu_custom_call.1} parent=1 // pred_region
      %s59 = ssub.s32 32, 32
      %60 = vsyncadd [#allocation10], %s59
      %s62 = sshll.u32 [#allocation9], 4
      %s63 = int_to_ptr.vmem [resolvable:$true] %s62
      %65 = dma.hbm_to_vmem [thread:$0]  %s3, 32, %s63, [#allocation10]
    $region17: #{tpu_custom_call.1} parent=1 // pred_fallthru
      _
    // Predicated region
    $region18: #{tpu_custom_call.1} parent=1 // pred_check
      _
    $region19: #{tpu_custom_call.1} parent=1 // pred_check_branch
      %67 = sbr.rel (0) target = $region21
    $region20: #{tpu_custom_call.1} parent=1 // pred_region
      %s69 = ssub.s32 24576, 24576
      %70 = vsyncadd [#allocation10], %s69
      %s71 = sshll.u32 [#allocation11], 4
      %s72 = int_to_ptr.vmem [resolvable:$true] %s71
      %77 = dma.hbm_to_vmem [thread:$0]  %s4, 24576, %s72, [#allocation10], 768, 768, 48
    $region21: #{tpu_custom_call.1} parent=1 // pred_fallthru
      _
    // Predicated region
    $region22: #{tpu_custom_call.1} parent=1 // pred_check
      _
    $region23: #{tpu_custom_call.1} parent=1 // pred_check_branch
      %79 = sbr.rel (0) target = $region25
    $region24: #{tpu_custom_call.1} parent=1 // pred_region
      %s81 = ssub.s32 32, 32
      %82 = vsyncadd [#allocation13], %s81
      %s84 = sshll.u32 [#allocation12], 4
      %s85 = int_to_ptr.vmem [resolvable:$true] %s84
      %87 = dma.hbm_to_vmem [thread:$0]  %s5, 32, %s85, [#allocation13]
    $region25: #{tpu_custom_call.1} parent=1 // pred_fallthru
      _
    // Predicated region
    $region26: #{tpu_custom_call.1} parent=1 // pred_check
      _
    $region27: #{tpu_custom_call.1} parent=1 // pred_check_branch
      %89 = sbr.rel (0) target = $region29
    $region28: #{tpu_custom_call.1} parent=1 // pred_region
      %s91 = ssub.s32 8192, 8192
      %92 = vsyncadd [#allocation13], %s91
      %s93 = sshll.u32 [#allocation14], 4
      %s94 = int_to_ptr.vmem [resolvable:$true] %s93
      %99 = dma.hbm_to_vmem [thread:$0]  %s6, 8192, %s94, [#allocation13], 256, 256, 16
    $region29: #{tpu_custom_call.1} parent=1 // pred_fallthru
      _
    // Predicated region
    $region30: #{tpu_custom_call.1} parent=1 // pred_check
      _
    $region31: #{tpu_custom_call.1} parent=1 // pred_check_branch
      %101 = sbr.rel (0) target = $region33
    $region32: #{tpu_custom_call.1} parent=1 // pred_region
      %s103 = ssub.s32 32768, 32768
      %104 = vsyncadd [#allocation16], %s103
      %s105 = sshll.u32 [#allocation15], 4
      %s106 = int_to_ptr.vmem [resolvable:$true] %s105
      %111 = dma.hbm_to_vmem [thread:$0]  %s7, 32768, %s106, [#allocation16], 512, 512, 32
    $region33: #{tpu_custom_call.1} parent=1 // pred_fallthru
      _
    // Predicated region
    $region34: #{tpu_custom_call.1} parent=1 // pred_check
      _
    $region35: #{tpu_custom_call.1} parent=1 // pred_check_branch
      %113 = sbr.rel (0) target = $region37
    $region36: #{tpu_custom_call.1} parent=1 // pred_region
      %s115 = ssub.s32 64, 64
      %116 = vsyncadd [#allocation16], %s115
      %s118 = sshll.u32 [#allocation17], 4
      %s119 = int_to_ptr.vmem [resolvable:$true] %s118
      %121 = dma.hbm_to_vmem [thread:$0]  %s8, 64, %s119, [#allocation16]
    $region37: #{tpu_custom_call.1} parent=1 // pred_fallthru
      _
    // Predicated region
    $region38: #{tpu_custom_call.1} parent=1 // pred_check
      _
    $region39: #{tpu_custom_call.1} parent=1 // pred_check_branch
      %123 = sbr.rel (0) target = $region41
    $region40: #{tpu_custom_call.1} parent=1 // pred_region
      %124 = dma.done [#allocation4], 2048
    $region41: #{tpu_custom_call.1} parent=1 // pred_fallthru
      _
    // Predicated region
    $region42: #{tpu_custom_call.1} parent=1 // pred_check
      _
    $region43: #{tpu_custom_call.1} parent=1 // pred_check_branch
      %126 = sbr.rel (0) target = $region45
    $region44: #{tpu_custom_call.1} parent=1 // pred_region
      %127 = dma.done [#allocation7], 65536
    $region45: #{tpu_custom_call.1} parent=1 // pred_fallthru
      _
    // Predicated region
    $region46: #{tpu_custom_call.1} parent=1 // pred_check
      _
    $region47: #{tpu_custom_call.1} parent=1 // pred_check_branch
      %129 = sbr.rel (0) target = $region49
    $region48: #{tpu_custom_call.1} parent=1 // pred_region
      %130 = dma.done [#allocation7], 24576
    $region49: #{tpu_custom_call.1} parent=1 // pred_fallthru
      _
    // Predicated region
    $region50: #{tpu_custom_call.1} parent=1 // pred_check
      _
    $region51: #{tpu_custom_call.1} parent=1 // pred_check_branch
      %132 = sbr.rel (0) target = $region53
    $region52: #{tpu_custom_call.1} parent=1 // pred_region
      %133 = dma.done [#allocation10], 32
    $region53: #{tpu_custom_call.1} parent=1 // pred_fallthru
      _
    // Predicated region
    $region54: #{tpu_custom_call.1} parent=1 // pred_check
      _
    $region55: #{tpu_custom_call.1} parent=1 // pred_check_branch
      %135 = sbr.rel (0) target = $region57
    $region56: #{tpu_custom_call.1} parent=1 // pred_region
      %136 = dma.done [#allocation10], 24576
    $region57: #{tpu_custom_call.1} parent=1 // pred_fallthru
      _
    // Predicated region
    $region58: #{tpu_custom_call.1} parent=1 // pred_check
      _
    $region59: #{tpu_custom_call.1} parent=1 // pred_check_branch
      %138 = sbr.rel (0) target = $region61
    $region60: #{tpu_custom_call.1} parent=1 // pred_region
      %139 = dma.done [#allocation13], 32
    $region61: #{tpu_custom_call.1} parent=1 // pred_fallthru
      _
    // Predicated region
    $region62: #{tpu_custom_call.1} parent=1 // pred_check
      _
    $region63: #{tpu_custom_call.1} parent=1 // pred_check_branch
      %141 = sbr.rel (0) target = $region65
    $region64: #{tpu_custom_call.1} parent=1 // pred_region
      %142 = dma.done [#allocation13], 8192
    $region65: #{tpu_custom_call.1} parent=1 // pred_fallthru
      _
    // Predicated region
    $region66: #{tpu_custom_call.1} parent=1 // pred_check
      _
    $region67: #{tpu_custom_call.1} parent=1 // pred_check_branch
      %144 = sbr.rel (0) target = $region69
    $region68: #{tpu_custom_call.1} parent=1 // pred_region
      %145 = dma.done [#allocation16], 32768
    $region69: #{tpu_custom_call.1} parent=1 // pred_fallthru
      _
    // Predicated region
    $region70: #{tpu_custom_call.1} parent=1 // pred_check
      _
    $region71: #{tpu_custom_call.1} parent=1 // pred_check_branch
      %147 = sbr.rel (0) target = $region73
    $region72: #{tpu_custom_call.1} parent=1 // pred_region
      %148 = dma.done [#allocation16], 64
    $region73: #{tpu_custom_call.1} parent=1 // pred_fallthru
      _
    %v149 = vld [vmem:[#allocation3] sm:$0xff]
    %v150 = vld [vmem:[#allocation3 + $0x8] sm:$0xff]
    %v151 = vld [vmem:[#allocation3 + $0x10] sm:$0xff]
    %v152 = vld [vmem:[#allocation3 + $0x18] sm:$0xff]
    %v153 = vld [vmem:[#allocation3 + $0x20] sm:$0xff]
    %v154 = vld [vmem:[#allocation3 + $0x28] sm:$0xff]
    %v155 = vld [vmem:[#allocation3 + $0x30] sm:$0xff]
    %v156 = vld [vmem:[#allocation3 + $0x38] sm:$0xff]
    %v157 = vld [vmem:[#allocation3 + $0x40] sm:$0xff]
    %v158 = vld [vmem:[#allocation3 + $0x48] sm:$0xff]
    %v159 = vld [vmem:[#allocation3 + $0x50] sm:$0xff]
    %v160 = vld [vmem:[#allocation3 + $0x58] sm:$0xff]
    %v161 = vld [vmem:[#allocation3 + $0x60] sm:$0xff]
    %v162 = vld [vmem:[#allocation3 + $0x68] sm:$0xff]
    %v163 = vld [vmem:[#allocation3 + $0x70] sm:$0xff]
    %v164 = vld [vmem:[#allocation3 + $0x78] sm:$0xff]
    %v165 = vlaneseq
    %v166 = vshrl.u32 %v165, 7
    %v167 = vadd.s32 %v166, 8
    %v168 = vadd.s32 %v166, 16
    %v169 = vadd.s32 %v166, 24
    %vm170 = vcmp.lt.s32.totalorder %v166, 0
    %v171 = vsub.s32 0, %v166
    %v172 = vsel %vm170, %v171, %v166
    %v173 = vshrl.u32 %v172, 4
    %v174 = vand.u32 %v172, 15
    %v175 = vsub.s32 0, %v174
    %v176 = vsel %vm170, %v175, %v174
    %vm177 = vcmp.lt.s32.totalorder %v167, 0
    %v178 = vsub.s32 0, %v167
    %v179 = vsel %vm177, %v178, %v167
    %v180 = vshrl.u32 %v179, 4
    %v181 = vand.u32 %v179, 15
    %v182 = vsub.s32 0, %v181
    %v183 = vsel %vm177, %v182, %v181
    %vm184 = vcmp.lt.s32.totalorder %v168, 0
    %v185 = vsub.s32 0, %v168
    %v186 = vsel %vm184, %v185, %v168
    %v187 = vshrl.u32 %v186, 4
    %v188 = vand.u32 %v186, 15
    %v189 = vsub.s32 0, %v188
    %v190 = vsel %vm184, %v189, %v188
    %vm191 = vcmp.lt.s32.totalorder %v169, 0
    %v192 = vsub.s32 0, %v169
    %v193 = vsel %vm191, %v192, %v169
    %v194 = vshrl.u32 %v193, 4
    %v195 = vand.u32 %v193, 15
    %v196 = vsub.s32 0, %v195
    %v197 = vsel %vm191, %v196, %v195
    %vm198 = vcmp.ne.s32.totalorder %v176, 0
    %vm199 = vcmp.ne.s32.totalorder %v183, 0
    %vm200 = vcmp.ne.s32.totalorder %v190, 0
    %vm201 = vcmp.ne.s32.totalorder %v197, 0
    %vm202 = vcmp.lt.s32.totalorder %v176, 0
    %vm203 = vcmp.lt.s32.totalorder %v183, 0
    %vm204 = vcmp.lt.s32.totalorder %v190, 0
    %vm205 = vcmp.lt.s32.totalorder %v197, 0
    %vm206 = vmand %vm202, %vm198
    %vm207 = vmand %vm203, %vm199
    %vm208 = vmand %vm204, %vm200
    %vm209 = vmand %vm205, %vm201
    %v210 = vadd.s32 %v176, 16
    %v211 = vadd.s32 %v183, 16
    %v212 = vadd.s32 %v190, 16
    %v213 = vadd.s32 %v197, 16
    %v214 = vsel %vm206, %v210, %v176
    %v215 = vsel %vm207, %v211, %v183
    %v216 = vsel %vm208, %v212, %v190
    %v217 = vsel %vm209, %v213, %v197
    %vm218 = vcmp.gt.s32.totalorder %v214, 0
    %vm219 = vcmp.gt.s32.totalorder %v215, 0
    %vm220 = vcmp.gt.s32.totalorder %v216, 0
    %vm221 = vcmp.gt.s32.totalorder %v217, 0
    %vm222 = vcmp.lt.s32.totalorder %v214, 15
    %vm223 = vcmp.lt.s32.totalorder %v215, 15
    %vm224 = vcmp.lt.s32.totalorder %v216, 15
    %vm225 = vcmp.lt.s32.totalorder %v217, 15
    %226 = vst [vmem:[#allocation2] sm:$0xff] 0.0
    %227 = vst [vmem:[#allocation2 + $0x8] sm:$0xff] 0.0
    %228 = vst [vmem:[#allocation2 + $0x10] sm:$0xff] 0.0
    %229 = vst [vmem:[#allocation2 + $0x18] sm:$0xff] 0.0
    %230 = vst [vmem:[#allocation2 + $0x20] sm:$0xff] 0.0
    %231 = vst [vmem:[#allocation2 + $0x28] sm:$0xff] 0.0
    %232 = vst [vmem:[#allocation2 + $0xf0] sm:$0xff] 0.0
    %233 = vst [vmem:[#allocation2 + $0xf8] sm:$0xff] 0.0
    %234 = vst [vmem:[#allocation2 + $0x100] sm:$0xff] 0.0
    %235 = vst [vmem:[#allocation2 + $0x108] sm:$0xff] 0.0
    %236 = vst [vmem:[#allocation2 + $0x110] sm:$0xff] 0.0
    %237 = vst [vmem:[#allocation2 + $0x118] sm:$0xff] 0.0
    %v238 = vld [vmem:[#allocation6] sm:$0xff]
    %v239 = vld [vmem:[#allocation6 + $0x8] sm:$0xff]
    %v240 = vld [vmem:[#allocation6 + $0x10] sm:$0xff]
    %v241 = vld [vmem:[#allocation6 + $0x18] sm:$0xff]
    %v242 = vld [vmem:[#allocation6 + $0x20] sm:$0xff]
    %v243 = vld [vmem:[#allocation6 + $0x28] sm:$0xff]
    %v244 = vld [vmem:[#allocation6 + $0x30] sm:$0xff]
    %v245 = vld [vmem:[#allocation6 + $0x38] sm:$0xff]
    %v246 = vld [vmem:[#allocation6 + $0x40] sm:$0xff]
    %v247 = vld [vmem:[#allocation6 + $0x48] sm:$0xff]
    %v248 = vld [vmem:[#allocation6 + $0x50] sm:$0xff]
    %v249 = vld [vmem:[#allocation6 + $0x58] sm:$0xff]
    %v250 = vld [vmem:[#allocation6 + $0x60] sm:$0xff]
    %v251 = vld [vmem:[#allocation6 + $0x68] sm:$0xff]
    %v252 = vld [vmem:[#allocation6 + $0x70] sm:$0xff]
    %v253 = vld [vmem:[#allocation6 + $0x78] sm:$0xff]
    %v254 = vld [vmem:[#allocation6 + $0x80] sm:$0xff]
    %v255 = vld [vmem:[#allocation6 + $0x88] sm:$0xff]
    %v256 = vld [vmem:[#allocation6 + $0x90] sm:$0xff]
    %v257 = vld [vmem:[#allocation6 + $0x98] sm:$0xff]
    %v258 = vld [vmem:[#allocation6 + $0xa0] sm:$0xff]
    %v259 = vld [vmem:[#allocation6 + $0xa8] sm:$0xff]
    %v260 = vld [vmem:[#allocation6 + $0xb0] sm:$0xff]
    %v261 = vld [vmem:[#allocation6 + $0xb8] sm:$0xff]
    %v262 = vld [vmem:[#allocation6 + $0xc0] sm:$0xff]
    %v263 = vld [vmem:[#allocation6 + $0xc8] sm:$0xff]
    %v264 = vld [vmem:[#allocation6 + $0xd0] sm:$0xff]
    %v265 = vld [vmem:[#allocation6 + $0xd8] sm:$0xff]
    %v266 = vld [vmem:[#allocation6 + $0xe0] sm:$0xff]
    %v267 = vld [vmem:[#allocation6 + $0xe8] sm:$0xff]
    %v268 = vld [vmem:[#allocation6 + $0xf0] sm:$0xff]
    %v269 = vld [vmem:[#allocation6 + $0xf8] sm:$0xff]
    %v270 = vld [vmem:[#allocation6 + $0x100] sm:$0xff]
    %v271 = vld [vmem:[#allocation6 + $0x108] sm:$0xff]
    %v272 = vld [vmem:[#allocation6 + $0x110] sm:$0xff]
    %v273 = vld [vmem:[#allocation6 + $0x118] sm:$0xff]
    %v274 = vld [vmem:[#allocation6 + $0x120] sm:$0xff]
    %v275 = vld [vmem:[#allocation6 + $0x128] sm:$0xff]
    %v276 = vld [vmem:[#allocation6 + $0x130] sm:$0xff]
    %v277 = vld [vmem:[#allocation6 + $0x138] sm:$0xff]
    %v278 = vld [vmem:[#allocation6 + $0x140] sm:$0xff]
    %v279 = vld [vmem:[#allocation6 + $0x148] sm:$0xff]
    %v280 = vld [vmem:[#allocation6 + $0x150] sm:$0xff]
    %v281 = vld [vmem:[#allocation6 + $0x158] sm:$0xff]
    %v282 = vld [vmem:[#allocation6 + $0x160] sm:$0xff]
    %v283 = vld [vmem:[#allocation6 + $0x168] sm:$0xff]
    %v284 = vld [vmem:[#allocation6 + $0x170] sm:$0xff]
    %v285 = vld [vmem:[#allocation6 + $0x178] sm:$0xff]
    %v286 = vld [vmem:[#allocation6 + $0x180] sm:$0xff]
    %v287 = vld [vmem:[#allocation6 + $0x188] sm:$0xff]
    %v288 = vld [vmem:[#allocation6 + $0x190] sm:$0xff]
    %v289 = vld [vmem:[#allocation6 + $0x198] sm:$0xff]
    %v290 = vld [vmem:[#allocation6 + $0x1a0] sm:$0xff]
    %v291 = vld [vmem:[#allocation6 + $0x1a8] sm:$0xff]
    %v292 = vld [vmem:[#allocation6 + $0x1b0] sm:$0xff]
    %v293 = vld [vmem:[#allocation6 + $0x1b8] sm:$0xff]
    %v294 = vld [vmem:[#allocation6 + $0x1c0] sm:$0xff]
    %v295 = vld [vmem:[#allocation6 + $0x1c8] sm:$0xff]
    %v296 = vld [vmem:[#allocation6 + $0x1d0] sm:$0xff]
    %v297 = vld [vmem:[#allocation6 + $0x1d8] sm:$0xff]
    %v298 = vld [vmem:[#allocation6 + $0x1e0] sm:$0xff]
    %v299 = vld [vmem:[#allocation6 + $0x1e8] sm:$0xff]
    %v300 = vld [vmem:[#allocation6 + $0x1f0] sm:$0xff]
    %v301 = vld [vmem:[#allocation6 + $0x1f8] sm:$0xff]
    %v302 = vld [vmem:[#allocation6 + $0x200] sm:$0xff]
    %v303 = vld [vmem:[#allocation6 + $0x208] sm:$0xff]
    %v304 = vld [vmem:[#allocation6 + $0x210] sm:$0xff]
    %v305 = vld [vmem:[#allocation6 + $0x218] sm:$0xff]
    %v306 = vld [vmem:[#allocation6 + $0x220] sm:$0xff]
    %v307 = vld [vmem:[#allocation6 + $0x228] sm:$0xff]
    %v308 = vld [vmem:[#allocation6 + $0x230] sm:$0xff]
    %v309 = vld [vmem:[#allocation6 + $0x238] sm:$0xff]
    %v310 = vld [vmem:[#allocation6 + $0x240] sm:$0xff]
    %v311 = vld [vmem:[#allocation6 + $0x248] sm:$0xff]
    %v312 = vld [vmem:[#allocation6 + $0x250] sm:$0xff]
    %v313 = vld [vmem:[#allocation6 + $0x258] sm:$0xff]
    %v314 = vld [vmem:[#allocation6 + $0x260] sm:$0xff]
    %v315 = vld [vmem:[#allocation6 + $0x268] sm:$0xff]
    %v316 = vld [vmem:[#allocation6 + $0x270] sm:$0xff]
    %v317 = vld [vmem:[#allocation6 + $0x278] sm:$0xff]
    %v318 = vld [vmem:[#allocation6 + $0x280] sm:$0xff]
    %v319 = vld [vmem:[#allocation6 + $0x288] sm:$0xff]
    %v320 = vld [vmem:[#allocation6 + $0x290] sm:$0xff]
    %v321 = vld [vmem:[#allocation6 + $0x298] sm:$0xff]
    %v322 = vld [vmem:[#allocation6 + $0x2a0] sm:$0xff]
    %v323 = vld [vmem:[#allocation6 + $0x2a8] sm:$0xff]
    %v324 = vld [vmem:[#allocation6 + $0x2b0] sm:$0xff]
    %v325 = vld [vmem:[#allocation6 + $0x2b8] sm:$0xff]
    %v326 = vld [vmem:[#allocation6 + $0x2c0] sm:$0xff]
    %v327 = vld [vmem:[#allocation6 + $0x2c8] sm:$0xff]
    %v328 = vld [vmem:[#allocation6 + $0x2d0] sm:$0xff]
    %v329 = vld [vmem:[#allocation6 + $0x2d8] sm:$0xff]
    %v330 = vld [vmem:[#allocation6 + $0x2e0] sm:$0xff]
    %v331 = vld [vmem:[#allocation6 + $0x2e8] sm:$0xff]
    %v332 = vld [vmem:[#allocation6 + $0x2f0] sm:$0xff]
    %v333 = vld [vmem:[#allocation6 + $0x2f8] sm:$0xff]
    %v334 = vld [vmem:[#allocation6 + $0x300] sm:$0xff]
    %v335 = vld [vmem:[#allocation6 + $0x308] sm:$0xff]
    %v336 = vld [vmem:[#allocation6 + $0x310] sm:$0xff]
    %v337 = vld [vmem:[#allocation6 + $0x318] sm:$0xff]
    %v338 = vld [vmem:[#allocation6 + $0x320] sm:$0xff]
    %v339 = vld [vmem:[#allocation6 + $0x328] sm:$0xff]
    %v340 = vld [vmem:[#allocation6 + $0x330] sm:$0xff]
    %v341 = vld [vmem:[#allocation6 + $0x338] sm:$0xff]
    %v342 = vld [vmem:[#allocation6 + $0x340] sm:$0xff]
    %v343 = vld [vmem:[#allocation6 + $0x348] sm:$0xff]
    %v344 = vld [vmem:[#allocation6 + $0x350] sm:$0xff]
    %v345 = vld [vmem:[#allocation6 + $0x358] sm:$0xff]
    %v346 = vld [vmem:[#allocation6 + $0x360] sm:$0xff]
    %v347 = vld [vmem:[#allocation6 + $0x368] sm:$0xff]
    %v348 = vld [vmem:[#allocation6 + $0x370] sm:$0xff]
    %v349 = vld [vmem:[#allocation6 + $0x378] sm:$0xff]
    %v350 = vld [vmem:[#allocation6 + $0x380] sm:$0xff]
    %v351 = vld [vmem:[#allocation6 + $0x388] sm:$0xff]
    %v352 = vld [vmem:[#allocation6 + $0x390] sm:$0xff]
    %v353 = vld [vmem:[#allocation6 + $0x398] sm:$0xff]
    %v354 = vld [vmem:[#allocation6 + $0x3a0] sm:$0xff]
    %v355 = vld [vmem:[#allocation6 + $0x3a8] sm:$0xff]
    %v356 = vld [vmem:[#allocation6 + $0x3b0] sm:$0xff]
    %v357 = vld [vmem:[#allocation6 + $0x3b8] sm:$0xff]
    %v358 = vld [vmem:[#allocation6 + $0x3c0] sm:$0xff]
    %v359 = vld [vmem:[#allocation6 + $0x3c8] sm:$0xff]
    %v360 = vld [vmem:[#allocation6 + $0x3d0] sm:$0xff]
    %v361 = vld [vmem:[#allocation6 + $0x3d8] sm:$0xff]
    %v362 = vld [vmem:[#allocation6 + $0x3e0] sm:$0xff]
    %v363 = vld [vmem:[#allocation6 + $0x3e8] sm:$0xff]
    %v364 = vld [vmem:[#allocation6 + $0x3f0] sm:$0xff]
    %v365 = vld [vmem:[#allocation6 + $0x3f8] sm:$0xff]
    %v366 = vld [vmem:[#allocation6 + $0x400] sm:$0xff]
    %v367 = vld [vmem:[#allocation6 + $0x408] sm:$0xff]
    %v368 = vld [vmem:[#allocation6 + $0x410] sm:$0xff]
    %v369 = vld [vmem:[#allocation6 + $0x418] sm:$0xff]
    %v370 = vld [vmem:[#allocation6 + $0x420] sm:$0xff]
    %v371 = vld [vmem:[#allocation6 + $0x428] sm:$0xff]
    %v372 = vld [vmem:[#allocation6 + $0x430] sm:$0xff]
    %v373 = vld [vmem:[#allocation6 + $0x438] sm:$0xff]
    %v374 = vld [vmem:[#allocation6 + $0x440] sm:$0xff]
    %v375 = vld [vmem:[#allocation6 + $0x448] sm:$0xff]
    %v376 = vld [vmem:[#allocation6 + $0x450] sm:$0xff]
    %v377 = vld [vmem:[#allocation6 + $0x458] sm:$0xff]
    %v378 = vld [vmem:[#allocation6 + $0x460] sm:$0xff]
    %v379 = vld [vmem:[#allocation6 + $0x468] sm:$0xff]
    %v380 = vld [vmem:[#allocation6 + $0x470] sm:$0xff]
    %v381 = vld [vmem:[#allocation6 + $0x478] sm:$0xff]
    %v382 = vld [vmem:[#allocation6 + $0x480] sm:$0xff]
    %v383 = vld [vmem:[#allocation6 + $0x488] sm:$0xff]
    %v384 = vld [vmem:[#allocation6 + $0x490] sm:$0xff]
    %v385 = vld [vmem:[#allocation6 + $0x498] sm:$0xff]
    %v386 = vld [vmem:[#allocation6 + $0x4a0] sm:$0xff]
    %v387 = vld [vmem:[#allocation6 + $0x4a8] sm:$0xff]
    %v388 = vld [vmem:[#allocation6 + $0x4b0] sm:$0xff]
    %v389 = vld [vmem:[#allocation6 + $0x4b8] sm:$0xff]
    %v390 = vld [vmem:[#allocation6 + $0x4c0] sm:$0xff]
    %v391 = vld [vmem:[#allocation6 + $0x4c8] sm:$0xff]
    %v392 = vld [vmem:[#allocation6 + $0x4d0] sm:$0xff]
    %v393 = vld [vmem:[#allocation6 + $0x4d8] sm:$0xff]
    %v394 = vld [vmem:[#allocation6 + $0x4e0] sm:$0xff]
    %v395 = vld [vmem:[#allocation6 + $0x4e8] sm:$0xff]
    %v396 = vld [vmem:[#allocation6 + $0x4f0] sm:$0xff]
    %v397 = vld [vmem:[#allocation6 + $0x4f8] sm:$0xff]
    %v398 = vld [vmem:[#allocation6 + $0x500] sm:$0xff]
    %v399 = vld [vmem:[#allocation6 + $0x508] sm:$0xff]
    %v400 = vld [vmem:[#allocation6 + $0x510] sm:$0xff]
    %v401 = vld [vmem:[#allocation6 + $0x518] sm:$0xff]
    %v402 = vld [vmem:[#allocation6 + $0x520] sm:$0xff]
    %v403 = vld [vmem:[#allocation6 + $0x528] sm:$0xff]
    %v404 = vld [vmem:[#allocation6 + $0x530] sm:$0xff]
    %v405 = vld [vmem:[#allocation6 + $0x538] sm:$0xff]
    %v406 = vld [vmem:[#allocation6 + $0x540] sm:$0xff]
    %v407 = vld [vmem:[#allocation6 + $0x548] sm:$0xff]
    %v408 = vld [vmem:[#allocation6 + $0x550] sm:$0xff]
    %v409 = vld [vmem:[#allocation6 + $0x558] sm:$0xff]
    %v410 = vld [vmem:[#allocation6 + $0x560] sm:$0xff]
    %v411 = vld [vmem:[#allocation6 + $0x568] sm:$0xff]
    %v412 = vld [vmem:[#allocation6 + $0x570] sm:$0xff]
    %v413 = vld [vmem:[#allocation6 + $0x578] sm:$0xff]
    %v414 = vld [vmem:[#allocation6 + $0x580] sm:$0xff]
    %v415 = vld [vmem:[#allocation6 + $0x588] sm:$0xff]
    %v416 = vld [vmem:[#allocation6 + $0x590] sm:$0xff]
    %v417 = vld [vmem:[#allocation6 + $0x598] sm:$0xff]
    %v418 = vld [vmem:[#allocation6 + $0x5a0] sm:$0xff]
    %v419 = vld [vmem:[#allocation6 + $0x5a8] sm:$0xff]
    %v420 = vld [vmem:[#allocation6 + $0x5b0] sm:$0xff]
    %v421 = vld [vmem:[#allocation6 + $0x5b8] sm:$0xff]
    %v422 = vld [vmem:[#allocation6 + $0x5c0] sm:$0xff]
    %v423 = vld [vmem:[#allocation6 + $0x5c8] sm:$0xff]
    %v424 = vld [vmem:[#allocation6 + $0x5d0] sm:$0xff]
    %v425 = vld [vmem:[#allocation6 + $0x5d8] sm:$0xff]
    %v426 = vld [vmem:[#allocation6 + $0x5e0] sm:$0xff]
    %v427 = vld [vmem:[#allocation6 + $0x5e8] sm:$0xff]
    %v428 = vld [vmem:[#allocation6 + $0x5f0] sm:$0xff]
    %v429 = vld [vmem:[#allocation6 + $0x5f8] sm:$0xff]
    %v430 = vld [vmem:[#allocation6 + $0x600] sm:$0xff]
    %v431 = vld [vmem:[#allocation6 + $0x608] sm:$0xff]
    %v432 = vld [vmem:[#allocation6 + $0x610] sm:$0xff]
    %v433 = vld [vmem:[#allocation6 + $0x618] sm:$0xff]
    %v434 = vld [vmem:[#allocation6 + $0x620] sm:$0xff]
    %v435 = vld [vmem:[#allocation6 + $0x628] sm:$0xff]
    %v436 = vld [vmem:[#allocation6 + $0x630] sm:$0xff]
    %v437 = vld [vmem:[#allocation6 + $0x638] sm:$0xff]
    %v438 = vld [vmem:[#allocation6 + $0x640] sm:$0xff]
    %v439 = vld [vmem:[#allocation6 + $0x648] sm:$0xff]
    %v440 = vld [vmem:[#allocation6 + $0x650] sm:$0xff]
    %v441 = vld [vmem:[#allocation6 + $0x658] sm:$0xff]
    %v442 = vld [vmem:[#allocation6 + $0x660] sm:$0xff]
    %v443 = vld [vmem:[#allocation6 + $0x668] sm:$0xff]
    %v444 = vld [vmem:[#allocation6 + $0x670] sm:$0xff]
    %v445 = vld [vmem:[#allocation6 + $0x678] sm:$0xff]
    %v446 = vld [vmem:[#allocation6 + $0x680] sm:$0xff]
    %v447 = vld [vmem:[#allocation6 + $0x688] sm:$0xff]
    %v448 = vld [vmem:[#allocation6 + $0x690] sm:$0xff]
    %v449 = vld [vmem:[#allocation6 + $0x698] sm:$0xff]
    %v450 = vld [vmem:[#allocation6 + $0x6a0] sm:$0xff]
    %v451 = vld [vmem:[#allocation6 + $0x6a8] sm:$0xff]
    %v452 = vld [vmem:[#allocation6 + $0x6b0] sm:$0xff]
    %v453 = vld [vmem:[#allocation6 + $0x6b8] sm:$0xff]
    %v454 = vld [vmem:[#allocation6 + $0x6c0] sm:$0xff]
    %v455 = vld [vmem:[#allocation6 + $0x6c8] sm:$0xff]
    %v456 = vld [vmem:[#allocation6 + $0x6d0] sm:$0xff]
    %v457 = vld [vmem:[#allocation6 + $0x6d8] sm:$0xff]
    %v458 = vld [vmem:[#allocation6 + $0x6e0] sm:$0xff]
    %v459 = vld [vmem:[#allocation6 + $0x6e8] sm:$0xff]
    %v460 = vld [vmem:[#allocation6 + $0x6f0] sm:$0xff]
    %v461 = vld [vmem:[#allocation6 + $0x6f8] sm:$0xff]
    %v462 = vld [vmem:[#allocation6 + $0x700] sm:$0xff]
    %v463 = vld [vmem:[#allocation6 + $0x708] sm:$0xff]
    %v464 = vld [vmem:[#allocation6 + $0x710] sm:$0xff]
    %v465 = vld [vmem:[#allocation6 + $0x718] sm:$0xff]
    %v466 = vld [vmem:[#allocation6 + $0x720] sm:$0xff]
    %v467 = vld [vmem:[#allocation6 + $0x728] sm:$0xff]
    %v468 = vld [vmem:[#allocation6 + $0x730] sm:$0xff]
    %v469 = vld [vmem:[#allocation6 + $0x738] sm:$0xff]
    %v470 = vld [vmem:[#allocation6 + $0x740] sm:$0xff]
    %v471 = vld [vmem:[#allocation6 + $0x748] sm:$0xff]
    %v472 = vld [vmem:[#allocation6 + $0x750] sm:$0xff]
    %v473 = vld [vmem:[#allocation6 + $0x758] sm:$0xff]
    %v474 = vld [vmem:[#allocation6 + $0x760] sm:$0xff]
    %v475 = vld [vmem:[#allocation6 + $0x768] sm:$0xff]
    %v476 = vld [vmem:[#allocation6 + $0x770] sm:$0xff]
    %v477 = vld [vmem:[#allocation6 + $0x778] sm:$0xff]
    %v478 = vld [vmem:[#allocation6 + $0x780] sm:$0xff]
    %v479 = vld [vmem:[#allocation6 + $0x788] sm:$0xff]
    %v480 = vld [vmem:[#allocation6 + $0x790] sm:$0xff]
    %v481 = vld [vmem:[#allocation6 + $0x798] sm:$0xff]
    %v482 = vld [vmem:[#allocation6 + $0x7a0] sm:$0xff]
    %v483 = vld [vmem:[#allocation6 + $0x7a8] sm:$0xff]
    %v484 = vld [vmem:[#allocation6 + $0x7b0] sm:$0xff]
    %v485 = vld [vmem:[#allocation6 + $0x7b8] sm:$0xff]
    %v486 = vld [vmem:[#allocation6 + $0x7c0] sm:$0xff]
    %v487 = vld [vmem:[#allocation6 + $0x7c8] sm:$0xff]
    %v488 = vld [vmem:[#allocation6 + $0x7d0] sm:$0xff]
    %v489 = vld [vmem:[#allocation6 + $0x7d8] sm:$0xff]
    %v490 = vld [vmem:[#allocation6 + $0x7e0] sm:$0xff]
    %v491 = vld [vmem:[#allocation6 + $0x7e8] sm:$0xff]
    %v492 = vld [vmem:[#allocation6 + $0x7f0] sm:$0xff]
    %v493 = vld [vmem:[#allocation6 + $0x7f8] sm:$0xff]
    %v494 = vld [vmem:[#allocation6 + $0x800] sm:$0xff]
    %v495 = vld [vmem:[#allocation6 + $0x808] sm:$0xff]
    %v496 = vld [vmem:[#allocation6 + $0x810] sm:$0xff]
    %v497 = vld [vmem:[#allocation6 + $0x818] sm:$0xff]
    %v498 = vld [vmem:[#allocation6 + $0x820] sm:$0xff]
    %v499 = vld [vmem:[#allocation6 + $0x828] sm:$0xff]
    %v500 = vld [vmem:[#allocation6 + $0x830] sm:$0xff]
    %v501 = vld [vmem:[#allocation6 + $0x838] sm:$0xff]
    %v502 = vld [vmem:[#allocation6 + $0x840] sm:$0xff]
    %v503 = vld [vmem:[#allocation6 + $0x848] sm:$0xff]
    %v504 = vld [vmem:[#allocation6 + $0x850] sm:$0xff]
    %v505 = vld [vmem:[#allocation6 + $0x858] sm:$0xff]
    %v506 = vld [vmem:[#allocation6 + $0x860] sm:$0xff]
    %v507 = vld [vmem:[#allocation6 + $0x868] sm:$0xff]
    %v508 = vld [vmem:[#allocation6 + $0x870] sm:$0xff]
    %v509 = vld [vmem:[#allocation6 + $0x878] sm:$0xff]
    %v510 = vld [vmem:[#allocation6 + $0x880] sm:$0xff]
    %v511 = vld [vmem:[#allocation6 + $0x888] sm:$0xff]
    %v512 = vld [vmem:[#allocation6 + $0x890] sm:$0xff]
    %v513 = vld [vmem:[#allocation6 + $0x898] sm:$0xff]
    %v514 = vld [vmem:[#allocation6 + $0x8a0] sm:$0xff]
    %v515 = vld [vmem:[#allocation6 + $0x8a8] sm:$0xff]
    %v516 = vld [vmem:[#allocation6 + $0x8b0] sm:$0xff]
    %v517 = vld [vmem:[#allocation6 + $0x8b8] sm:$0xff]
    %v518 = vld [vmem:[#allocation6 + $0x8c0] sm:$0xff]
    %v519 = vld [vmem:[#allocation6 + $0x8c8] sm:$0xff]
    %v520 = vld [vmem:[#allocation6 + $0x8d0] sm:$0xff]
    %v521 = vld [vmem:[#allocation6 + $0x8d8] sm:$0xff]
    %v522 = vld [vmem:[#allocation6 + $0x8e0] sm:$0xff]
    %v523 = vld [vmem:[#allocation6 + $0x8e8] sm:$0xff]
    %v524 = vld [vmem:[#allocation6 + $0x8f0] sm:$0xff]
    %v525 = vld [vmem:[#allocation6 + $0x8f8] sm:$0xff]
    %v526 = vld [vmem:[#allocation6 + $0x900] sm:$0xff]
    %v527 = vld [vmem:[#allocation6 + $0x908] sm:$0xff]
    %v528 = vld [vmem:[#allocation6 + $0x910] sm:$0xff]
    %v529 = vld [vmem:[#allocation6 + $0x918] sm:$0xff]
    %v530 = vld [vmem:[#allocation6 + $0x920] sm:$0xff]
    %v531 = vld [vmem:[#allocation6 + $0x928] sm:$0xff]
    %v532 = vld [vmem:[#allocation6 + $0x930] sm:$0xff]
    %v533 = vld [vmem:[#allocation6 + $0x938] sm:$0xff]
    %v534 = vld [vmem:[#allocation6 + $0x940] sm:$0xff]
    %v535 = vld [vmem:[#allocation6 + $0x948] sm:$0xff]
    %v536 = vld [vmem:[#allocation6 + $0x950] sm:$0xff]
    %v537 = vld [vmem:[#allocation6 + $0x958] sm:$0xff]
    %v538 = vld [vmem:[#allocation6 + $0x960] sm:$0xff]
    %v539 = vld [vmem:[#allocation6 + $0x968] sm:$0xff]
    %v540 = vld [vmem:[#allocation6 + $0x970] sm:$0xff]
    %v541 = vld [vmem:[#allocation6 + $0x978] sm:$0xff]
    %v542 = vld [vmem:[#allocation6 + $0x980] sm:$0xff]
    %v543 = vld [vmem:[#allocation6 + $0x988] sm:$0xff]
    %v544 = vld [vmem:[#allocation6 + $0x990] sm:$0xff]
    %v545 = vld [vmem:[#allocation6 + $0x998] sm:$0xff]
    %v546 = vld [vmem:[#allocation6 + $0x9a0] sm:$0xff]
    %v547 = vld [vmem:[#allocation6 + $0x9a8] sm:$0xff]
    %v548 = vld [vmem:[#allocation6 + $0x9b0] sm:$0xff]
    %v549 = vld [vmem:[#allocation6 + $0x9b8] sm:$0xff]
    %v550 = vld [vmem:[#allocation6 + $0x9c0] sm:$0xff]
    %v551 = vld [vmem:[#allocation6 + $0x9c8] sm:$0xff]
    %v552 = vld [vmem:[#allocation6 + $0x9d0] sm:$0xff]
    %v553 = vld [vmem:[#allocation6 + $0x9d8] sm:$0xff]
    %v554 = vld [vmem:[#allocation6 + $0x9e0] sm:$0xff]
    %v555 = vld [vmem:[#allocation6 + $0x9e8] sm:$0xff]
    %v556 = vld [vmem:[#allocation6 + $0x9f0] sm:$0xff]
    %v557 = vld [vmem:[#allocation6 + $0x9f8] sm:$0xff]
    %v558 = vld [vmem:[#allocation6 + $0xa00] sm:$0xff]
    %v559 = vld [vmem:[#allocation6 + $0xa08] sm:$0xff]
    %v560 = vld [vmem:[#allocation6 + $0xa10] sm:$0xff]
    %v561 = vld [vmem:[#allocation6 + $0xa18] sm:$0xff]
    %v562 = vld [vmem:[#allocation6 + $0xa20] sm:$0xff]
    %v563 = vld [vmem:[#allocation6 + $0xa28] sm:$0xff]
    %v564 = vld [vmem:[#allocation6 + $0xa30] sm:$0xff]
    %v565 = vld [vmem:[#allocation6 + $0xa38] sm:$0xff]
    %v566 = vld [vmem:[#allocation6 + $0xa40] sm:$0xff]
    %v567 = vld [vmem:[#allocation6 + $0xa48] sm:$0xff]
    %v568 = vld [vmem:[#allocation6 + $0xa50] sm:$0xff]
    %v569 = vld [vmem:[#allocation6 + $0xa58] sm:$0xff]
    %v570 = vld [vmem:[#allocation6 + $0xa60] sm:$0xff]
    %v571 = vld [vmem:[#allocation6 + $0xa68] sm:$0xff]
    %v572 = vld [vmem:[#allocation6 + $0xa70] sm:$0xff]
    %v573 = vld [vmem:[#allocation6 + $0xa78] sm:$0xff]
    %v574 = vld [vmem:[#allocation6 + $0xa80] sm:$0xff]
    %v575 = vld [vmem:[#allocation6 + $0xa88] sm:$0xff]
    %v576 = vld [vmem:[#allocation6 + $0xa90] sm:$0xff]
    %v577 = vld [vmem:[#allocation6 + $0xa98] sm:$0xff]
    %v578 = vld [vmem:[#allocation6 + $0xaa0] sm:$0xff]
    %v579 = vld [vmem:[#allocation6 + $0xaa8] sm:$0xff]
    %v580 = vld [vmem:[#allocation6 + $0xab0] sm:$0xff]
    %v581 = vld [vmem:[#allocation6 + $0xab8] sm:$0xff]
    %v582 = vld [vmem:[#allocation6 + $0xac0] sm:$0xff]
    %v583 = vld [vmem:[#allocation6 + $0xac8] sm:$0xff]
    %v584 = vld [vmem:[#allocation6 + $0xad0] sm:$0xff]
    %v585 = vld [vmem:[#allocation6 + $0xad8] sm:$0xff]
    %v586 = vld [vmem:[#allocation6 + $0xae0] sm:$0xff]
    %v587 = vld [vmem:[#allocation6 + $0xae8] sm:$0xff]
    %v588 = vld [vmem:[#allocation6 + $0xaf0] sm:$0xff]
    %v589 = vld [vmem:[#allocation6 + $0xaf8] sm:$0xff]
    %v590 = vld [vmem:[#allocation6 + $0xb00] sm:$0xff]
    %v591 = vld [vmem:[#allocation6 + $0xb08] sm:$0xff]
    %v592 = vld [vmem:[#allocation6 + $0xb10] sm:$0xff]
    %v593 = vld [vmem:[#allocation6 + $0xb18] sm:$0xff]
    %v594 = vld [vmem:[#allocation6 + $0xb20] sm:$0xff]
    %v595 = vld [vmem:[#allocation6 + $0xb28] sm:$0xff]
    %v596 = vld [vmem:[#allocation6 + $0xb30] sm:$0xff]
    %v597 = vld [vmem:[#allocation6 + $0xb38] sm:$0xff]
    %v598 = vld [vmem:[#allocation6 + $0xb40] sm:$0xff]
    %v599 = vld [vmem:[#allocation6 + $0xb48] sm:$0xff]
    %v600 = vld [vmem:[#allocation6 + $0xb50] sm:$0xff]
    %v601 = vld [vmem:[#allocation6 + $0xb58] sm:$0xff]
    %v602 = vld [vmem:[#allocation6 + $0xb60] sm:$0xff]
    %v603 = vld [vmem:[#allocation6 + $0xb68] sm:$0xff]
    %v604 = vld [vmem:[#allocation6 + $0xb70] sm:$0xff]
    %v605 = vld [vmem:[#allocation6 + $0xb78] sm:$0xff]
    %v606 = vld [vmem:[#allocation6 + $0xb80] sm:$0xff]
    %v607 = vld [vmem:[#allocation6 + $0xb88] sm:$0xff]
    %v608 = vld [vmem:[#allocation6 + $0xb90] sm:$0xff]
    %v609 = vld [vmem:[#allocation6 + $0xb98] sm:$0xff]
    %v610 = vld [vmem:[#allocation6 + $0xba0] sm:$0xff]
    %v611 = vld [vmem:[#allocation6 + $0xba8] sm:$0xff]
    %v612 = vld [vmem:[#allocation6 + $0xbb0] sm:$0xff]
    %v613 = vld [vmem:[#allocation6 + $0xbb8] sm:$0xff]
    %v614 = vld [vmem:[#allocation6 + $0xbc0] sm:$0xff]
    %v615 = vld [vmem:[#allocation6 + $0xbc8] sm:$0xff]
    %v616 = vld [vmem:[#allocation6 + $0xbd0] sm:$0xff]
    %v617 = vld [vmem:[#allocation6 + $0xbd8] sm:$0xff]
    %v618 = vld [vmem:[#allocation6 + $0xbe0] sm:$0xff]
    %v619 = vld [vmem:[#allocation6 + $0xbe8] sm:$0xff]
    %v620 = vld [vmem:[#allocation6 + $0xbf0] sm:$0xff]
    %v621 = vld [vmem:[#allocation6 + $0xbf8] sm:$0xff]
    %v622 = vld [vmem:[#allocation6 + $0xc00] sm:$0xff]
    %v623 = vld [vmem:[#allocation6 + $0xc08] sm:$0xff]
    %v624 = vld [vmem:[#allocation6 + $0xc10] sm:$0xff]
    %v625 = vld [vmem:[#allocation6 + $0xc18] sm:$0xff]
    %v626 = vld [vmem:[#allocation6 + $0xc20] sm:$0xff]
    %v627 = vld [vmem:[#allocation6 + $0xc28] sm:$0xff]
    %v628 = vld [vmem:[#allocation6 + $0xc30] sm:$0xff]
    %v629 = vld [vmem:[#allocation6 + $0xc38] sm:$0xff]
    %v630 = vld [vmem:[#allocation6 + $0xc40] sm:$0xff]
    %v631 = vld [vmem:[#allocation6 + $0xc48] sm:$0xff]
    %v632 = vld [vmem:[#allocation6 + $0xc50] sm:$0xff]
    %v633 = vld [vmem:[#allocation6 + $0xc58] sm:$0xff]
    %v634 = vld [vmem:[#allocation6 + $0xc60] sm:$0xff]
    %v635 = vld [vmem:[#allocation6 + $0xc68] sm:$0xff]
    %v636 = vld [vmem:[#allocation6 + $0xc70] sm:$0xff]
    %v637 = vld [vmem:[#allocation6 + $0xc78] sm:$0xff]
    %v638 = vld [vmem:[#allocation6 + $0xc80] sm:$0xff]
    %v639 = vld [vmem:[#allocation6 + $0xc88] sm:$0xff]
    %v640 = vld [vmem:[#allocation6 + $0xc90] sm:$0xff]
    %v641 = vld [vmem:[#allocation6 + $0xc98] sm:$0xff]
    %v642 = vld [vmem:[#allocation6 + $0xca0] sm:$0xff]
    %v643 = vld [vmem:[#allocation6 + $0xca8] sm:$0xff]
    %v644 = vld [vmem:[#allocation6 + $0xcb0] sm:$0xff]
    %v645 = vld [vmem:[#allocation6 + $0xcb8] sm:$0xff]
    %v646 = vld [vmem:[#allocation6 + $0xcc0] sm:$0xff]
    %v647 = vld [vmem:[#allocation6 + $0xcc8] sm:$0xff]
    %v648 = vld [vmem:[#allocation6 + $0xcd0] sm:$0xff]
    %v649 = vld [vmem:[#allocation6 + $0xcd8] sm:$0xff]
    %v650 = vld [vmem:[#allocation6 + $0xce0] sm:$0xff]
    %v651 = vld [vmem:[#allocation6 + $0xce8] sm:$0xff]
    %v652 = vld [vmem:[#allocation6 + $0xcf0] sm:$0xff]
    %v653 = vld [vmem:[#allocation6 + $0xcf8] sm:$0xff]
    %v654 = vld [vmem:[#allocation6 + $0xd00] sm:$0xff]
    %v655 = vld [vmem:[#allocation6 + $0xd08] sm:$0xff]
    %v656 = vld [vmem:[#allocation6 + $0xd10] sm:$0xff]
    %v657 = vld [vmem:[#allocation6 + $0xd18] sm:$0xff]
    %v658 = vld [vmem:[#allocation6 + $0xd20] sm:$0xff]
    %v659 = vld [vmem:[#allocation6 + $0xd28] sm:$0xff]
    %v660 = vld [vmem:[#allocation6 + $0xd30] sm:$0xff]
    %v661 = vld [vmem:[#allocation6 + $0xd38] sm:$0xff]
    %v662 = vld [vmem:[#allocation6 + $0xd40] sm:$0xff]
    %v663 = vld [vmem:[#allocation6 + $0xd48] sm:$0xff]
    %v664 = vld [vmem:[#allocation6 + $0xd50] sm:$0xff]
    %v665 = vld [vmem:[#allocation6 + $0xd58] sm:$0xff]
    %v666 = vld [vmem:[#allocation6 + $0xd60] sm:$0xff]
    %v667 = vld [vmem:[#allocation6 + $0xd68] sm:$0xff]
    %v668 = vld [vmem:[#allocation6 + $0xd70] sm:$0xff]
    %v669 = vld [vmem:[#allocation6 + $0xd78] sm:$0xff]
    %v670 = vld [vmem:[#allocation6 + $0xd80] sm:$0xff]
    %v671 = vld [vmem:[#allocation6 + $0xd88] sm:$0xff]
    %v672 = vld [vmem:[#allocation6 + $0xd90] sm:$0xff]
    %v673 = vld [vmem:[#allocation6 + $0xd98] sm:$0xff]
    %v674 = vld [vmem:[#allocation6 + $0xda0] sm:$0xff]
    %v675 = vld [vmem:[#allocation6 + $0xda8] sm:$0xff]
    %v676 = vld [vmem:[#allocation6 + $0xdb0] sm:$0xff]
    %v677 = vld [vmem:[#allocation6 + $0xdb8] sm:$0xff]
    %v678 = vld [vmem:[#allocation6 + $0xdc0] sm:$0xff]
    %v679 = vld [vmem:[#allocation6 + $0xdc8] sm:$0xff]
    %v680 = vld [vmem:[#allocation6 + $0xdd0] sm:$0xff]
    %v681 = vld [vmem:[#allocation6 + $0xdd8] sm:$0xff]
    %v682 = vld [vmem:[#allocation6 + $0xde0] sm:$0xff]
    %v683 = vld [vmem:[#allocation6 + $0xde8] sm:$0xff]
    %v684 = vld [vmem:[#allocation6 + $0xdf0] sm:$0xff]
    %v685 = vld [vmem:[#allocation6 + $0xdf8] sm:$0xff]
    %v686 = vld [vmem:[#allocation6 + $0xe00] sm:$0xff]
    %v687 = vld [vmem:[#allocation6 + $0xe08] sm:$0xff]
    %v688 = vld [vmem:[#allocation6 + $0xe10] sm:$0xff]
    %v689 = vld [vmem:[#allocation6 + $0xe18] sm:$0xff]
    %v690 = vld [vmem:[#allocation6 + $0xe20] sm:$0xff]
    %v691 = vld [vmem:[#allocation6 + $0xe28] sm:$0xff]
    %v692 = vld [vmem:[#allocation6 + $0xe30] sm:$0xff]
    %v693 = vld [vmem:[#allocation6 + $0xe38] sm:$0xff]
    %v694 = vld [vmem:[#allocation6 + $0xe40] sm:$0xff]
    %v695 = vld [vmem:[#allocation6 + $0xe48] sm:$0xff]
    %v696 = vld [vmem:[#allocation6 + $0xe50] sm:$0xff]
    %v697 = vld [vmem:[#allocation6 + $0xe58] sm:$0xff]
    %v698 = vld [vmem:[#allocation6 + $0xe60] sm:$0xff]
    %v699 = vld [vmem:[#allocation6 + $0xe68] sm:$0xff]
    %v700 = vld [vmem:[#allocation6 + $0xe70] sm:$0xff]
    %v701 = vld [vmem:[#allocation6 + $0xe78] sm:$0xff]
    %v702 = vld [vmem:[#allocation6 + $0xe80] sm:$0xff]
    %v703 = vld [vmem:[#allocation6 + $0xe88] sm:$0xff]
    %v704 = vld [vmem:[#allocation6 + $0xe90] sm:$0xff]
    %v705 = vld [vmem:[#allocation6 + $0xe98] sm:$0xff]
    %v706 = vld [vmem:[#allocation6 + $0xea0] sm:$0xff]
    %v707 = vld [vmem:[#allocation6 + $0xea8] sm:$0xff]
    %v708 = vld [vmem:[#allocation6 + $0xeb0] sm:$0xff]
    %v709 = vld [vmem:[#allocation6 + $0xeb8] sm:$0xff]
    %v710 = vld [vmem:[#allocation6 + $0xec0] sm:$0xff]
    %v711 = vld [vmem:[#allocation6 + $0xec8] sm:$0xff]
    %v712 = vld [vmem:[#allocation6 + $0xed0] sm:$0xff]
    %v713 = vld [vmem:[#allocation6 + $0xed8] sm:$0xff]
    %v714 = vld [vmem:[#allocation6 + $0xee0] sm:$0xff]
    %v715 = vld [vmem:[#allocation6 + $0xee8] sm:$0xff]
    %v716 = vld [vmem:[#allocation6 + $0xef0] sm:$0xff]
    %v717 = vld [vmem:[#allocation6 + $0xef8] sm:$0xff]
    %v718 = vld [vmem:[#allocation6 + $0xf00] sm:$0xff]
    %v719 = vld [vmem:[#allocation6 + $0xf08] sm:$0xff]
    %v720 = vld [vmem:[#allocation6 + $0xf10] sm:$0xff]
    %v721 = vld [vmem:[#allocation6 + $0xf18] sm:$0xff]
    %v722 = vld [vmem:[#allocation6 + $0xf20] sm:$0xff]
    %v723 = vld [vmem:[#allocation6 + $0xf28] sm:$0xff]
    %v724 = vld [vmem:[#allocation6 + $0xf30] sm:$0xff]
    %v725 = vld [vmem:[#allocation6 + $0xf38] sm:$0xff]
    %v726 = vld [vmem:[#allocation6 + $0xf40] sm:$0xff]
    %v727 = vld [vmem:[#allocation6 + $0xf48] sm:$0xff]
    %v728 = vld [vmem:[#allocation6 + $0xf50] sm:$0xff]
    %v729 = vld [vmem:[#allocation6 + $0xf58] sm:$0xff]
    %v730 = vld [vmem:[#allocation6 + $0xf60] sm:$0xff]
    %v731 = vld [vmem:[#allocation6 + $0xf68] sm:$0xff]
    %v732 = vld [vmem:[#allocation6 + $0xf70] sm:$0xff]
    %v733 = vld [vmem:[#allocation6 + $0xf78] sm:$0xff]
    %v734 = vld [vmem:[#allocation6 + $0xf80] sm:$0xff]
    %v735 = vld [vmem:[#allocation6 + $0xf88] sm:$0xff]
    %v736 = vld [vmem:[#allocation6 + $0xf90] sm:$0xff]
    %v737 = vld [vmem:[#allocation6 + $0xf98] sm:$0xff]
    %v738 = vld [vmem:[#allocation6 + $0xfa0] sm:$0xff]
    %v739 = vld [vmem:[#allocation6 + $0xfa8] sm:$0xff]
    %v740 = vld [vmem:[#allocation6 + $0xfb0] sm:$0xff]
    %v741 = vld [vmem:[#allocation6 + $0xfb8] sm:$0xff]
    %v742 = vld [vmem:[#allocation6 + $0xfc0] sm:$0xff]
    %v743 = vld [vmem:[#allocation6 + $0xfc8] sm:$0xff]
    %v744 = vld [vmem:[#allocation6 + $0xfd0] sm:$0xff]
    %v745 = vld [vmem:[#allocation6 + $0xfd8] sm:$0xff]
    %v746 = vld [vmem:[#allocation6 + $0xfe0] sm:$0xff]
    %v747 = vld [vmem:[#allocation6 + $0xfe8] sm:$0xff]
    %v748 = vld [vmem:[#allocation6 + $0xff0] sm:$0xff]
    %v749 = vld [vmem:[#allocation6 + $0xff8] sm:$0xff]
    %750 = vmatprep.subr.mxu0 %v239
    %751 = vmatpush1.msra.mxu0 %v238
    %752 = vmatprep.subr.mxu0 %v247
    %753 = vmatpush1.msra.mxu0 %v246
    %754 = vmatprep.subr.mxu0 %v255
    %755 = vmatpush1.msra.mxu0 %v254
    %756 = vmatprep.subr.mxu0 %v263
    %757 = vmatpush1.msra.mxu0 %v262
    %758 = vmatprep.subr.mxu0 %v271
    %759 = vmatpush1.msra.mxu0 %v270
    %760 = vmatprep.subr.mxu0 %v279
    %761 = vmatpush1.msra.mxu0 %v278
    %762 = vmatprep.subr.mxu0 %v287
    %763 = vmatpush1.msra.mxu0 %v286
    %764 = vmatprep.subr.mxu0 %v295
    %765 = vmatpush1.msra.mxu0 %v294
    %766 = vmatprep.subr.mxu0 %v303
    %767 = vmatpush1.msra.mxu0 %v302
    %768 = vmatprep.subr.mxu0 %v311
    %769 = vmatpush1.msra.mxu0 %v310
    %770 = vmatprep.subr.mxu0 %v319
    %771 = vmatpush1.msra.mxu0 %v318
    %772 = vmatprep.subr.mxu0 %v327
    %773 = vmatpush1.msra.mxu0 %v326
    %774 = vmatprep.subr.mxu0 %v335
    %775 = vmatpush1.msra.mxu0 %v334
    %776 = vmatprep.subr.mxu0 %v343
    %777 = vmatpush1.msra.mxu0 %v342
    %778 = vmatprep.subr.mxu0 %v351
    %779 = vmatpush1.msra.mxu0 %v350
    %780 = vmatprep.subr.mxu0 %v359
    %781 = vmatpush1.msra.mxu0 %v358
    %782 = vmatprep.subr.mxu0 %v367
    %783 = vmatpush1.msra.mxu0 %v366
    %784 = vmatprep.subr.mxu0 %v375
    %785 = vmatpush1.msra.mxu0 %v374
    %786 = vmatprep.subr.mxu0 %v383
    %787 = vmatpush1.msra.mxu0 %v382
    %788 = vmatprep.subr.mxu0 %v391
    %789 = vmatpush1.msra.mxu0 %v390
    %790 = vmatprep.subr.mxu0 %v399
    %791 = vmatpush1.msra.mxu0 %v398
    %792 = vmatprep.subr.mxu0 %v407
    %793 = vmatpush1.msra.mxu0 %v406
    %794 = vmatprep.subr.mxu0 %v415
    %795 = vmatpush1.msra.mxu0 %v414
    %796 = vmatprep.subr.mxu0 %v423
    %797 = vmatpush1.msra.mxu0 %v422
    %798 = vmatprep.subr.mxu0 %v431
    %799 = vmatpush1.msra.mxu0 %v430
    %800 = vmatprep.subr.mxu0 %v439
    %801 = vmatpush1.msra.mxu0 %v438
    %802 = vmatprep.subr.mxu0 %v447
    %803 = vmatpush1.msra.mxu0 %v446
    %804 = vmatprep.subr.mxu0 %v455
    %805 = vmatpush1.msra.mxu0 %v454
    %806 = vmatprep.subr.mxu0 %v463
    %807 = vmatpush1.msra.mxu0 %v462
    %808 = vmatprep.subr.mxu0 %v471
    %809 = vmatpush1.msra.mxu0 %v470
    %810 = vmatprep.subr.mxu0 %v479
    %811 = vmatpush1.msra.mxu0 %v478
    %812 = vmatprep.subr.mxu0 %v487
    %813 = vmatpush1.msra.mxu0 %v486
    %814 = vmatprep.mubr.f32.mxu0 %v150
    %815 = vmatmul.mubr.f32.gmra.mrb[0].mxu0 %v149
    %v816 = vpop.f32.mrb[0].mxu0
    %v817 = vadd.f32 0.0, %v816
    %v818 = vpop.f32.mrb[0].mxu0
    %v819 = vadd.f32 0.0, %v818
    %820 = vmatprep.mubr.f32.mxu0 %v154
    %821 = vmatmul.mubr.f32.gmra.mrb[0].mxu0 %v153
    %v822 = vpop.f32.mrb[0].mxu0
    %v823 = vadd.f32 0.0, %v822
    %v824 = vpop.f32.mrb[0].mxu0
    %v825 = vadd.f32 0.0, %v824
    %826 = vmatprep.mubr.f32.mxu0 %v158
    %827 = vmatmul.mubr.f32.gmra.mrb[0].mxu0 %v157
    %v828 = vpop.f32.mrb[0].mxu0
    %v829 = vadd.f32 0.0, %v828
    %v830 = vpop.f32.mrb[0].mxu0
    %v831 = vadd.f32 0.0, %v830
    %832 = vmatprep.mubr.f32.mxu0 %v162
    %833 = vmatmul.mubr.f32.gmra.mrb[0].mxu0 %v161
    %v834 = vpop.f32.mrb[0].mxu0
    %v835 = vadd.f32 0.0, %v834
    %v836 = vpop.f32.mrb[0].mxu0
    %v837 = vadd.f32 0.0, %v836
    %838 = vdwg.mxu0
    %839 = vmatprep.subr.mxu0 %v495
    %840 = vmatpush1.msra.mxu0 %v494
    %841 = vmatprep.subr.mxu0 %v503
    %842 = vmatpush1.msra.mxu0 %v502
    %843 = vmatprep.subr.mxu0 %v511
    %844 = vmatpush1.msra.mxu0 %v510
    %845 = vmatprep.subr.mxu0 %v519
    %846 = vmatpush1.msra.mxu0 %v518
    %847 = vmatprep.subr.mxu0 %v527
    %848 = vmatpush1.msra.mxu0 %v526
    %849 = vmatprep.subr.mxu0 %v535
    %850 = vmatpush1.msra.mxu0 %v534
    %851 = vmatprep.subr.mxu0 %v543
    %852 = vmatpush1.msra.mxu0 %v542
    %853 = vmatprep.subr.mxu0 %v551
    %854 = vmatpush1.msra.mxu0 %v550
    %855 = vmatprep.subr.mxu0 %v559
    %856 = vmatpush1.msra.mxu0 %v558
    %857 = vmatprep.subr.mxu0 %v567
    %858 = vmatpush1.msra.mxu0 %v566
    %859 = vmatprep.subr.mxu0 %v575
    %860 = vmatpush1.msra.mxu0 %v574
    %861 = vmatprep.subr.mxu0 %v583
    %862 = vmatpush1.msra.mxu0 %v582
    %863 = vmatprep.subr.mxu0 %v591
    %864 = vmatpush1.msra.mxu0 %v590
    %865 = vmatprep.subr.mxu0 %v599
    %866 = vmatpush1.msra.mxu0 %v598
    %867 = vmatprep.subr.mxu0 %v607
    %868 = vmatpush1.msra.mxu0 %v606
    %869 = vmatprep.subr.mxu0 %v615
    %870 = vmatpush1.msra.mxu0 %v614
    %871 = vmatprep.subr.mxu0 %v623
    %872 = vmatpush1.msra.mxu0 %v622
    %873 = vmatprep.subr.mxu0 %v631
    %874 = vmatpush1.msra.mxu0 %v630
    %875 = vmatprep.subr.mxu0 %v639
    %876 = vmatpush1.msra.mxu0 %v638
    %877 = vmatprep.subr.mxu0 %v647
    %878 = vmatpush1.msra.mxu0 %v646
    %879 = vmatprep.subr.mxu0 %v655
    %880 = vmatpush1.msra.mxu0 %v654
    %881 = vmatprep.subr.mxu0 %v663
    %882 = vmatpush1.msra.mxu0 %v662
    %883 = vmatprep.subr.mxu0 %v671
    %884 = vmatpush1.msra.mxu0 %v670
    %885 = vmatprep.subr.mxu0 %v679
    %886 = vmatpush1.msra.mxu0 %v678
    %887 = vmatprep.subr.mxu0 %v687
    %888 = vmatpush1.msra.mxu0 %v686
    %889 = vmatprep.subr.mxu0 %v695
    %890 = vmatpush1.msra.mxu0 %v694
    %891 = vmatprep.subr.mxu0 %v703
    %892 = vmatpush1.msra.mxu0 %v702
    %893 = vmatprep.subr.mxu0 %v711
    %894 = vmatpush1.msra.mxu0 %v710
    %895 = vmatprep.subr.mxu0 %v719
    %896 = vmatpush1.msra.mxu0 %v718
    %897 = vmatprep.subr.mxu0 %v727
    %898 = vmatpush1.msra.mxu0 %v726
    %899 = vmatprep.subr.mxu0 %v735
    %900 = vmatpush1.msra.mxu0 %v734
    %901 = vmatprep.subr.mxu0 %v743
    %902 = vmatpush1.msra.mxu0 %v742
    %903 = vmatprep.mubr.f32.mxu0 %v152
    %904 = vmatmul.mubr.f32.gmra.mrb[0].mxu0 %v151
    %v905 = vpop.f32.mrb[0].mxu0
    %v906 = vadd.f32 %v817, %v905
    %v907 = vpop.f32.mrb[0].mxu0
    %v908 = vadd.f32 %v819, %v907
    %909 = vmatprep.mubr.f32.mxu0 %v156
    %910 = vmatmul.mubr.f32.gmra.mrb[0].mxu0 %v155
    %v911 = vpop.f32.mrb[0].mxu0
    %v912 = vadd.f32 %v823, %v911
    %v913 = vpop.f32.mrb[0].mxu0
    %v914 = vadd.f32 %v825, %v913
    %915 = vmatprep.mubr.f32.mxu0 %v160
    %916 = vmatmul.mubr.f32.gmra.mrb[0].mxu0 %v159
    %v917 = vpop.f32.mrb[0].mxu0
    %v918 = vadd.f32 %v829, %v917
    %v919 = vpop.f32.mrb[0].mxu0
    %v920 = vadd.f32 %v831, %v919
    %921 = vmatprep.mubr.f32.mxu0 %v164
    %922 = vmatmul.mubr.f32.gmra.mrb[0].mxu0 %v163
    %v923 = vpop.f32.mrb[0].mxu0
    %v924 = vadd.f32 %v835, %v923
    %v925 = vpop.f32.mrb[0].mxu0
    %v926 = vadd.f32 %v837, %v925
    %927 = vdwg.mxu0
    %928 = vmatprep.subr.mxu0 %v241
    %929 = vmatpush1.msra.mxu0 %v240
    %930 = vmatprep.subr.mxu0 %v249
    %931 = vmatpush1.msra.mxu0 %v248
    %932 = vmatprep.subr.mxu0 %v257
    %933 = vmatpush1.msra.mxu0 %v256
    %934 = vmatprep.subr.mxu0 %v265
    %935 = vmatpush1.msra.mxu0 %v264
    %936 = vmatprep.subr.mxu0 %v273
    %937 = vmatpush1.msra.mxu0 %v272
    %938 = vmatprep.subr.mxu0 %v281
    %939 = vmatpush1.msra.mxu0 %v280
    %940 = vmatprep.subr.mxu0 %v289
    %941 = vmatpush1.msra.mxu0 %v288
    %942 = vmatprep.subr.mxu0 %v297
    %943 = vmatpush1.msra.mxu0 %v296
    %944 = vmatprep.subr.mxu0 %v305
    %945 = vmatpush1.msra.mxu0 %v304
    %946 = vmatprep.subr.mxu0 %v313
    %947 = vmatpush1.msra.mxu0 %v312
    %948 = vmatprep.subr.mxu0 %v321
    %949 = vmatpush1.msra.mxu0 %v320
    %950 = vmatprep.subr.mxu0 %v329
    %951 = vmatpush1.msra.mxu0 %v328
    %952 = vmatprep.subr.mxu0 %v337
    %953 = vmatpush1.msra.mxu0 %v336
    %954 = vmatprep.subr.mxu0 %v345
    %955 = vmatpush1.msra.mxu0 %v344
    %956 = vmatprep.subr.mxu0 %v353
    %957 = vmatpush1.msra.mxu0 %v352
    %958 = vmatprep.subr.mxu0 %v361
    %959 = vmatpush1.msra.mxu0 %v360
    %960 = vmatprep.subr.mxu0 %v369
    %961 = vmatpush1.msra.mxu0 %v368
    %962 = vmatprep.subr.mxu0 %v377
    %963 = vmatpush1.msra.mxu0 %v376
    %964 = vmatprep.subr.mxu0 %v385
    %965 = vmatpush1.msra.mxu0 %v384
    %966 = vmatprep.subr.mxu0 %v393
    %967 = vmatpush1.msra.mxu0 %v392
    %968 = vmatprep.subr.mxu0 %v401
    %969 = vmatpush1.msra.mxu0 %v400
    %970 = vmatprep.subr.mxu0 %v409
    %971 = vmatpush1.msra.mxu0 %v408
    %972 = vmatprep.subr.mxu0 %v417
    %973 = vmatpush1.msra.mxu0 %v416
    %974 = vmatprep.subr.mxu0 %v425
    %975 = vmatpush1.msra.mxu0 %v424
    %976 = vmatprep.subr.mxu0 %v433
    %977 = vmatpush1.msra.mxu0 %v432
    %978 = vmatprep.subr.mxu0 %v441
    %979 = vmatpush1.msra.mxu0 %v440
    %980 = vmatprep.subr.mxu0 %v449
    %981 = vmatpush1.msra.mxu0 %v448
    %982 = vmatprep.subr.mxu0 %v457
    %983 = vmatpush1.msra.mxu0 %v456
    %984 = vmatprep.subr.mxu0 %v465
    %985 = vmatpush1.msra.mxu0 %v464
    %986 = vmatprep.subr.mxu0 %v473
    %987 = vmatpush1.msra.mxu0 %v472
    %988 = vmatprep.subr.mxu0 %v481
    %989 = vmatpush1.msra.mxu0 %v480
    %990 = vmatprep.subr.mxu0 %v489
    %991 = vmatpush1.msra.mxu0 %v488
    %992 = vmatprep.mubr.f32.mxu0 %v150
    %993 = vmatmul.mubr.f32.gmra.mrb[0].mxu0 %v149
    %v994 = vpop.f32.mrb[0].mxu0
    %v995 = vadd.f32 0.0, %v994
    %v996 = vpop.f32.mrb[0].mxu0
    %v997 = vadd.f32 0.0, %v996
    %998 = vmatprep.mubr.f32.mxu0 %v154
    %999 = vmatmul.mubr.f32.gmra.mrb[0].mxu0 %v153
    %v1000 = vpop.f32.mrb[0].mxu0
    %v1001 = vadd.f32 0.0, %v1000
    %v1002 = vpop.f32.mrb[0].mxu0
    %v1003 = vadd.f32 0.0, %v1002
    %1004 = vmatprep.mubr.f32.mxu0 %v158
    %1005 = vmatmul.mubr.f32.gmra.mrb[0].mxu0 %v157
    %v1006 = vpop.f32.mrb[0].mxu0
    %v1007 = vadd.f32 0.0, %v1006
    %v1008 = vpop.f32.mrb[0].mxu0
    %v1009 = vadd.f32 0.0, %v1008
    %1010 = vmatprep.mubr.f32.mxu0 %v162
    %1011 = vmatmul.mubr.f32.gmra.mrb[0].mxu0 %v161
    %v1012 = vpop.f32.mrb[0].mxu0
    %v1013 = vadd.f32 0.0, %v1012
    %v1014 = vpop.f32.mrb[0].mxu0
    %v1015 = vadd.f32 0.0, %v1014
    %1016 = vdwg.mxu0
    %1017 = vmatprep.subr.mxu0 %v497
    %1018 = vmatpush1.msra.mxu0 %v496
    %1019 = vmatprep.subr.mxu0 %v505
    %1020 = vmatpush1.msra.mxu0 %v504
    %1021 = vmatprep.subr.mxu0 %v513
    %1022 = vmatpush1.msra.mxu0 %v512
    %1023 = vmatprep.subr.mxu0 %v521
    %1024 = vmatpush1.msra.mxu0 %v520
    %1025 = vmatprep.subr.mxu0 %v529
    %1026 = vmatpush1.msra.mxu0 %v528
    %1027 = vmatprep.subr.mxu0 %v537
    %1028 = vmatpush1.msra.mxu0 %v536
    %1029 = vmatprep.subr.mxu0 %v545
    %1030 = vmatpush1.msra.mxu0 %v544
    %1031 = vmatprep.subr.mxu0 %v553
    %1032 = vmatpush1.msra.mxu0 %v552
    %1033 = vmatprep.subr.mxu0 %v561
    %1034 = vmatpush1.msra.mxu0 %v560
    %1035 = vmatprep.subr.mxu0 %v569
    %1036 = vmatpush1.msra.mxu0 %v568
    %1037 = vmatprep.subr.mxu0 %v577
    %1038 = vmatpush1.msra.mxu0 %v576
    %1039 = vmatprep.subr.mxu0 %v585
    %1040 = vmatpush1.msra.mxu0 %v584
    %1041 = vmatprep.subr.mxu0 %v593
    %1042 = vmatpush1.msra.mxu0 %v592
    %1043 = vmatprep.subr.mxu0 %v601
    %1044 = vmatpush1.msra.mxu0 %v600
    %1045 = vmatprep.subr.mxu0 %v609
    %1046 = vmatpush1.msra.mxu0 %v608
    %1047 = vmatprep.subr.mxu0 %v617
    %1048 = vmatpush1.msra.mxu0 %v616
    %1049 = vmatprep.subr.mxu0 %v625
    %1050 = vmatpush1.msra.mxu0 %v624
    %1051 = vmatprep.subr.mxu0 %v633
    %1052 = vmatpush1.msra.mxu0 %v632
    %1053 = vmatprep.subr.mxu0 %v641
    %1054 = vmatpush1.msra.mxu0 %v640
    %1055 = vmatprep.subr.mxu0 %v649
    %1056 = vmatpush1.msra.mxu0 %v648
    %1057 = vmatprep.subr.mxu0 %v657
    %1058 = vmatpush1.msra.mxu0 %v656
    %1059 = vmatprep.subr.mxu0 %v665
    %1060 = vmatpush1.msra.mxu0 %v664
    %1061 = vmatprep.subr.mxu0 %v673
    %1062 = vmatpush1.msra.mxu0 %v672
    %1063 = vmatprep.subr.mxu0 %v681
    %1064 = vmatpush1.msra.mxu0 %v680
    %1065 = vmatprep.subr.mxu0 %v689
    %1066 = vmatpush1.msra.mxu0 %v688
    %1067 = vmatprep.subr.mxu0 %v697
    %1068 = vmatpush1.msra.mxu0 %v696
    %1069 = vmatprep.subr.mxu0 %v705
    %1070 = vmatpush1.msra.mxu0 %v704
    %1071 = vmatprep.subr.mxu0 %v713
    %1072 = vmatpush1.msra.mxu0 %v712
    %1073 = vmatprep.subr.mxu0 %v721
    %1074 = vmatpush1.msra.mxu0 %v720
    %1075 = vmatprep.subr.mxu0 %v729
    %1076 = vmatpush1.msra.mxu0 %v728
    %1077 = vmatprep.subr.mxu0 %v737
    %1078 = vmatpush1.msra.mxu0 %v736
    %1079 = vmatprep.subr.mxu0 %v745
    %1080 = vmatpush1.msra.mxu0 %v744
    %1081 = vmatprep.mubr.f32.mxu0 %v152
    %1082 = vmatmul.mubr.f32.gmra.mrb[0].mxu0 %v151
    %v1083 = vpop.f32.mrb[0].mxu0
    %v1084 = vadd.f32 %v995, %v1083
    %v1085 = vpop.f32.mrb[0].mxu0
    %v1086 = vadd.f32 %v997, %v1085
    %1087 = vmatprep.mubr.f32.mxu0 %v156
    %1088 = vmatmul.mubr.f32.gmra.mrb[0].mxu0 %v155
    %v1089 = vpop.f32.mrb[0].mxu0
    %v1090 = vadd.f32 %v1001, %v1089
    %v1091 = vpop.f32.mrb[0].mxu0
    %v1092 = vadd.f32 %v1003, %v1091
    %1093 = vmatprep.mubr.f32.mxu0 %v160
    %1094 = vmatmul.mubr.f32.gmra.mrb[0].mxu0 %v159
    %v1095 = vpop.f32.mrb[0].mxu0
    %v1096 = vadd.f32 %v1007, %v1095
    %v1097 = vpop.f32.mrb[0].mxu0
    %v1098 = vadd.f32 %v1009, %v1097
    %1099 = vmatprep.mubr.f32.mxu0 %v164
    %1100 = vmatmul.mubr.f32.gmra.mrb[0].mxu0 %v163
    %v1101 = vpop.f32.mrb[0].mxu0
    %v1102 = vadd.f32 %v1013, %v1101
    %v1103 = vpop.f32.mrb[0].mxu0
    %v1104 = vadd.f32 %v1015, %v1103
    %1105 = vdwg.mxu0
    %1106 = vmatprep.subr.mxu0 %v243
    %1107 = vmatpush1.msra.mxu0 %v242
    %1108 = vmatprep.subr.mxu0 %v251
    %1109 = vmatpush1.msra.mxu0 %v250
    %1110 = vmatprep.subr.mxu0 %v259
    %1111 = vmatpush1.msra.mxu0 %v258
    %1112 = vmatprep.subr.mxu0 %v267
    %1113 = vmatpush1.msra.mxu0 %v266
    %1114 = vmatprep.subr.mxu0 %v275
    %1115 = vmatpush1.msra.mxu0 %v274
    %1116 = vmatprep.subr.mxu0 %v283
    %1117 = vmatpush1.msra.mxu0 %v282
    %1118 = vmatprep.subr.mxu0 %v291
    %1119 = vmatpush1.msra.mxu0 %v290
    %1120 = vmatprep.subr.mxu0 %v299
    %1121 = vmatpush1.msra.mxu0 %v298
    %1122 = vmatprep.subr.mxu0 %v307
    %1123 = vmatpush1.msra.mxu0 %v306
    %1124 = vmatprep.subr.mxu0 %v315
    %1125 = vmatpush1.msra.mxu0 %v314
    %1126 = vmatprep.subr.mxu0 %v323
    %1127 = vmatpush1.msra.mxu0 %v322
    %1128 = vmatprep.subr.mxu0 %v331
    %1129 = vmatpush1.msra.mxu0 %v330
    %1130 = vmatprep.subr.mxu0 %v339
    %1131 = vmatpush1.msra.mxu0 %v338
    %1132 = vmatprep.subr.mxu0 %v347
    %1133 = vmatpush1.msra.mxu0 %v346
    %1134 = vmatprep.subr.mxu0 %v355
    %1135 = vmatpush1.msra.mxu0 %v354
    %1136 = vmatprep.subr.mxu0 %v363
    %1137 = vmatpush1.msra.mxu0 %v362
    %1138 = vmatprep.subr.mxu0 %v371
    %1139 = vmatpush1.msra.mxu0 %v370
    %1140 = vmatprep.subr.mxu0 %v379
    %1141 = vmatpush1.msra.mxu0 %v378
    %1142 = vmatprep.subr.mxu0 %v387
    %1143 = vmatpush1.msra.mxu0 %v386
    %1144 = vmatprep.subr.mxu0 %v395
    %1145 = vmatpush1.msra.mxu0 %v394
    %1146 = vmatprep.subr.mxu0 %v403
    %1147 = vmatpush1.msra.mxu0 %v402
    %1148 = vmatprep.subr.mxu0 %v411
    %1149 = vmatpush1.msra.mxu0 %v410
    %1150 = vmatprep.subr.mxu0 %v419
    %1151 = vmatpush1.msra.mxu0 %v418
    %1152 = vmatprep.subr.mxu0 %v427
    %1153 = vmatpush1.msra.mxu0 %v426
    %1154 = vmatprep.subr.mxu0 %v435
    %1155 = vmatpush1.msra.mxu0 %v434
    %1156 = vmatprep.subr.mxu0 %v443
    %1157 = vmatpush1.msra.mxu0 %v442
    %1158 = vmatprep.subr.mxu0 %v451
    %1159 = vmatpush1.msra.mxu0 %v450
    %1160 = vmatprep.subr.mxu0 %v459
    %1161 = vmatpush1.msra.mxu0 %v458
    %1162 = vmatprep.subr.mxu0 %v467
    %1163 = vmatpush1.msra.mxu0 %v466
    %1164 = vmatprep.subr.mxu0 %v475
    %1165 = vmatpush1.msra.mxu0 %v474
    %1166 = vmatprep.subr.mxu0 %v483
    %1167 = vmatpush1.msra.mxu0 %v482
    %1168 = vmatprep.subr.mxu0 %v491
    %1169 = vmatpush1.msra.mxu0 %v490
    %1170 = vmatprep.mubr.f32.mxu0 %v150
    %1171 = vmatmul.mubr.f32.gmra.mrb[0].mxu0 %v149
    %v1172 = vpop.f32.mrb[0].mxu0
    %v1173 = vadd.f32 0.0, %v1172
    %v1174 = vpop.f32.mrb[0].mxu0
    %v1175 = vadd.f32 0.0, %v1174
    %1176 = vmatprep.mubr.f32.mxu0 %v154
    %1177 = vmatmul.mubr.f32.gmra.mrb[0].mxu0 %v153
    %v1178 = vpop.f32.mrb[0].mxu0
    %v1179 = vadd.f32 0.0, %v1178
    %v1180 = vpop.f32.mrb[0].mxu0
    %v1181 = vadd.f32 0.0, %v1180
    %1182 = vmatprep.mubr.f32.mxu0 %v158
    %1183 = vmatmul.mubr.f32.gmra.mrb[0].mxu0 %v157
    %v1184 = vpop.f32.mrb[0].mxu0
    %v1185 = vadd.f32 0.0, %v1184
    %v1186 = vpop.f32.mrb[0].mxu0
    %v1187 = vadd.f32 0.0, %v1186
    %1188 = vmatprep.mubr.f32.mxu0 %v162
    %1189 = vmatmul.mubr.f32.gmra.mrb[0].mxu0 %v161
    %v1190 = vpop.f32.mrb[0].mxu0
    %v1191 = vadd.f32 0.0, %v1190
    %v1192 = vpop.f32.mrb[0].mxu0
    %v1193 = vadd.f32 0.0, %v1192
    %1194 = vdwg.mxu0
    %1195 = vmatprep.subr.mxu0 %v499
    %1196 = vmatpush1.msra.mxu0 %v498
    %1197 = vmatprep.subr.mxu0 %v507
    %1198 = vmatpush1.msra.mxu0 %v506
    %1199 = vmatprep.subr.mxu0 %v515
    %1200 = vmatpush1.msra.mxu0 %v514
    %1201 = vmatprep.subr.mxu0 %v523
    %1202 = vmatpush1.msra.mxu0 %v522
    %1203 = vmatprep.subr.mxu0 %v531
    %1204 = vmatpush1.msra.mxu0 %v530
    %1205 = vmatprep.subr.mxu0 %v539
    %1206 = vmatpush1.msra.mxu0 %v538
    %1207 = vmatprep.subr.mxu0 %v547
    %1208 = vmatpush1.msra.mxu0 %v546
    %1209 = vmatprep.subr.mxu0 %v555
    %1210 = vmatpush1.msra.mxu0 %v554
    %1211 = vmatprep.subr.mxu0 %v563
    %1212 = vmatpush1.msra.mxu0 %v562
    %1213 = vmatprep.subr.mxu0 %v571
    %1214 = vmatpush1.msra.mxu0 %v570
    %1215 = vmatprep.subr.mxu0 %v579
    %1216 = vmatpush1.msra.mxu0 %v578
    %1217 = vmatprep.subr.mxu0 %v587
    %1218 = vmatpush1.msra.mxu0 %v586
    %1219 = vmatprep.subr.mxu0 %v595
    %1220 = vmatpush1.msra.mxu0 %v594
    %1221 = vmatprep.subr.mxu0 %v603
    %1222 = vmatpush1.msra.mxu0 %v602
    %1223 = vmatprep.subr.mxu0 %v611
    %1224 = vmatpush1.msra.mxu0 %v610
    %1225 = vmatprep.subr.mxu0 %v619
    %1226 = vmatpush1.msra.mxu0 %v618
    %1227 = vmatprep.subr.mxu0 %v627
    %1228 = vmatpush1.msra.mxu0 %v626
    %1229 = vmatprep.subr.mxu0 %v635
    %1230 = vmatpush1.msra.mxu0 %v634
    %1231 = vmatprep.subr.mxu0 %v643
    %1232 = vmatpush1.msra.mxu0 %v642
    %1233 = vmatprep.subr.mxu0 %v651
    %1234 = vmatpush1.msra.mxu0 %v650
    %1235 = vmatprep.subr.mxu0 %v659
    %1236 = vmatpush1.msra.mxu0 %v658
    %1237 = vmatprep.subr.mxu0 %v667
    %1238 = vmatpush1.msra.mxu0 %v666
    %1239 = vmatprep.subr.mxu0 %v675
    %1240 = vmatpush1.msra.mxu0 %v674
    %1241 = vmatprep.subr.mxu0 %v683
    %1242 = vmatpush1.msra.mxu0 %v682
    %1243 = vmatprep.subr.mxu0 %v691
    %1244 = vmatpush1.msra.mxu0 %v690
    %1245 = vmatprep.subr.mxu0 %v699
    %1246 = vmatpush1.msra.mxu0 %v698
    %1247 = vmatprep.subr.mxu0 %v707
    %1248 = vmatpush1.msra.mxu0 %v706
    %1249 = vmatprep.subr.mxu0 %v715
    %1250 = vmatpush1.msra.mxu0 %v714
    %1251 = vmatprep.subr.mxu0 %v723
    %1252 = vmatpush1.msra.mxu0 %v722
    %1253 = vmatprep.subr.mxu0 %v731
    %1254 = vmatpush1.msra.mxu0 %v730
    %1255 = vmatprep.subr.mxu0 %v739
    %1256 = vmatpush1.msra.mxu0 %v738
    %1257 = vmatprep.subr.mxu0 %v747
    %1258 = vmatpush1.msra.mxu0 %v746
    %1259 = vmatprep.mubr.f32.mxu0 %v152
    %1260 = vmatmul.mubr.f32.gmra.mrb[0].mxu0 %v151
    %v1261 = vpop.f32.mrb[0].mxu0
    %v1262 = vadd.f32 %v1173, %v1261
    %v1263 = vpop.f32.mrb[0].mxu0
    %v1264 = vadd.f32 %v1175, %v1263
    %1265 = vmatprep.mubr.f32.mxu0 %v156
    %1266 = vmatmul.mubr.f32.gmra.mrb[0].mxu0 %v155
    %v1267 = vpop.f32.mrb[0].mxu0
    %v1268 = vadd.f32 %v1179, %v1267
    %v1269 = vpop.f32.mrb[0].mxu0
    %v1270 = vadd.f32 %v1181, %v1269
    %1271 = vmatprep.mubr.f32.mxu0 %v160
    %1272 = vmatmul.mubr.f32.gmra.mrb[0].mxu0 %v159
    %v1273 = vpop.f32.mrb[0].mxu0
    %v1274 = vadd.f32 %v1185, %v1273
    %v1275 = vpop.f32.mrb[0].mxu0
    %v1276 = vadd.f32 %v1187, %v1275
    %1277 = vmatprep.mubr.f32.mxu0 %v164
    %1278 = vmatmul.mubr.f32.gmra.mrb[0].mxu0 %v163
    %v1279 = vpop.f32.mrb[0].mxu0
    %v1280 = vadd.f32 %v1191, %v1279
    %v1281 = vpop.f32.mrb[0].mxu0
    %v1282 = vadd.f32 %v1193, %v1281
    %1283 = vdwg.mxu0
    %1284 = vmatprep.subr.mxu0 %v245
    %1285 = vmatpush1.msra.mxu0 %v244
    %1286 = vmatprep.subr.mxu0 %v253
    %1287 = vmatpush1.msra.mxu0 %v252
    %1288 = vmatprep.subr.mxu0 %v261
    %1289 = vmatpush1.msra.mxu0 %v260
    %1290 = vmatprep.subr.mxu0 %v269
    %1291 = vmatpush1.msra.mxu0 %v268
    %1292 = vmatprep.subr.mxu0 %v277
    %1293 = vmatpush1.msra.mxu0 %v276
    %1294 = vmatprep.subr.mxu0 %v285
    %1295 = vmatpush1.msra.mxu0 %v284
    %1296 = vmatprep.subr.mxu0 %v293
    %1297 = vmatpush1.msra.mxu0 %v292
    %1298 = vmatprep.subr.mxu0 %v301
    %1299 = vmatpush1.msra.mxu0 %v300
    %1300 = vmatprep.subr.mxu0 %v309
    %1301 = vmatpush1.msra.mxu0 %v308
    %1302 = vmatprep.subr.mxu0 %v317
    %1303 = vmatpush1.msra.mxu0 %v316
    %1304 = vmatprep.subr.mxu0 %v325
    %1305 = vmatpush1.msra.mxu0 %v324
    %1306 = vmatprep.subr.mxu0 %v333
    %1307 = vmatpush1.msra.mxu0 %v332
    %1308 = vmatprep.subr.mxu0 %v341
    %1309 = vmatpush1.msra.mxu0 %v340
    %1310 = vmatprep.subr.mxu0 %v349
    %1311 = vmatpush1.msra.mxu0 %v348
    %1312 = vmatprep.subr.mxu0 %v357
    %1313 = vmatpush1.msra.mxu0 %v356
    %1314 = vmatprep.subr.mxu0 %v365
    %1315 = vmatpush1.msra.mxu0 %v364
    %1316 = vmatprep.subr.mxu0 %v373
    %1317 = vmatpush1.msra.mxu0 %v372
    %1318 = vmatprep.subr.mxu0 %v381
    %1319 = vmatpush1.msra.mxu0 %v380
    %1320 = vmatprep.subr.mxu0 %v389
    %1321 = vmatpush1.msra.mxu0 %v388
    %1322 = vmatprep.subr.mxu0 %v397
    %1323 = vmatpush1.msra.mxu0 %v396
    %1324 = vmatprep.subr.mxu0 %v405
    %1325 = vmatpush1.msra.mxu0 %v404
    %1326 = vmatprep.subr.mxu0 %v413
    %1327 = vmatpush1.msra.mxu0 %v412
    %1328 = vmatprep.subr.mxu0 %v421
    %1329 = vmatpush1.msra.mxu0 %v420
    %1330 = vmatprep.subr.mxu0 %v429
    %1331 = vmatpush1.msra.mxu0 %v428
    %1332 = vmatprep.subr.mxu0 %v437
    %1333 = vmatpush1.msra.mxu0 %v436
    %1334 = vmatprep.subr.mxu0 %v445
    %1335 = vmatpush1.msra.mxu0 %v444
    %1336 = vmatprep.subr.mxu0 %v453
    %1337 = vmatpush1.msra.mxu0 %v452
    %1338 = vmatprep.subr.mxu0 %v461
    %1339 = vmatpush1.msra.mxu0 %v460
    %1340 = vmatprep.subr.mxu0 %v469
    %1341 = vmatpush1.msra.mxu0 %v468
    %1342 = vmatprep.subr.mxu0 %v477
    %1343 = vmatpush1.msra.mxu0 %v476
    %1344 = vmatprep.subr.mxu0 %v485
    %1345 = vmatpush1.msra.mxu0 %v484
    %1346 = vmatprep.subr.mxu0 %v493
    %1347 = vmatpush1.msra.mxu0 %v492
    %1348 = vmatprep.mubr.f32.mxu0 %v150
    %1349 = vmatmul.mubr.f32.gmra.mrb[0].mxu0 %v149
    %v1350 = vpop.f32.mrb[0].mxu0
    %v1351 = vadd.f32 0.0, %v1350
    %v1352 = vpop.f32.mrb[0].mxu0
    %v1353 = vadd.f32 0.0, %v1352
    %1354 = vmatprep.mubr.f32.mxu0 %v154
    %1355 = vmatmul.mubr.f32.gmra.mrb[0].mxu0 %v153
    %v1356 = vpop.f32.mrb[0].mxu0
    %v1357 = vadd.f32 0.0, %v1356
    %v1358 = vpop.f32.mrb[0].mxu0
    %v1359 = vadd.f32 0.0, %v1358
    %1360 = vmatprep.mubr.f32.mxu0 %v158
    %1361 = vmatmul.mubr.f32.gmra.mrb[0].mxu0 %v157
    %v1362 = vpop.f32.mrb[0].mxu0
    %v1363 = vadd.f32 0.0, %v1362
    %v1364 = vpop.f32.mrb[0].mxu0
    %v1365 = vadd.f32 0.0, %v1364
    %1366 = vmatprep.mubr.f32.mxu0 %v162
    %1367 = vmatmul.mubr.f32.gmra.mrb[0].mxu0 %v161
    %v1368 = vpop.f32.mrb[0].mxu0
    %v1369 = vadd.f32 0.0, %v1368
    %v1370 = vpop.f32.mrb[0].mxu0
    %v1371 = vadd.f32 0.0, %v1370
    %1372 = vdwg.mxu0
    %1373 = vmatprep.subr.mxu0 %v501
    %1374 = vmatpush1.msra.mxu0 %v500
    %1375 = vmatprep.subr.mxu0 %v509
    %1376 = vmatpush1.msra.mxu0 %v508
    %1377 = vmatprep.subr.mxu0 %v517
    %1378 = vmatpush1.msra.mxu0 %v516
    %1379 = vmatprep.subr.mxu0 %v525
    %1380 = vmatpush1.msra.mxu0 %v524
    %1381 = vmatprep.subr.mxu0 %v533
    %1382 = vmatpush1.msra.mxu0 %v532
    %1383 = vmatprep.subr.mxu0 %v541
    %1384 = vmatpush1.msra.mxu0 %v540
    %1385 = vmatprep.subr.mxu0 %v549
    %1386 = vmatpush1.msra.mxu0 %v548
    %1387 = vmatprep.subr.mxu0 %v557
    %1388 = vmatpush1.msra.mxu0 %v556
    %1389 = vmatprep.subr.mxu0 %v565
    %1390 = vmatpush1.msra.mxu0 %v564
    %1391 = vmatprep.subr.mxu0 %v573
    %1392 = vmatpush1.msra.mxu0 %v572
    %1393 = vmatprep.subr.mxu0 %v581
    %1394 = vmatpush1.msra.mxu0 %v580
    %1395 = vmatprep.subr.mxu0 %v589
    %1396 = vmatpush1.msra.mxu0 %v588
    %1397 = vmatprep.subr.mxu0 %v597
    %1398 = vmatpush1.msra.mxu0 %v596
    %1399 = vmatprep.subr.mxu0 %v605
    %1400 = vmatpush1.msra.mxu0 %v604
    %1401 = vmatprep.subr.mxu0 %v613
    %1402 = vmatpush1.msra.mxu0 %v612
    %1403 = vmatprep.subr.mxu0 %v621
    %1404 = vmatpush1.msra.mxu0 %v620
    %1405 = vmatprep.subr.mxu0 %v629
    %1406 = vmatpush1.msra.mxu0 %v628
    %1407 = vmatprep.subr.mxu0 %v637
    %1408 = vmatpush1.msra.mxu0 %v636
    %1409 = vmatprep.subr.mxu0 %v645
    %1410 = vmatpush1.msra.mxu0 %v644
    %1411 = vmatprep.subr.mxu0 %v653
    %1412 = vmatpush1.msra.mxu0 %v652
    %1413 = vmatprep.subr.mxu0 %v661
    %1414 = vmatpush1.msra.mxu0 %v660
    %1415 = vmatprep.subr.mxu0 %v669
    %1416 = vmatpush1.msra.mxu0 %v668
    %1417 = vmatprep.subr.mxu0 %v677
    %1418 = vmatpush1.msra.mxu0 %v676
    %1419 = vmatprep.subr.mxu0 %v685
    %1420 = vmatpush1.msra.mxu0 %v684
    %1421 = vmatprep.subr.mxu0 %v693
    %1422 = vmatpush1.msra.mxu0 %v692
    %1423 = vmatprep.subr.mxu0 %v701
    %1424 = vmatpush1.msra.mxu0 %v700
    %1425 = vmatprep.subr.mxu0 %v709
    %1426 = vmatpush1.msra.mxu0 %v708
    %1427 = vmatprep.subr.mxu0 %v717
    %1428 = vmatpush1.msra.mxu0 %v716
    %1429 = vmatprep.subr.mxu0 %v725
    %1430 = vmatpush1.msra.mxu0 %v724
    %1431 = vmatprep.subr.mxu0 %v733
    %1432 = vmatpush1.msra.mxu0 %v732
    %1433 = vmatprep.subr.mxu0 %v741
    %1434 = vmatpush1.msra.mxu0 %v740
    %1435 = vmatprep.subr.mxu0 %v749
    %1436 = vmatpush1.msra.mxu0 %v748
    %1437 = vmatprep.mubr.f32.mxu0 %v152
    %1438 = vmatmul.mubr.f32.gmra.mrb[0].mxu0 %v151
    %v1439 = vpop.f32.mrb[0].mxu0
    %v1440 = vadd.f32 %v1351, %v1439
    %v1441 = vpop.f32.mrb[0].mxu0
    %v1442 = vadd.f32 %v1353, %v1441
    %1443 = vmatprep.mubr.f32.mxu0 %v156
    %1444 = vmatmul.mubr.f32.gmra.mrb[0].mxu0 %v155
    %v1445 = vpop.f32.mrb[0].mxu0
    %v1446 = vadd.f32 %v1357, %v1445
    %v1447 = vpop.f32.mrb[0].mxu0
    %v1448 = vadd.f32 %v1359, %v1447
    %1449 = vmatprep.mubr.f32.mxu0 %v160
    %1450 = vmatmul.mubr.f32.gmra.mrb[0].mxu0 %v159
    %v1451 = vpop.f32.mrb[0].mxu0
    %v1452 = vadd.f32 %v1363, %v1451
    %v1453 = vpop.f32.mrb[0].mxu0
    %v1454 = vadd.f32 %v1365, %v1453
    %1455 = vmatprep.mubr.f32.mxu0 %v164
    %1456 = vmatmul.mubr.f32.gmra.mrb[0].mxu0 %v163
    %v1457 = vpop.f32.mrb[0].mxu0
    %v1458 = vadd.f32 %v1369, %v1457
    %v1459 = vpop.f32.mrb[0].mxu0
    %v1460 = vadd.f32 %v1371, %v1459
    %1461 = vdwg.mxu0
    %1462 = vst [vmem:[#allocation2 + $0x30] sm:$0xff] %v906
    %1463 = vst [vmem:[#allocation2 + $0x38] sm:$0xff] %v908
    %1464 = vst [vmem:[#allocation2 + $0x40] sm:$0xff] %v1084
    %1465 = vst [vmem:[#allocation2 + $0x48] sm:$0xff] %v1086
    %1466 = vst [vmem:[#allocation2 + $0x60] sm:$0xff] %v912
    %1467 = vst [vmem:[#allocation2 + $0x68] sm:$0xff] %v914
    %1468 = vst [vmem:[#allocation2 + $0x70] sm:$0xff] %v1090
    %1469 = vst [vmem:[#allocation2 + $0x78] sm:$0xff] %v1092
    %1470 = vst [vmem:[#allocation2 + $0x90] sm:$0xff] %v918
    %1471 = vst [vmem:[#allocation2 + $0x98] sm:$0xff] %v920
    %1472 = vst [vmem:[#allocation2 + $0xa0] sm:$0xff] %v1096
    %1473 = vst [vmem:[#allocation2 + $0xa8] sm:$0xff] %v1098
    %1474 = vst [vmem:[#allocation2 + $0xc0] sm:$0xff] %v924
    %1475 = vst [vmem:[#allocation2 + $0xc8] sm:$0xff] %v926
    %1476 = vst [vmem:[#allocation2 + $0xd0] sm:$0xff] %v1102
    %1477 = vst [vmem:[#allocation2 + $0xd8] sm:$0xff] %v1104
    %1478 = vst [vmem:[#allocation2 + $0x50] sm:$0xff] %v1440
    %1479 = vst [vmem:[#allocation2 + $0x58] sm:$0xff] %v1442
    %1480 = vst [vmem:[#allocation2 + $0x80] sm:$0xff] %v1446
    %1481 = vst [vmem:[#allocation2 + $0x88] sm:$0xff] %v1448
    %1482 = vst [vmem:[#allocation2 + $0xb0] sm:$0xff] %v1452
    %1483 = vst [vmem:[#allocation2 + $0xb8] sm:$0xff] %v1454
    %1484 = vst [vmem:[#allocation2 + $0xe0] sm:$0xff] %v1458
    %1485 = vst [vmem:[#allocation2 + $0xe8] sm:$0xff] %v1460
    %v1486 = vld [vmem:[#allocation2] sm:$0x80]
    %v1487 = vld [vmem:[#allocation2 + $0x8] sm:$0x80]
    %v1488 = vld [vmem:[#allocation2 + $0x30] sm:$0xff]
    %v1489 = vld [vmem:[#allocation2 + $0x38] sm:$0xff]
    %v1490 = vld [vmem:[#allocation2 + $0x60] sm:$0xff]
    %v1491 = vld [vmem:[#allocation2 + $0x68] sm:$0xff]
    %v1492 = vld [vmem:[#allocation2 + $0x90] sm:$0xff]
    %v1493 = vld [vmem:[#allocation2 + $0x98] sm:$0xff]
    %v1494 = vld [vmem:[#allocation2 + $0xc0] sm:$0x7f]
    %v1495 = vld [vmem:[#allocation2 + $0xc8] sm:$0x7f]
    %v1496 = vld [vmem:[#allocation2 + $0x40] sm:$0xfe]
    %v1497 = vld [vmem:[#allocation2 + $0x48] sm:$0xfe]
    %v1498 = vld [vmem:[#allocation2 + $0x70] sm:$0xff]
    %v1499 = vld [vmem:[#allocation2 + $0x78] sm:$0xff]
    %v1500 = vld [vmem:[#allocation2 + $0xa0] sm:$0xff]
    %v1501 = vld [vmem:[#allocation2 + $0xa8] sm:$0xff]
    %v1502 = vld [vmem:[#allocation2 + $0xd0] sm:$0xff]
    %v1503 = vld [vmem:[#allocation2 + $0xd8] sm:$0xff]
    %v1504 = vld [vmem:[#allocation2 + $0x100] sm:$0x1]
    %v1505 = vld [vmem:[#allocation2 + $0x108] sm:$0x1]
    %v1506 = vsel %vm218, 1, 0
    %v1507 = vsel %vm219, 1, 0
    %v1508 = vsel %vm220, 1, 0
    %v1509 = vsel %vm221, 1, 0
    %vm1510 = vcmp.eq.s32.totalorder %v1506, 1
    %vm1511 = vcmp.eq.s32.totalorder %v1507, 1
    %vm1512 = vcmp.eq.s32.totalorder %v1508, 1
    %vm1513 = vcmp.eq.s32.totalorder %v1509, 1
    %vm1524 = vcmask 1040384
    %v1525 = vrot.slane %v1486, 7
    %v1526 = vrot.slane %v1488, 7
    %v1527 = vsel %vm1524, %v1525, %v1526
    %v1528 = vrot.slane %v1487, 7
    %v1529 = vrot.slane %v1489, 7
    %v1530 = vsel %vm1524, %v1528, %v1529
    %v1531 = vrot.slane %v1490, 7
    %v1532 = vsel %vm1524, %v1526, %v1531
    %v1533 = vrot.slane %v1491, 7
    %v1534 = vsel %vm1524, %v1529, %v1533
    %v1535 = vrot.slane %v1492, 7
    %v1536 = vsel %vm1524, %v1531, %v1535
    %v1537 = vrot.slane %v1493, 7
    %v1538 = vsel %vm1524, %v1533, %v1537
    %v1539 = vrot.slane %v1494, 7
    %v1540 = vsel %vm1524, %v1535, %v1539
    %v1541 = vrot.slane %v1495, 7
    %v1542 = vsel %vm1524, %v1537, %v1541
    %v1551 = vsel %vm1510, %v1527, 0.0
    %v1552 = vsel %vm1510, %v1530, 0.0
    %v1553 = vsel %vm1511, %v1532, 0.0
    %v1554 = vsel %vm1511, %v1534, 0.0
    %v1555 = vsel %vm1512, %v1536, 0.0
    %v1556 = vsel %vm1512, %v1538, 0.0
    %v1557 = vsel %vm1513, %v1540, 0.0
    %v1558 = vsel %vm1513, %v1542, 0.0
    %v1559 = vadd.f32 %v1262, %v1551
    %v1560 = vadd.f32 %v1264, %v1552
    %v1561 = vadd.f32 %v1268, %v1553
    %v1562 = vadd.f32 %v1270, %v1554
    %v1563 = vadd.f32 %v1274, %v1555
    %v1564 = vadd.f32 %v1276, %v1556
    %v1565 = vadd.f32 %v1280, %v1557
    %v1566 = vadd.f32 %v1282, %v1558
    %v1567 = vsel %vm222, 1, 0
    %v1568 = vsel %vm223, 1, 0
    %v1569 = vsel %vm224, 1, 0
    %v1570 = vsel %vm225, 1, 0
    %vm1571 = vcmp.eq.s32.totalorder %v1567, 1
    %vm1572 = vcmp.eq.s32.totalorder %v1568, 1
    %vm1573 = vcmp.eq.s32.totalorder %v1569, 1
    %vm1574 = vcmp.eq.s32.totalorder %v1570, 1
    %vm1585 = vcmask 1046528
    %v1586 = vrot.slane %v1496, 1
    %v1587 = vrot.slane %v1498, 1
    %v1588 = vsel %vm1585, %v1586, %v1587
    %v1589 = vrot.slane %v1497, 1
    %v1590 = vrot.slane %v1499, 1
    %v1591 = vsel %vm1585, %v1589, %v1590
    %v1592 = vrot.slane %v1500, 1
    %v1593 = vsel %vm1585, %v1587, %v1592
    %v1594 = vrot.slane %v1501, 1
    %v1595 = vsel %vm1585, %v1590, %v1594
    %v1596 = vrot.slane %v1502, 1
    %v1597 = vsel %vm1585, %v1592, %v1596
    %v1598 = vrot.slane %v1503, 1
    %v1599 = vsel %vm1585, %v1594, %v1598
    %v1600 = vrot.slane %v1504, 1
    %v1601 = vsel %vm1585, %v1596, %v1600
    %v1602 = vrot.slane %v1505, 1
    %v1603 = vsel %vm1585, %v1598, %v1602
    %v1612 = vsel %vm1571, %v1588, 0.0
    %v1613 = vsel %vm1571, %v1591, 0.0
    %v1614 = vsel %vm1572, %v1593, 0.0
    %v1615 = vsel %vm1572, %v1595, 0.0
    %v1616 = vsel %vm1573, %v1597, 0.0
    %v1617 = vsel %vm1573, %v1599, 0.0
    %v1618 = vsel %vm1574, %v1601, 0.0
    %v1619 = vsel %vm1574, %v1603, 0.0
    %v1620 = vadd.f32 %v1559, %v1612
    %v1621 = vadd.f32 %v1560, %v1613
    %v1622 = vadd.f32 %v1561, %v1614
    %v1623 = vadd.f32 %v1562, %v1615
    %v1624 = vadd.f32 %v1563, %v1616
    %v1625 = vadd.f32 %v1564, %v1617
    %v1626 = vadd.f32 %v1565, %v1618
    %v1627 = vadd.f32 %v1566, %v1619
    %v1628 = vld [vmem:[#allocation8] sm:$0xff]
    %v1629 = vld [vmem:[#allocation8 + $0x8] sm:$0xff]
    %v1630 = vld [vmem:[#allocation8 + $0x10] sm:$0xff]
    %v1631 = vld [vmem:[#allocation8 + $0x18] sm:$0xff]
    %v1632 = vld [vmem:[#allocation8 + $0x20] sm:$0xff]
    %v1633 = vld [vmem:[#allocation8 + $0x28] sm:$0xff]
    %v1634 = vld [vmem:[#allocation8 + $0x30] sm:$0xff]
    %v1635 = vld [vmem:[#allocation8 + $0x38] sm:$0xff]
    %v1636 = vld [vmem:[#allocation8 + $0x40] sm:$0xff]
    %v1637 = vld [vmem:[#allocation8 + $0x48] sm:$0xff]
    %v1638 = vld [vmem:[#allocation8 + $0x50] sm:$0xff]
    %v1639 = vld [vmem:[#allocation8 + $0x58] sm:$0xff]
    %v1640 = vld [vmem:[#allocation8 + $0x60] sm:$0xff]
    %v1641 = vld [vmem:[#allocation8 + $0x68] sm:$0xff]
    %v1642 = vld [vmem:[#allocation8 + $0x70] sm:$0xff]
    %v1643 = vld [vmem:[#allocation8 + $0x78] sm:$0xff]
    %v1644 = vld [vmem:[#allocation8 + $0x80] sm:$0xff]
    %v1645 = vld [vmem:[#allocation8 + $0x88] sm:$0xff]
    %v1646 = vld [vmem:[#allocation8 + $0x90] sm:$0xff]
    %v1647 = vld [vmem:[#allocation8 + $0x98] sm:$0xff]
    %v1648 = vld [vmem:[#allocation8 + $0xa0] sm:$0xff]
    %v1649 = vld [vmem:[#allocation8 + $0xa8] sm:$0xff]
    %v1650 = vld [vmem:[#allocation8 + $0xb0] sm:$0xff]
    %v1651 = vld [vmem:[#allocation8 + $0xb8] sm:$0xff]
    %v1652 = vld [vmem:[#allocation8 + $0xc0] sm:$0xff]
    %v1653 = vld [vmem:[#allocation8 + $0xc8] sm:$0xff]
    %v1654 = vld [vmem:[#allocation8 + $0xd0] sm:$0xff]
    %v1655 = vld [vmem:[#allocation8 + $0xd8] sm:$0xff]
    %v1656 = vld [vmem:[#allocation8 + $0xe0] sm:$0xff]
    %v1657 = vld [vmem:[#allocation8 + $0xe8] sm:$0xff]
    %v1658 = vld [vmem:[#allocation8 + $0xf0] sm:$0xff]
    %v1659 = vld [vmem:[#allocation8 + $0xf8] sm:$0xff]
    %v1660 = vld [vmem:[#allocation8 + $0x100] sm:$0xff]
    %v1661 = vld [vmem:[#allocation8 + $0x108] sm:$0xff]
    %v1662 = vld [vmem:[#allocation8 + $0x110] sm:$0xff]
    %v1663 = vld [vmem:[#allocation8 + $0x118] sm:$0xff]
    %v1664 = vld [vmem:[#allocation8 + $0x120] sm:$0xff]
    %v1665 = vld [vmem:[#allocation8 + $0x128] sm:$0xff]
    %v1666 = vld [vmem:[#allocation8 + $0x130] sm:$0xff]
    %v1667 = vld [vmem:[#allocation8 + $0x138] sm:$0xff]
    %v1668 = vld [vmem:[#allocation8 + $0x140] sm:$0xff]
    %v1669 = vld [vmem:[#allocation8 + $0x148] sm:$0xff]
    %v1670 = vld [vmem:[#allocation8 + $0x150] sm:$0xff]
    %v1671 = vld [vmem:[#allocation8 + $0x158] sm:$0xff]
    %v1672 = vld [vmem:[#allocation8 + $0x160] sm:$0xff]
    %v1673 = vld [vmem:[#allocation8 + $0x168] sm:$0xff]
    %v1674 = vld [vmem:[#allocation8 + $0x170] sm:$0xff]
    %v1675 = vld [vmem:[#allocation8 + $0x178] sm:$0xff]
    %v1676 = vld [vmem:[#allocation8 + $0x180] sm:$0xff]
    %v1677 = vld [vmem:[#allocation8 + $0x188] sm:$0xff]
    %v1678 = vld [vmem:[#allocation8 + $0x190] sm:$0xff]
    %v1679 = vld [vmem:[#allocation8 + $0x198] sm:$0xff]
    %v1680 = vld [vmem:[#allocation8 + $0x1a0] sm:$0xff]
    %v1681 = vld [vmem:[#allocation8 + $0x1a8] sm:$0xff]
    %v1682 = vld [vmem:[#allocation8 + $0x1b0] sm:$0xff]
    %v1683 = vld [vmem:[#allocation8 + $0x1b8] sm:$0xff]
    %v1684 = vld [vmem:[#allocation8 + $0x1c0] sm:$0xff]
    %v1685 = vld [vmem:[#allocation8 + $0x1c8] sm:$0xff]
    %v1686 = vld [vmem:[#allocation8 + $0x1d0] sm:$0xff]
    %v1687 = vld [vmem:[#allocation8 + $0x1d8] sm:$0xff]
    %v1688 = vld [vmem:[#allocation8 + $0x1e0] sm:$0xff]
    %v1689 = vld [vmem:[#allocation8 + $0x1e8] sm:$0xff]
    %v1690 = vld [vmem:[#allocation8 + $0x1f0] sm:$0xff]
    %v1691 = vld [vmem:[#allocation8 + $0x1f8] sm:$0xff]
    %v1692 = vld [vmem:[#allocation8 + $0x200] sm:$0xff]
    %v1693 = vld [vmem:[#allocation8 + $0x208] sm:$0xff]
    %v1694 = vld [vmem:[#allocation8 + $0x210] sm:$0xff]
    %v1695 = vld [vmem:[#allocation8 + $0x218] sm:$0xff]
    %v1696 = vld [vmem:[#allocation8 + $0x220] sm:$0xff]
    %v1697 = vld [vmem:[#allocation8 + $0x228] sm:$0xff]
    %v1698 = vld [vmem:[#allocation8 + $0x230] sm:$0xff]
    %v1699 = vld [vmem:[#allocation8 + $0x238] sm:$0xff]
    %v1700 = vld [vmem:[#allocation8 + $0x240] sm:$0xff]
    %v1701 = vld [vmem:[#allocation8 + $0x248] sm:$0xff]
    %v1702 = vld [vmem:[#allocation8 + $0x250] sm:$0xff]
    %v1703 = vld [vmem:[#allocation8 + $0x258] sm:$0xff]
    %v1704 = vld [vmem:[#allocation8 + $0x260] sm:$0xff]
    %v1705 = vld [vmem:[#allocation8 + $0x268] sm:$0xff]
    %v1706 = vld [vmem:[#allocation8 + $0x270] sm:$0xff]
    %v1707 = vld [vmem:[#allocation8 + $0x278] sm:$0xff]
    %v1708 = vld [vmem:[#allocation8 + $0x280] sm:$0xff]
    %v1709 = vld [vmem:[#allocation8 + $0x288] sm:$0xff]
    %v1710 = vld [vmem:[#allocation8 + $0x290] sm:$0xff]
    %v1711 = vld [vmem:[#allocation8 + $0x298] sm:$0xff]
    %v1712 = vld [vmem:[#allocation8 + $0x2a0] sm:$0xff]
    %v1713 = vld [vmem:[#allocation8 + $0x2a8] sm:$0xff]
    %v1714 = vld [vmem:[#allocation8 + $0x2b0] sm:$0xff]
    %v1715 = vld [vmem:[#allocation8 + $0x2b8] sm:$0xff]
    %v1716 = vld [vmem:[#allocation8 + $0x2c0] sm:$0xff]
    %v1717 = vld [vmem:[#allocation8 + $0x2c8] sm:$0xff]
    %v1718 = vld [vmem:[#allocation8 + $0x2d0] sm:$0xff]
    %v1719 = vld [vmem:[#allocation8 + $0x2d8] sm:$0xff]
    %v1720 = vld [vmem:[#allocation8 + $0x2e0] sm:$0xff]
    %v1721 = vld [vmem:[#allocation8 + $0x2e8] sm:$0xff]
    %v1722 = vld [vmem:[#allocation8 + $0x2f0] sm:$0xff]
    %v1723 = vld [vmem:[#allocation8 + $0x2f8] sm:$0xff]
    %v1724 = vld [vmem:[#allocation8 + $0x300] sm:$0xff]
    %v1725 = vld [vmem:[#allocation8 + $0x308] sm:$0xff]
    %v1726 = vld [vmem:[#allocation8 + $0x310] sm:$0xff]
    %v1727 = vld [vmem:[#allocation8 + $0x318] sm:$0xff]
    %v1728 = vld [vmem:[#allocation8 + $0x320] sm:$0xff]
    %v1729 = vld [vmem:[#allocation8 + $0x328] sm:$0xff]
    %v1730 = vld [vmem:[#allocation8 + $0x330] sm:$0xff]
    %v1731 = vld [vmem:[#allocation8 + $0x338] sm:$0xff]
    %v1732 = vld [vmem:[#allocation8 + $0x340] sm:$0xff]
    %v1733 = vld [vmem:[#allocation8 + $0x348] sm:$0xff]
    %v1734 = vld [vmem:[#allocation8 + $0x350] sm:$0xff]
    %v1735 = vld [vmem:[#allocation8 + $0x358] sm:$0xff]
    %v1736 = vld [vmem:[#allocation8 + $0x360] sm:$0xff]
    %v1737 = vld [vmem:[#allocation8 + $0x368] sm:$0xff]
    %v1738 = vld [vmem:[#allocation8 + $0x370] sm:$0xff]
    %v1739 = vld [vmem:[#allocation8 + $0x378] sm:$0xff]
    %v1740 = vld [vmem:[#allocation8 + $0x380] sm:$0xff]
    %v1741 = vld [vmem:[#allocation8 + $0x388] sm:$0xff]
    %v1742 = vld [vmem:[#allocation8 + $0x390] sm:$0xff]
    %v1743 = vld [vmem:[#allocation8 + $0x398] sm:$0xff]
    %v1744 = vld [vmem:[#allocation8 + $0x3a0] sm:$0xff]
    %v1745 = vld [vmem:[#allocation8 + $0x3a8] sm:$0xff]
    %v1746 = vld [vmem:[#allocation8 + $0x3b0] sm:$0xff]
    %v1747 = vld [vmem:[#allocation8 + $0x3b8] sm:$0xff]
    %v1748 = vld [vmem:[#allocation8 + $0x3c0] sm:$0xff]
    %v1749 = vld [vmem:[#allocation8 + $0x3c8] sm:$0xff]
    %v1750 = vld [vmem:[#allocation8 + $0x3d0] sm:$0xff]
    %v1751 = vld [vmem:[#allocation8 + $0x3d8] sm:$0xff]
    %v1752 = vld [vmem:[#allocation8 + $0x3e0] sm:$0xff]
    %v1753 = vld [vmem:[#allocation8 + $0x3e8] sm:$0xff]
    %v1754 = vld [vmem:[#allocation8 + $0x3f0] sm:$0xff]
    %v1755 = vld [vmem:[#allocation8 + $0x3f8] sm:$0xff]
    %v1756 = vld [vmem:[#allocation8 + $0x400] sm:$0xff]
    %v1757 = vld [vmem:[#allocation8 + $0x408] sm:$0xff]
    %v1758 = vld [vmem:[#allocation8 + $0x410] sm:$0xff]
    %v1759 = vld [vmem:[#allocation8 + $0x418] sm:$0xff]
    %v1760 = vld [vmem:[#allocation8 + $0x420] sm:$0xff]
    %v1761 = vld [vmem:[#allocation8 + $0x428] sm:$0xff]
    %v1762 = vld [vmem:[#allocation8 + $0x430] sm:$0xff]
    %v1763 = vld [vmem:[#allocation8 + $0x438] sm:$0xff]
    %v1764 = vld [vmem:[#allocation8 + $0x440] sm:$0xff]
    %v1765 = vld [vmem:[#allocation8 + $0x448] sm:$0xff]
    %v1766 = vld [vmem:[#allocation8 + $0x450] sm:$0xff]
    %v1767 = vld [vmem:[#allocation8 + $0x458] sm:$0xff]
    %v1768 = vld [vmem:[#allocation8 + $0x460] sm:$0xff]
    %v1769 = vld [vmem:[#allocation8 + $0x468] sm:$0xff]
    %v1770 = vld [vmem:[#allocation8 + $0x470] sm:$0xff]
    %v1771 = vld [vmem:[#allocation8 + $0x478] sm:$0xff]
    %v1772 = vld [vmem:[#allocation8 + $0x480] sm:$0xff]
    %v1773 = vld [vmem:[#allocation8 + $0x488] sm:$0xff]
    %v1774 = vld [vmem:[#allocation8 + $0x490] sm:$0xff]
    %v1775 = vld [vmem:[#allocation8 + $0x498] sm:$0xff]
    %v1776 = vld [vmem:[#allocation8 + $0x4a0] sm:$0xff]
    %v1777 = vld [vmem:[#allocation8 + $0x4a8] sm:$0xff]
    %v1778 = vld [vmem:[#allocation8 + $0x4b0] sm:$0xff]
    %v1779 = vld [vmem:[#allocation8 + $0x4b8] sm:$0xff]
    %v1780 = vld [vmem:[#allocation8 + $0x4c0] sm:$0xff]
    %v1781 = vld [vmem:[#allocation8 + $0x4c8] sm:$0xff]
    %v1782 = vld [vmem:[#allocation8 + $0x4d0] sm:$0xff]
    %v1783 = vld [vmem:[#allocation8 + $0x4d8] sm:$0xff]
    %v1784 = vld [vmem:[#allocation8 + $0x4e0] sm:$0xff]
    %v1785 = vld [vmem:[#allocation8 + $0x4e8] sm:$0xff]
    %v1786 = vld [vmem:[#allocation8 + $0x4f0] sm:$0xff]
    %v1787 = vld [vmem:[#allocation8 + $0x4f8] sm:$0xff]
    %v1788 = vld [vmem:[#allocation8 + $0x500] sm:$0xff]
    %v1789 = vld [vmem:[#allocation8 + $0x508] sm:$0xff]
    %v1790 = vld [vmem:[#allocation8 + $0x510] sm:$0xff]
    %v1791 = vld [vmem:[#allocation8 + $0x518] sm:$0xff]
    %v1792 = vld [vmem:[#allocation8 + $0x520] sm:$0xff]
    %v1793 = vld [vmem:[#allocation8 + $0x528] sm:$0xff]
    %v1794 = vld [vmem:[#allocation8 + $0x530] sm:$0xff]
    %v1795 = vld [vmem:[#allocation8 + $0x538] sm:$0xff]
    %v1796 = vld [vmem:[#allocation8 + $0x540] sm:$0xff]
    %v1797 = vld [vmem:[#allocation8 + $0x548] sm:$0xff]
    %v1798 = vld [vmem:[#allocation8 + $0x550] sm:$0xff]
    %v1799 = vld [vmem:[#allocation8 + $0x558] sm:$0xff]
    %v1800 = vld [vmem:[#allocation8 + $0x560] sm:$0xff]
    %v1801 = vld [vmem:[#allocation8 + $0x568] sm:$0xff]
    %v1802 = vld [vmem:[#allocation8 + $0x570] sm:$0xff]
    %v1803 = vld [vmem:[#allocation8 + $0x578] sm:$0xff]
    %v1804 = vld [vmem:[#allocation8 + $0x580] sm:$0xff]
    %v1805 = vld [vmem:[#allocation8 + $0x588] sm:$0xff]
    %v1806 = vld [vmem:[#allocation8 + $0x590] sm:$0xff]
    %v1807 = vld [vmem:[#allocation8 + $0x598] sm:$0xff]
    %v1808 = vld [vmem:[#allocation8 + $0x5a0] sm:$0xff]
    %v1809 = vld [vmem:[#allocation8 + $0x5a8] sm:$0xff]
    %v1810 = vld [vmem:[#allocation8 + $0x5b0] sm:$0xff]
    %v1811 = vld [vmem:[#allocation8 + $0x5b8] sm:$0xff]
    %v1812 = vld [vmem:[#allocation8 + $0x5c0] sm:$0xff]
    %v1813 = vld [vmem:[#allocation8 + $0x5c8] sm:$0xff]
    %v1814 = vld [vmem:[#allocation8 + $0x5d0] sm:$0xff]
    %v1815 = vld [vmem:[#allocation8 + $0x5d8] sm:$0xff]
    %v1816 = vld [vmem:[#allocation8 + $0x5e0] sm:$0xff]
    %v1817 = vld [vmem:[#allocation8 + $0x5e8] sm:$0xff]
    %v1818 = vld [vmem:[#allocation8 + $0x5f0] sm:$0xff]
    %v1819 = vld [vmem:[#allocation8 + $0x5f8] sm:$0xff]
    %1820 = vmatprep.subr.mxu0 %v1629
    %1821 = vmatpush1.msra.mxu0 %v1628
    %1822 = vmatprep.subr.mxu0 %v1635
    %1823 = vmatpush1.msra.mxu0 %v1634
    %1824 = vmatprep.subr.mxu0 %v1641
    %1825 = vmatpush1.msra.mxu0 %v1640
    %1826 = vmatprep.subr.mxu0 %v1647
    %1827 = vmatpush1.msra.mxu0 %v1646
    %1828 = vmatprep.subr.mxu0 %v1653
    %1829 = vmatpush1.msra.mxu0 %v1652
    %1830 = vmatprep.subr.mxu0 %v1659
    %1831 = vmatpush1.msra.mxu0 %v1658
    %1832 = vmatprep.subr.mxu0 %v1665
    %1833 = vmatpush1.msra.mxu0 %v1664
    %1834 = vmatprep.subr.mxu0 %v1671
    %1835 = vmatpush1.msra.mxu0 %v1670
    %1836 = vmatprep.subr.mxu0 %v1677
    %1837 = vmatpush1.msra.mxu0 %v1676
    %1838 = vmatprep.subr.mxu0 %v1683
    %1839 = vmatpush1.msra.mxu0 %v1682
    %1840 = vmatprep.subr.mxu0 %v1689
    %1841 = vmatpush1.msra.mxu0 %v1688
    %1842 = vmatprep.subr.mxu0 %v1695
    %1843 = vmatpush1.msra.mxu0 %v1694
    %1844 = vmatprep.subr.mxu0 %v1701
    %1845 = vmatpush1.msra.mxu0 %v1700
    %1846 = vmatprep.subr.mxu0 %v1707
    %1847 = vmatpush1.msra.mxu0 %v1706
    %1848 = vmatprep.subr.mxu0 %v1713
    %1849 = vmatpush1.msra.mxu0 %v1712
    %1850 = vmatprep.subr.mxu0 %v1719
    %1851 = vmatpush1.msra.mxu0 %v1718
    %1852 = vmatprep.subr.mxu0 %v1725
    %1853 = vmatpush1.msra.mxu0 %v1724
    %1854 = vmatprep.subr.mxu0 %v1731
    %1855 = vmatpush1.msra.mxu0 %v1730
    %1856 = vmatprep.subr.mxu0 %v1737
    %1857 = vmatpush1.msra.mxu0 %v1736
    %1858 = vmatprep.subr.mxu0 %v1743
    %1859 = vmatpush1.msra.mxu0 %v1742
    %1860 = vmatprep.subr.mxu0 %v1749
    %1861 = vmatpush1.msra.mxu0 %v1748
    %1862 = vmatprep.subr.mxu0 %v1755
    %1863 = vmatpush1.msra.mxu0 %v1754
    %1864 = vmatprep.subr.mxu0 %v1761
    %1865 = vmatpush1.msra.mxu0 %v1760
    %1866 = vmatprep.subr.mxu0 %v1767
    %1867 = vmatpush1.msra.mxu0 %v1766
    %1868 = vmatprep.subr.mxu0 %v1773
    %1869 = vmatpush1.msra.mxu0 %v1772
    %1870 = vmatprep.subr.mxu0 %v1779
    %1871 = vmatpush1.msra.mxu0 %v1778
    %1872 = vmatprep.subr.mxu0 %v1785
    %1873 = vmatpush1.msra.mxu0 %v1784
    %1874 = vmatprep.subr.mxu0 %v1791
    %1875 = vmatpush1.msra.mxu0 %v1790
    %1876 = vmatprep.subr.mxu0 %v1797
    %1877 = vmatpush1.msra.mxu0 %v1796
    %1878 = vmatprep.subr.mxu0 %v1803
    %1879 = vmatpush1.msra.mxu0 %v1802
    %1880 = vmatprep.subr.mxu0 %v1809
    %1881 = vmatpush1.msra.mxu0 %v1808
    %1882 = vmatprep.subr.mxu0 %v1815
    %1883 = vmatpush1.msra.mxu0 %v1814
    %1884 = vmatprep.mubr.f32.mxu0 %v1621
    %1885 = vmatmul.mubr.f32.gmra.mrb[0].mxu0 %v1620
    %v1886 = vpop.f32.mrb[0].mxu0
    %v1887 = vadd.f32 0.0, %v1886
    %v1888 = vpop.f32.mrb[0].mxu0
    %v1889 = vadd.f32 0.0, %v1888
    %1890 = vmatprep.mubr.f32.mxu0 %v1623
    %1891 = vmatmul.mubr.f32.gmra.mrb[0].mxu0 %v1622
    %v1892 = vpop.f32.mrb[0].mxu0
    %v1893 = vadd.f32 0.0, %v1892
    %v1894 = vpop.f32.mrb[0].mxu0
    %v1895 = vadd.f32 0.0, %v1894
    %1896 = vmatprep.mubr.f32.mxu0 %v1625
    %1897 = vmatmul.mubr.f32.gmra.mrb[0].mxu0 %v1624
    %v1898 = vpop.f32.mrb[0].mxu0
    %v1899 = vadd.f32 0.0, %v1898
    %v1900 = vpop.f32.mrb[0].mxu0
    %v1901 = vadd.f32 0.0, %v1900
    %1902 = vmatprep.mubr.f32.mxu0 %v1627
    %1903 = vmatmul.mubr.f32.gmra.mrb[0].mxu0 %v1626
    %v1904 = vpop.f32.mrb[0].mxu0
    %v1905 = vadd.f32 0.0, %v1904
    %v1906 = vpop.f32.mrb[0].mxu0
    %v1907 = vadd.f32 0.0, %v1906
    %1908 = vdwg.mxu0
    %1909 = vmatprep.subr.mxu0 %v1631
    %1910 = vmatpush1.msra.mxu0 %v1630
    %1911 = vmatprep.subr.mxu0 %v1637
    %1912 = vmatpush1.msra.mxu0 %v1636
    %1913 = vmatprep.subr.mxu0 %v1643
    %1914 = vmatpush1.msra.mxu0 %v1642
    %1915 = vmatprep.subr.mxu0 %v1649
    %1916 = vmatpush1.msra.mxu0 %v1648
    %1917 = vmatprep.subr.mxu0 %v1655
    %1918 = vmatpush1.msra.mxu0 %v1654
    %1919 = vmatprep.subr.mxu0 %v1661
    %1920 = vmatpush1.msra.mxu0 %v1660
    %1921 = vmatprep.subr.mxu0 %v1667
    %1922 = vmatpush1.msra.mxu0 %v1666
    %1923 = vmatprep.subr.mxu0 %v1673
    %1924 = vmatpush1.msra.mxu0 %v1672
    %1925 = vmatprep.subr.mxu0 %v1679
    %1926 = vmatpush1.msra.mxu0 %v1678
    %1927 = vmatprep.subr.mxu0 %v1685
    %1928 = vmatpush1.msra.mxu0 %v1684
    %1929 = vmatprep.subr.mxu0 %v1691
    %1930 = vmatpush1.msra.mxu0 %v1690
    %1931 = vmatprep.subr.mxu0 %v1697
    %1932 = vmatpush1.msra.mxu0 %v1696
    %1933 = vmatprep.subr.mxu0 %v1703
    %1934 = vmatpush1.msra.mxu0 %v1702
    %1935 = vmatprep.subr.mxu0 %v1709
    %1936 = vmatpush1.msra.mxu0 %v1708
    %1937 = vmatprep.subr.mxu0 %v1715
    %1938 = vmatpush1.msra.mxu0 %v1714
    %1939 = vmatprep.subr.mxu0 %v1721
    %1940 = vmatpush1.msra.mxu0 %v1720
    %1941 = vmatprep.subr.mxu0 %v1727
    %1942 = vmatpush1.msra.mxu0 %v1726
    %1943 = vmatprep.subr.mxu0 %v1733
    %1944 = vmatpush1.msra.mxu0 %v1732
    %1945 = vmatprep.subr.mxu0 %v1739
    %1946 = vmatpush1.msra.mxu0 %v1738
    %1947 = vmatprep.subr.mxu0 %v1745
    %1948 = vmatpush1.msra.mxu0 %v1744
    %1949 = vmatprep.subr.mxu0 %v1751
    %1950 = vmatpush1.msra.mxu0 %v1750
    %1951 = vmatprep.subr.mxu0 %v1757
    %1952 = vmatpush1.msra.mxu0 %v1756
    %1953 = vmatprep.subr.mxu0 %v1763
    %1954 = vmatpush1.msra.mxu0 %v1762
    %1955 = vmatprep.subr.mxu0 %v1769
    %1956 = vmatpush1.msra.mxu0 %v1768
    %1957 = vmatprep.subr.mxu0 %v1775
    %1958 = vmatpush1.msra.mxu0 %v1774
    %1959 = vmatprep.subr.mxu0 %v1781
    %1960 = vmatpush1.msra.mxu0 %v1780
    %1961 = vmatprep.subr.mxu0 %v1787
    %1962 = vmatpush1.msra.mxu0 %v1786
    %1963 = vmatprep.subr.mxu0 %v1793
    %1964 = vmatpush1.msra.mxu0 %v1792
    %1965 = vmatprep.subr.mxu0 %v1799
    %1966 = vmatpush1.msra.mxu0 %v1798
    %1967 = vmatprep.subr.mxu0 %v1805
    %1968 = vmatpush1.msra.mxu0 %v1804
    %1969 = vmatprep.subr.mxu0 %v1811
    %1970 = vmatpush1.msra.mxu0 %v1810
    %1971 = vmatprep.subr.mxu0 %v1817
    %1972 = vmatpush1.msra.mxu0 %v1816
    %1973 = vmatprep.mubr.f32.mxu0 %v1621
    %1974 = vmatmul.mubr.f32.gmra.mrb[0].mxu0 %v1620
    %v1975 = vpop.f32.mrb[0].mxu0
    %v1976 = vadd.f32 0.0, %v1975
    %v1977 = vpop.f32.mrb[0].mxu0
    %v1978 = vadd.f32 0.0, %v1977
    %1979 = vmatprep.mubr.f32.mxu0 %v1623
    %1980 = vmatmul.mubr.f32.gmra.mrb[0].mxu0 %v1622
    %v1981 = vpop.f32.mrb[0].mxu0
    %v1982 = vadd.f32 0.0, %v1981
    %v1983 = vpop.f32.mrb[0].mxu0
    %v1984 = vadd.f32 0.0, %v1983
    %1985 = vmatprep.mubr.f32.mxu0 %v1625
    %1986 = vmatmul.mubr.f32.gmra.mrb[0].mxu0 %v1624
    %v1987 = vpop.f32.mrb[0].mxu0
    %v1988 = vadd.f32 0.0, %v1987
    %v1989 = vpop.f32.mrb[0].mxu0
    %v1990 = vadd.f32 0.0, %v1989
    %1991 = vmatprep.mubr.f32.mxu0 %v1627
    %1992 = vmatmul.mubr.f32.gmra.mrb[0].mxu0 %v1626
    %v1993 = vpop.f32.mrb[0].mxu0
    %v1994 = vadd.f32 0.0, %v1993
    %v1995 = vpop.f32.mrb[0].mxu0
    %v1996 = vadd.f32 0.0, %v1995
    %1997 = vdwg.mxu0
    %1998 = vmatprep.subr.mxu0 %v1633
    %1999 = vmatpush1.msra.mxu0 %v1632
    %2000 = vmatprep.subr.mxu0 %v1639
    %2001 = vmatpush1.msra.mxu0 %v1638
    %2002 = vmatprep.subr.mxu0 %v1645
    %2003 = vmatpush1.msra.mxu0 %v1644
    %2004 = vmatprep.subr.mxu0 %v1651
    %2005 = vmatpush1.msra.mxu0 %v1650
    %2006 = vmatprep.subr.mxu0 %v1657
    %2007 = vmatpush1.msra.mxu0 %v1656
    %2008 = vmatprep.subr.mxu0 %v1663
    %2009 = vmatpush1.msra.mxu0 %v1662
    %2010 = vmatprep.subr.mxu0 %v1669
    %2011 = vmatpush1.msra.mxu0 %v1668
    %2012 = vmatprep.subr.mxu0 %v1675
    %2013 = vmatpush1.msra.mxu0 %v1674
    %2014 = vmatprep.subr.mxu0 %v1681
    %2015 = vmatpush1.msra.mxu0 %v1680
    %2016 = vmatprep.subr.mxu0 %v1687
    %2017 = vmatpush1.msra.mxu0 %v1686
    %2018 = vmatprep.subr.mxu0 %v1693
    %2019 = vmatpush1.msra.mxu0 %v1692
    %2020 = vmatprep.subr.mxu0 %v1699
    %2021 = vmatpush1.msra.mxu0 %v1698
    %2022 = vmatprep.subr.mxu0 %v1705
    %2023 = vmatpush1.msra.mxu0 %v1704
    %2024 = vmatprep.subr.mxu0 %v1711
    %2025 = vmatpush1.msra.mxu0 %v1710
    %2026 = vmatprep.subr.mxu0 %v1717
    %2027 = vmatpush1.msra.mxu0 %v1716
    %2028 = vmatprep.subr.mxu0 %v1723
    %2029 = vmatpush1.msra.mxu0 %v1722
    %2030 = vmatprep.subr.mxu0 %v1729
    %2031 = vmatpush1.msra.mxu0 %v1728
    %2032 = vmatprep.subr.mxu0 %v1735
    %2033 = vmatpush1.msra.mxu0 %v1734
    %2034 = vmatprep.subr.mxu0 %v1741
    %2035 = vmatpush1.msra.mxu0 %v1740
    %2036 = vmatprep.subr.mxu0 %v1747
    %2037 = vmatpush1.msra.mxu0 %v1746
    %2038 = vmatprep.subr.mxu0 %v1753
    %2039 = vmatpush1.msra.mxu0 %v1752
    %2040 = vmatprep.subr.mxu0 %v1759
    %2041 = vmatpush1.msra.mxu0 %v1758
    %2042 = vmatprep.subr.mxu0 %v1765
    %2043 = vmatpush1.msra.mxu0 %v1764
    %2044 = vmatprep.subr.mxu0 %v1771
    %2045 = vmatpush1.msra.mxu0 %v1770
    %2046 = vmatprep.subr.mxu0 %v1777
    %2047 = vmatpush1.msra.mxu0 %v1776
    %2048 = vmatprep.subr.mxu0 %v1783
    %2049 = vmatpush1.msra.mxu0 %v1782
    %2050 = vmatprep.subr.mxu0 %v1789
    %2051 = vmatpush1.msra.mxu0 %v1788
    %2052 = vmatprep.subr.mxu0 %v1795
    %2053 = vmatpush1.msra.mxu0 %v1794
    %2054 = vmatprep.subr.mxu0 %v1801
    %2055 = vmatpush1.msra.mxu0 %v1800
    %2056 = vmatprep.subr.mxu0 %v1807
    %2057 = vmatpush1.msra.mxu0 %v1806
    %2058 = vmatprep.subr.mxu0 %v1813
    %2059 = vmatpush1.msra.mxu0 %v1812
    %2060 = vmatprep.subr.mxu0 %v1819
    %2061 = vmatpush1.msra.mxu0 %v1818
    %2062 = vmatprep.mubr.f32.mxu0 %v1621
    %2063 = vmatmul.mubr.f32.gmra.mrb[0].mxu0 %v1620
    %v2064 = vpop.f32.mrb[0].mxu0
    %v2065 = vadd.f32 0.0, %v2064
    %v2066 = vpop.f32.mrb[0].mxu0
    %v2067 = vadd.f32 0.0, %v2066
    %2068 = vmatprep.mubr.f32.mxu0 %v1623
    %2069 = vmatmul.mubr.f32.gmra.mrb[0].mxu0 %v1622
    %v2070 = vpop.f32.mrb[0].mxu0
    %v2071 = vadd.f32 0.0, %v2070
    %v2072 = vpop.f32.mrb[0].mxu0
    %v2073 = vadd.f32 0.0, %v2072
    %2074 = vmatprep.mubr.f32.mxu0 %v1625
    %2075 = vmatmul.mubr.f32.gmra.mrb[0].mxu0 %v1624
    %v2076 = vpop.f32.mrb[0].mxu0
    %v2077 = vadd.f32 0.0, %v2076
    %v2078 = vpop.f32.mrb[0].mxu0
    %v2079 = vadd.f32 0.0, %v2078
    %2080 = vmatprep.mubr.f32.mxu0 %v1627
    %2081 = vmatmul.mubr.f32.gmra.mrb[0].mxu0 %v1626
    %v2082 = vpop.f32.mrb[0].mxu0
    %v2083 = vadd.f32 0.0, %v2082
    %v2084 = vpop.f32.mrb[0].mxu0
    %v2085 = vadd.f32 0.0, %v2084
    %2086 = vdwg.mxu0
    %2087 = vst [vmem:[#allocation2 + $0x30] sm:$0xff] %v1887
    %2088 = vst [vmem:[#allocation2 + $0x38] sm:$0xff] %v1889
    %2089 = vst [vmem:[#allocation2 + $0x40] sm:$0xff] %v1976
    %2090 = vst [vmem:[#allocation2 + $0x48] sm:$0xff] %v1978
    %2091 = vst [vmem:[#allocation2 + $0x60] sm:$0xff] %v1893
    %2092 = vst [vmem:[#allocation2 + $0x68] sm:$0xff] %v1895
    %2093 = vst [vmem:[#allocation2 + $0x70] sm:$0xff] %v1982
    %2094 = vst [vmem:[#allocation2 + $0x78] sm:$0xff] %v1984
    %2095 = vst [vmem:[#allocation2 + $0x90] sm:$0xff] %v1899
    %2096 = vst [vmem:[#allocation2 + $0x98] sm:$0xff] %v1901
    %2097 = vst [vmem:[#allocation2 + $0xa0] sm:$0xff] %v1988
    %2098 = vst [vmem:[#allocation2 + $0xa8] sm:$0xff] %v1990
    %2099 = vst [vmem:[#allocation2 + $0xc0] sm:$0xff] %v1905
    %2100 = vst [vmem:[#allocation2 + $0xc8] sm:$0xff] %v1907
    %2101 = vst [vmem:[#allocation2 + $0xd0] sm:$0xff] %v1994
    %2102 = vst [vmem:[#allocation2 + $0xd8] sm:$0xff] %v1996
    %v2103 = vld [vmem:[#allocation2] sm:$0x80]
    %v2104 = vld [vmem:[#allocation2 + $0x8] sm:$0x80]
    %v2105 = vld [vmem:[#allocation2 + $0x30] sm:$0xff]
    %v2106 = vld [vmem:[#allocation2 + $0x38] sm:$0xff]
    %v2107 = vld [vmem:[#allocation2 + $0x60] sm:$0xff]
    %v2108 = vld [vmem:[#allocation2 + $0x68] sm:$0xff]
    %v2109 = vld [vmem:[#allocation2 + $0x90] sm:$0xff]
    %v2110 = vld [vmem:[#allocation2 + $0x98] sm:$0xff]
    %v2111 = vld [vmem:[#allocation2 + $0xc0] sm:$0x7f]
    %v2112 = vld [vmem:[#allocation2 + $0xc8] sm:$0x7f]
    %v2113 = vld [vmem:[#allocation2 + $0x40] sm:$0xfe]
    %v2114 = vld [vmem:[#allocation2 + $0x48] sm:$0xfe]
    %v2115 = vld [vmem:[#allocation2 + $0x70] sm:$0xff]
    %v2116 = vld [vmem:[#allocation2 + $0x78] sm:$0xff]
    %v2117 = vld [vmem:[#allocation2 + $0xa0] sm:$0xff]
    %v2118 = vld [vmem:[#allocation2 + $0xa8] sm:$0xff]
    %v2119 = vld [vmem:[#allocation2 + $0xd0] sm:$0xff]
    %v2120 = vld [vmem:[#allocation2 + $0xd8] sm:$0xff]
    %v2121 = vld [vmem:[#allocation2 + $0x100] sm:$0x1]
    %v2122 = vld [vmem:[#allocation2 + $0x108] sm:$0x1]
    %v2133 = vrot.slane %v2103, 7
    %v2134 = vrot.slane %v2105, 7
    %v2135 = vsel %vm1524, %v2133, %v2134
    %v2136 = vrot.slane %v2104, 7
    %v2137 = vrot.slane %v2106, 7
    %v2138 = vsel %vm1524, %v2136, %v2137
    %v2139 = vrot.slane %v2107, 7
    %v2140 = vsel %vm1524, %v2134, %v2139
    %v2141 = vrot.slane %v2108, 7
    %v2142 = vsel %vm1524, %v2137, %v2141
    %v2143 = vrot.slane %v2109, 7
    %v2144 = vsel %vm1524, %v2139, %v2143
    %v2145 = vrot.slane %v2110, 7
    %v2146 = vsel %vm1524, %v2141, %v2145
    %v2147 = vrot.slane %v2111, 7
    %v2148 = vsel %vm1524, %v2143, %v2147
    %v2149 = vrot.slane %v2112, 7
    %v2150 = vsel %vm1524, %v2145, %v2149
    %v2159 = vsel %vm1510, %v2135, 0.0
    %v2160 = vsel %vm1510, %v2138, 0.0
    %v2161 = vsel %vm1511, %v2140, 0.0
    %v2162 = vsel %vm1511, %v2142, 0.0
    %v2163 = vsel %vm1512, %v2144, 0.0
    %v2164 = vsel %vm1512, %v2146, 0.0
    %v2165 = vsel %vm1513, %v2148, 0.0
    %v2166 = vsel %vm1513, %v2150, 0.0
    %v2167 = vadd.f32 %v2065, %v2159
    %v2168 = vadd.f32 %v2067, %v2160
    %v2169 = vadd.f32 %v2071, %v2161
    %v2170 = vadd.f32 %v2073, %v2162
    %v2171 = vadd.f32 %v2077, %v2163
    %v2172 = vadd.f32 %v2079, %v2164
    %v2173 = vadd.f32 %v2083, %v2165
    %v2174 = vadd.f32 %v2085, %v2166
    %v2185 = vrot.slane %v2113, 1
    %v2186 = vrot.slane %v2115, 1
    %v2187 = vsel %vm1585, %v2185, %v2186
    %v2188 = vrot.slane %v2114, 1
    %v2189 = vrot.slane %v2116, 1
    %v2190 = vsel %vm1585, %v2188, %v2189
    %v2191 = vrot.slane %v2117, 1
    %v2192 = vsel %vm1585, %v2186, %v2191
    %v2193 = vrot.slane %v2118, 1
    %v2194 = vsel %vm1585, %v2189, %v2193
    %v2195 = vrot.slane %v2119, 1
    %v2196 = vsel %vm1585, %v2191, %v2195
    %v2197 = vrot.slane %v2120, 1
    %v2198 = vsel %vm1585, %v2193, %v2197
    %v2199 = vrot.slane %v2121, 1
    %v2200 = vsel %vm1585, %v2195, %v2199
    %v2201 = vrot.slane %v2122, 1
    %v2202 = vsel %vm1585, %v2197, %v2201
    %v2211 = vsel %vm1571, %v2187, 0.0
    %v2212 = vsel %vm1571, %v2190, 0.0
    %v2213 = vsel %vm1572, %v2192, 0.0
    %v2214 = vsel %vm1572, %v2194, 0.0
    %v2215 = vsel %vm1573, %v2196, 0.0
    %v2216 = vsel %vm1573, %v2198, 0.0
    %v2217 = vsel %vm1574, %v2200, 0.0
    %v2218 = vsel %vm1574, %v2202, 0.0
    %v2219 = vadd.f32 %v2167, %v2211
    %v2220 = vadd.f32 %v2168, %v2212
    %v2221 = vadd.f32 %v2169, %v2213
    %v2222 = vadd.f32 %v2170, %v2214
    %v2223 = vadd.f32 %v2171, %v2215
    %v2224 = vadd.f32 %v2172, %v2216
    %v2225 = vadd.f32 %v2173, %v2217
    %v2226 = vadd.f32 %v2174, %v2218
    %v2227 = vld [vmem:[#allocation9] sm:$0x3]
    %v2229 = vlaneseq
    %v2230 = vshrl.u32 %v2229, 7
    %v2231 = vsub.s32 0, %v2230
    %v2232 = vrot.slane %v2227, %v2231
    %v2233 = vlaneseq
    %v2234 = vshrl.u32 %v2233, 7
    %v2235 = vsub.s32 1, %v2234
    %v2236 = vrot.slane %v2227, %v2235
    %v2239 = vadd.f32 %v2219, %v2232
    %v2240 = vadd.f32 %v2220, %v2236
    %v2241 = vadd.f32 %v2221, %v2232
    %v2242 = vadd.f32 %v2222, %v2236
    %v2243 = vadd.f32 %v2223, %v2232
    %v2244 = vadd.f32 %v2224, %v2236
    %v2245 = vadd.f32 %v2225, %v2232
    %v2246 = vadd.f32 %v2226, %v2236
    %v2247 = vld [vmem:[#allocation11] sm:$0xff]
    %v2248 = vld [vmem:[#allocation11 + $0x8] sm:$0xff]
    %v2249 = vld [vmem:[#allocation11 + $0x10] sm:$0xff]
    %v2250 = vld [vmem:[#allocation11 + $0x18] sm:$0xff]
    %v2251 = vld [vmem:[#allocation11 + $0x20] sm:$0xff]
    %v2252 = vld [vmem:[#allocation11 + $0x28] sm:$0xff]
    %v2253 = vld [vmem:[#allocation11 + $0x30] sm:$0xff]
    %v2254 = vld [vmem:[#allocation11 + $0x38] sm:$0xff]
    %v2255 = vld [vmem:[#allocation11 + $0x40] sm:$0xff]
    %v2256 = vld [vmem:[#allocation11 + $0x48] sm:$0xff]
    %v2257 = vld [vmem:[#allocation11 + $0x50] sm:$0xff]
    %v2258 = vld [vmem:[#allocation11 + $0x58] sm:$0xff]
    %v2259 = vld [vmem:[#allocation11 + $0x60] sm:$0xff]
    %v2260 = vld [vmem:[#allocation11 + $0x68] sm:$0xff]
    %v2261 = vld [vmem:[#allocation11 + $0x70] sm:$0xff]
    %v2262 = vld [vmem:[#allocation11 + $0x78] sm:$0xff]
    %v2263 = vld [vmem:[#allocation11 + $0x80] sm:$0xff]
    %v2264 = vld [vmem:[#allocation11 + $0x88] sm:$0xff]
    %v2265 = vld [vmem:[#allocation11 + $0x90] sm:$0xff]
    %v2266 = vld [vmem:[#allocation11 + $0x98] sm:$0xff]
    %v2267 = vld [vmem:[#allocation11 + $0xa0] sm:$0xff]
    %v2268 = vld [vmem:[#allocation11 + $0xa8] sm:$0xff]
    %v2269 = vld [vmem:[#allocation11 + $0xb0] sm:$0xff]
    %v2270 = vld [vmem:[#allocation11 + $0xb8] sm:$0xff]
    %v2271 = vld [vmem:[#allocation11 + $0xc0] sm:$0xff]
    %v2272 = vld [vmem:[#allocation11 + $0xc8] sm:$0xff]
    %v2273 = vld [vmem:[#allocation11 + $0xd0] sm:$0xff]
    %v2274 = vld [vmem:[#allocation11 + $0xd8] sm:$0xff]
    %v2275 = vld [vmem:[#allocation11 + $0xe0] sm:$0xff]
    %v2276 = vld [vmem:[#allocation11 + $0xe8] sm:$0xff]
    %v2277 = vld [vmem:[#allocation11 + $0xf0] sm:$0xff]
    %v2278 = vld [vmem:[#allocation11 + $0xf8] sm:$0xff]
    %v2279 = vld [vmem:[#allocation11 + $0x100] sm:$0xff]
    %v2280 = vld [vmem:[#allocation11 + $0x108] sm:$0xff]
    %v2281 = vld [vmem:[#allocation11 + $0x110] sm:$0xff]
    %v2282 = vld [vmem:[#allocation11 + $0x118] sm:$0xff]
    %v2283 = vld [vmem:[#allocation11 + $0x120] sm:$0xff]
    %v2284 = vld [vmem:[#allocation11 + $0x128] sm:$0xff]
    %v2285 = vld [vmem:[#allocation11 + $0x130] sm:$0xff]
    %v2286 = vld [vmem:[#allocation11 + $0x138] sm:$0xff]
    %v2287 = vld [vmem:[#allocation11 + $0x140] sm:$0xff]
    %v2288 = vld [vmem:[#allocation11 + $0x148] sm:$0xff]
    %v2289 = vld [vmem:[#allocation11 + $0x150] sm:$0xff]
    %v2290 = vld [vmem:[#allocation11 + $0x158] sm:$0xff]
    %v2291 = vld [vmem:[#allocation11 + $0x160] sm:$0xff]
    %v2292 = vld [vmem:[#allocation11 + $0x168] sm:$0xff]
    %v2293 = vld [vmem:[#allocation11 + $0x170] sm:$0xff]
    %v2294 = vld [vmem:[#allocation11 + $0x178] sm:$0xff]
    %v2295 = vld [vmem:[#allocation11 + $0x180] sm:$0xff]
    %v2296 = vld [vmem:[#allocation11 + $0x188] sm:$0xff]
    %v2297 = vld [vmem:[#allocation11 + $0x190] sm:$0xff]
    %v2298 = vld [vmem:[#allocation11 + $0x198] sm:$0xff]
    %v2299 = vld [vmem:[#allocation11 + $0x1a0] sm:$0xff]
    %v2300 = vld [vmem:[#allocation11 + $0x1a8] sm:$0xff]
    %v2301 = vld [vmem:[#allocation11 + $0x1b0] sm:$0xff]
    %v2302 = vld [vmem:[#allocation11 + $0x1b8] sm:$0xff]
    %v2303 = vld [vmem:[#allocation11 + $0x1c0] sm:$0xff]
    %v2304 = vld [vmem:[#allocation11 + $0x1c8] sm:$0xff]
    %v2305 = vld [vmem:[#allocation11 + $0x1d0] sm:$0xff]
    %v2306 = vld [vmem:[#allocation11 + $0x1d8] sm:$0xff]
    %v2307 = vld [vmem:[#allocation11 + $0x1e0] sm:$0xff]
    %v2308 = vld [vmem:[#allocation11 + $0x1e8] sm:$0xff]
    %v2309 = vld [vmem:[#allocation11 + $0x1f0] sm:$0xff]
    %v2310 = vld [vmem:[#allocation11 + $0x1f8] sm:$0xff]
    %v2311 = vld [vmem:[#allocation11 + $0x200] sm:$0xff]
    %v2312 = vld [vmem:[#allocation11 + $0x208] sm:$0xff]
    %v2313 = vld [vmem:[#allocation11 + $0x210] sm:$0xff]
    %v2314 = vld [vmem:[#allocation11 + $0x218] sm:$0xff]
    %v2315 = vld [vmem:[#allocation11 + $0x220] sm:$0xff]
    %v2316 = vld [vmem:[#allocation11 + $0x228] sm:$0xff]
    %v2317 = vld [vmem:[#allocation11 + $0x230] sm:$0xff]
    %v2318 = vld [vmem:[#allocation11 + $0x238] sm:$0xff]
    %v2319 = vld [vmem:[#allocation11 + $0x240] sm:$0xff]
    %v2320 = vld [vmem:[#allocation11 + $0x248] sm:$0xff]
    %v2321 = vld [vmem:[#allocation11 + $0x250] sm:$0xff]
    %v2322 = vld [vmem:[#allocation11 + $0x258] sm:$0xff]
    %v2323 = vld [vmem:[#allocation11 + $0x260] sm:$0xff]
    %v2324 = vld [vmem:[#allocation11 + $0x268] sm:$0xff]
    %v2325 = vld [vmem:[#allocation11 + $0x270] sm:$0xff]
    %v2326 = vld [vmem:[#allocation11 + $0x278] sm:$0xff]
    %v2327 = vld [vmem:[#allocation11 + $0x280] sm:$0xff]
    %v2328 = vld [vmem:[#allocation11 + $0x288] sm:$0xff]
    %v2329 = vld [vmem:[#allocation11 + $0x290] sm:$0xff]
    %v2330 = vld [vmem:[#allocation11 + $0x298] sm:$0xff]
    %v2331 = vld [vmem:[#allocation11 + $0x2a0] sm:$0xff]
    %v2332 = vld [vmem:[#allocation11 + $0x2a8] sm:$0xff]
    %v2333 = vld [vmem:[#allocation11 + $0x2b0] sm:$0xff]
    %v2334 = vld [vmem:[#allocation11 + $0x2b8] sm:$0xff]
    %v2335 = vld [vmem:[#allocation11 + $0x2c0] sm:$0xff]
    %v2336 = vld [vmem:[#allocation11 + $0x2c8] sm:$0xff]
    %v2337 = vld [vmem:[#allocation11 + $0x2d0] sm:$0xff]
    %v2338 = vld [vmem:[#allocation11 + $0x2d8] sm:$0xff]
    %v2339 = vld [vmem:[#allocation11 + $0x2e0] sm:$0xff]
    %v2340 = vld [vmem:[#allocation11 + $0x2e8] sm:$0xff]
    %v2341 = vld [vmem:[#allocation11 + $0x2f0] sm:$0xff]
    %v2342 = vld [vmem:[#allocation11 + $0x2f8] sm:$0xff]
    %v2343 = vld [vmem:[#allocation11 + $0x300] sm:$0xff]
    %v2344 = vld [vmem:[#allocation11 + $0x308] sm:$0xff]
    %v2345 = vld [vmem:[#allocation11 + $0x310] sm:$0xff]
    %v2346 = vld [vmem:[#allocation11 + $0x318] sm:$0xff]
    %v2347 = vld [vmem:[#allocation11 + $0x320] sm:$0xff]
    %v2348 = vld [vmem:[#allocation11 + $0x328] sm:$0xff]
    %v2349 = vld [vmem:[#allocation11 + $0x330] sm:$0xff]
    %v2350 = vld [vmem:[#allocation11 + $0x338] sm:$0xff]
    %v2351 = vld [vmem:[#allocation11 + $0x340] sm:$0xff]
    %v2352 = vld [vmem:[#allocation11 + $0x348] sm:$0xff]
    %v2353 = vld [vmem:[#allocation11 + $0x350] sm:$0xff]
    %v2354 = vld [vmem:[#allocation11 + $0x358] sm:$0xff]
    %v2355 = vld [vmem:[#allocation11 + $0x360] sm:$0xff]
    %v2356 = vld [vmem:[#allocation11 + $0x368] sm:$0xff]
    %v2357 = vld [vmem:[#allocation11 + $0x370] sm:$0xff]
    %v2358 = vld [vmem:[#allocation11 + $0x378] sm:$0xff]
    %v2359 = vld [vmem:[#allocation11 + $0x380] sm:$0xff]
    %v2360 = vld [vmem:[#allocation11 + $0x388] sm:$0xff]
    %v2361 = vld [vmem:[#allocation11 + $0x390] sm:$0xff]
    %v2362 = vld [vmem:[#allocation11 + $0x398] sm:$0xff]
    %v2363 = vld [vmem:[#allocation11 + $0x3a0] sm:$0xff]
    %v2364 = vld [vmem:[#allocation11 + $0x3a8] sm:$0xff]
    %v2365 = vld [vmem:[#allocation11 + $0x3b0] sm:$0xff]
    %v2366 = vld [vmem:[#allocation11 + $0x3b8] sm:$0xff]
    %v2367 = vld [vmem:[#allocation11 + $0x3c0] sm:$0xff]
    %v2368 = vld [vmem:[#allocation11 + $0x3c8] sm:$0xff]
    %v2369 = vld [vmem:[#allocation11 + $0x3d0] sm:$0xff]
    %v2370 = vld [vmem:[#allocation11 + $0x3d8] sm:$0xff]
    %v2371 = vld [vmem:[#allocation11 + $0x3e0] sm:$0xff]
    %v2372 = vld [vmem:[#allocation11 + $0x3e8] sm:$0xff]
    %v2373 = vld [vmem:[#allocation11 + $0x3f0] sm:$0xff]
    %v2374 = vld [vmem:[#allocation11 + $0x3f8] sm:$0xff]
    %v2375 = vld [vmem:[#allocation11 + $0x400] sm:$0xff]
    %v2376 = vld [vmem:[#allocation11 + $0x408] sm:$0xff]
    %v2377 = vld [vmem:[#allocation11 + $0x410] sm:$0xff]
    %v2378 = vld [vmem:[#allocation11 + $0x418] sm:$0xff]
    %v2379 = vld [vmem:[#allocation11 + $0x420] sm:$0xff]
    %v2380 = vld [vmem:[#allocation11 + $0x428] sm:$0xff]
    %v2381 = vld [vmem:[#allocation11 + $0x430] sm:$0xff]
    %v2382 = vld [vmem:[#allocation11 + $0x438] sm:$0xff]
    %v2383 = vld [vmem:[#allocation11 + $0x440] sm:$0xff]
    %v2384 = vld [vmem:[#allocation11 + $0x448] sm:$0xff]
    %v2385 = vld [vmem:[#allocation11 + $0x450] sm:$0xff]
    %v2386 = vld [vmem:[#allocation11 + $0x458] sm:$0xff]
    %v2387 = vld [vmem:[#allocation11 + $0x460] sm:$0xff]
    %v2388 = vld [vmem:[#allocation11 + $0x468] sm:$0xff]
    %v2389 = vld [vmem:[#allocation11 + $0x470] sm:$0xff]
    %v2390 = vld [vmem:[#allocation11 + $0x478] sm:$0xff]
    %v2391 = vld [vmem:[#allocation11 + $0x480] sm:$0xff]
    %v2392 = vld [vmem:[#allocation11 + $0x488] sm:$0xff]
    %v2393 = vld [vmem:[#allocation11 + $0x490] sm:$0xff]
    %v2394 = vld [vmem:[#allocation11 + $0x498] sm:$0xff]
    %v2395 = vld [vmem:[#allocation11 + $0x4a0] sm:$0xff]
    %v2396 = vld [vmem:[#allocation11 + $0x4a8] sm:$0xff]
    %v2397 = vld [vmem:[#allocation11 + $0x4b0] sm:$0xff]
    %v2398 = vld [vmem:[#allocation11 + $0x4b8] sm:$0xff]
    %v2399 = vld [vmem:[#allocation11 + $0x4c0] sm:$0xff]
    %v2400 = vld [vmem:[#allocation11 + $0x4c8] sm:$0xff]
    %v2401 = vld [vmem:[#allocation11 + $0x4d0] sm:$0xff]
    %v2402 = vld [vmem:[#allocation11 + $0x4d8] sm:$0xff]
    %v2403 = vld [vmem:[#allocation11 + $0x4e0] sm:$0xff]
    %v2404 = vld [vmem:[#allocation11 + $0x4e8] sm:$0xff]
    %v2405 = vld [vmem:[#allocation11 + $0x4f0] sm:$0xff]
    %v2406 = vld [vmem:[#allocation11 + $0x4f8] sm:$0xff]
    %v2407 = vld [vmem:[#allocation11 + $0x500] sm:$0xff]
    %v2408 = vld [vmem:[#allocation11 + $0x508] sm:$0xff]
    %v2409 = vld [vmem:[#allocation11 + $0x510] sm:$0xff]
    %v2410 = vld [vmem:[#allocation11 + $0x518] sm:$0xff]
    %v2411 = vld [vmem:[#allocation11 + $0x520] sm:$0xff]
    %v2412 = vld [vmem:[#allocation11 + $0x528] sm:$0xff]
    %v2413 = vld [vmem:[#allocation11 + $0x530] sm:$0xff]
    %v2414 = vld [vmem:[#allocation11 + $0x538] sm:$0xff]
    %v2415 = vld [vmem:[#allocation11 + $0x540] sm:$0xff]
    %v2416 = vld [vmem:[#allocation11 + $0x548] sm:$0xff]
    %v2417 = vld [vmem:[#allocation11 + $0x550] sm:$0xff]
    %v2418 = vld [vmem:[#allocation11 + $0x558] sm:$0xff]
    %v2419 = vld [vmem:[#allocation11 + $0x560] sm:$0xff]
    %v2420 = vld [vmem:[#allocation11 + $0x568] sm:$0xff]
    %v2421 = vld [vmem:[#allocation11 + $0x570] sm:$0xff]
    %v2422 = vld [vmem:[#allocation11 + $0x578] sm:$0xff]
    %v2423 = vld [vmem:[#allocation11 + $0x580] sm:$0xff]
    %v2424 = vld [vmem:[#allocation11 + $0x588] sm:$0xff]
    %v2425 = vld [vmem:[#allocation11 + $0x590] sm:$0xff]
    %v2426 = vld [vmem:[#allocation11 + $0x598] sm:$0xff]
    %v2427 = vld [vmem:[#allocation11 + $0x5a0] sm:$0xff]
    %v2428 = vld [vmem:[#allocation11 + $0x5a8] sm:$0xff]
    %v2429 = vld [vmem:[#allocation11 + $0x5b0] sm:$0xff]
    %v2430 = vld [vmem:[#allocation11 + $0x5b8] sm:$0xff]
    %v2431 = vld [vmem:[#allocation11 + $0x5c0] sm:$0xff]
    %v2432 = vld [vmem:[#allocation11 + $0x5c8] sm:$0xff]
    %v2433 = vld [vmem:[#allocation11 + $0x5d0] sm:$0xff]
    %v2434 = vld [vmem:[#allocation11 + $0x5d8] sm:$0xff]
    %v2435 = vld [vmem:[#allocation11 + $0x5e0] sm:$0xff]
    %v2436 = vld [vmem:[#allocation11 + $0x5e8] sm:$0xff]
    %v2437 = vld [vmem:[#allocation11 + $0x5f0] sm:$0xff]
    %v2438 = vld [vmem:[#allocation11 + $0x5f8] sm:$0xff]
    %2439 = vmatprep.subr.mxu0 %v2248
    %2440 = vmatpush1.msra.mxu0 %v2247
    %2441 = vmatprep.subr.mxu0 %v2254
    %2442 = vmatpush1.msra.mxu0 %v2253
    %2443 = vmatprep.subr.mxu0 %v2260
    %2444 = vmatpush1.msra.mxu0 %v2259
    %2445 = vmatprep.subr.mxu0 %v2266
    %2446 = vmatpush1.msra.mxu0 %v2265
    %2447 = vmatprep.subr.mxu0 %v2272
    %2448 = vmatpush1.msra.mxu0 %v2271
    %2449 = vmatprep.subr.mxu0 %v2278
    %2450 = vmatpush1.msra.mxu0 %v2277
    %2451 = vmatprep.subr.mxu0 %v2284
    %2452 = vmatpush1.msra.mxu0 %v2283
    %2453 = vmatprep.subr.mxu0 %v2290
    %2454 = vmatpush1.msra.mxu0 %v2289
    %2455 = vmatprep.subr.mxu0 %v2296
    %2456 = vmatpush1.msra.mxu0 %v2295
    %2457 = vmatprep.subr.mxu0 %v2302
    %2458 = vmatpush1.msra.mxu0 %v2301
    %2459 = vmatprep.subr.mxu0 %v2308
    %2460 = vmatpush1.msra.mxu0 %v2307
    %2461 = vmatprep.subr.mxu0 %v2314
    %2462 = vmatpush1.msra.mxu0 %v2313
    %2463 = vmatprep.subr.mxu0 %v2320
    %2464 = vmatpush1.msra.mxu0 %v2319
    %2465 = vmatprep.subr.mxu0 %v2326
    %2466 = vmatpush1.msra.mxu0 %v2325
    %2467 = vmatprep.subr.mxu0 %v2332
    %2468 = vmatpush1.msra.mxu0 %v2331
    %2469 = vmatprep.subr.mxu0 %v2338
    %2470 = vmatpush1.msra.mxu0 %v2337
    %2471 = vmatprep.subr.mxu0 %v2344
    %2472 = vmatpush1.msra.mxu0 %v2343
    %2473 = vmatprep.subr.mxu0 %v2350
    %2474 = vmatpush1.msra.mxu0 %v2349
    %2475 = vmatprep.subr.mxu0 %v2356
    %2476 = vmatpush1.msra.mxu0 %v2355
    %2477 = vmatprep.subr.mxu0 %v2362
    %2478 = vmatpush1.msra.mxu0 %v2361
    %2479 = vmatprep.subr.mxu0 %v2368
    %2480 = vmatpush1.msra.mxu0 %v2367
    %2481 = vmatprep.subr.mxu0 %v2374
    %2482 = vmatpush1.msra.mxu0 %v2373
    %2483 = vmatprep.subr.mxu0 %v2380
    %2484 = vmatpush1.msra.mxu0 %v2379
    %2485 = vmatprep.subr.mxu0 %v2386
    %2486 = vmatpush1.msra.mxu0 %v2385
    %2487 = vmatprep.subr.mxu0 %v2392
    %2488 = vmatpush1.msra.mxu0 %v2391
    %2489 = vmatprep.subr.mxu0 %v2398
    %2490 = vmatpush1.msra.mxu0 %v2397
    %2491 = vmatprep.subr.mxu0 %v2404
    %2492 = vmatpush1.msra.mxu0 %v2403
    %2493 = vmatprep.subr.mxu0 %v2410
    %2494 = vmatpush1.msra.mxu0 %v2409
    %2495 = vmatprep.subr.mxu0 %v2416
    %2496 = vmatpush1.msra.mxu0 %v2415
    %2497 = vmatprep.subr.mxu0 %v2422
    %2498 = vmatpush1.msra.mxu0 %v2421
    %2499 = vmatprep.subr.mxu0 %v2428
    %2500 = vmatpush1.msra.mxu0 %v2427
    %2501 = vmatprep.subr.mxu0 %v2434
    %2502 = vmatpush1.msra.mxu0 %v2433
    %2503 = vmatprep.mubr.f32.mxu0 %v2240
    %2504 = vmatmul.mubr.f32.gmra.mrb[0].mxu0 %v2239
    %v2505 = vpop.f32.mrb[0].mxu0
    %v2506 = vadd.f32 0.0, %v2505
    %v2507 = vpop.f32.mrb[0].mxu0
    %v2508 = vadd.f32 0.0, %v2507
    %2509 = vmatprep.mubr.f32.mxu0 %v2242
    %2510 = vmatmul.mubr.f32.gmra.mrb[0].mxu0 %v2241
    %v2511 = vpop.f32.mrb[0].mxu0
    %v2512 = vadd.f32 0.0, %v2511
    %v2513 = vpop.f32.mrb[0].mxu0
    %v2514 = vadd.f32 0.0, %v2513
    %2515 = vmatprep.mubr.f32.mxu0 %v2244
    %2516 = vmatmul.mubr.f32.gmra.mrb[0].mxu0 %v2243
    %v2517 = vpop.f32.mrb[0].mxu0
    %v2518 = vadd.f32 0.0, %v2517
    %v2519 = vpop.f32.mrb[0].mxu0
    %v2520 = vadd.f32 0.0, %v2519
    %2521 = vmatprep.mubr.f32.mxu0 %v2246
    %2522 = vmatmul.mubr.f32.gmra.mrb[0].mxu0 %v2245
    %v2523 = vpop.f32.mrb[0].mxu0
    %v2524 = vadd.f32 0.0, %v2523
    %v2525 = vpop.f32.mrb[0].mxu0
    %v2526 = vadd.f32 0.0, %v2525
    %2527 = vdwg.mxu0
    %2528 = vmatprep.subr.mxu0 %v2250
    %2529 = vmatpush1.msra.mxu0 %v2249
    %2530 = vmatprep.subr.mxu0 %v2256
    %2531 = vmatpush1.msra.mxu0 %v2255
    %2532 = vmatprep.subr.mxu0 %v2262
    %2533 = vmatpush1.msra.mxu0 %v2261
    %2534 = vmatprep.subr.mxu0 %v2268
    %2535 = vmatpush1.msra.mxu0 %v2267
    %2536 = vmatprep.subr.mxu0 %v2274
    %2537 = vmatpush1.msra.mxu0 %v2273
    %2538 = vmatprep.subr.mxu0 %v2280
    %2539 = vmatpush1.msra.mxu0 %v2279
    %2540 = vmatprep.subr.mxu0 %v2286
    %2541 = vmatpush1.msra.mxu0 %v2285
    %2542 = vmatprep.subr.mxu0 %v2292
    %2543 = vmatpush1.msra.mxu0 %v2291
    %2544 = vmatprep.subr.mxu0 %v2298
    %2545 = vmatpush1.msra.mxu0 %v2297
    %2546 = vmatprep.subr.mxu0 %v2304
    %2547 = vmatpush1.msra.mxu0 %v2303
    %2548 = vmatprep.subr.mxu0 %v2310
    %2549 = vmatpush1.msra.mxu0 %v2309
    %2550 = vmatprep.subr.mxu0 %v2316
    %2551 = vmatpush1.msra.mxu0 %v2315
    %2552 = vmatprep.subr.mxu0 %v2322
    %2553 = vmatpush1.msra.mxu0 %v2321
    %2554 = vmatprep.subr.mxu0 %v2328
    %2555 = vmatpush1.msra.mxu0 %v2327
    %2556 = vmatprep.subr.mxu0 %v2334
    %2557 = vmatpush1.msra.mxu0 %v2333
    %2558 = vmatprep.subr.mxu0 %v2340
    %2559 = vmatpush1.msra.mxu0 %v2339
    %2560 = vmatprep.subr.mxu0 %v2346
    %2561 = vmatpush1.msra.mxu0 %v2345
    %2562 = vmatprep.subr.mxu0 %v2352
    %2563 = vmatpush1.msra.mxu0 %v2351
    %2564 = vmatprep.subr.mxu0 %v2358
    %2565 = vmatpush1.msra.mxu0 %v2357
    %2566 = vmatprep.subr.mxu0 %v2364
    %2567 = vmatpush1.msra.mxu0 %v2363
    %2568 = vmatprep.subr.mxu0 %v2370
    %2569 = vmatpush1.msra.mxu0 %v2369
    %2570 = vmatprep.subr.mxu0 %v2376
    %2571 = vmatpush1.msra.mxu0 %v2375
    %2572 = vmatprep.subr.mxu0 %v2382
    %2573 = vmatpush1.msra.mxu0 %v2381
    %2574 = vmatprep.subr.mxu0 %v2388
    %2575 = vmatpush1.msra.mxu0 %v2387
    %2576 = vmatprep.subr.mxu0 %v2394
    %2577 = vmatpush1.msra.mxu0 %v2393
    %2578 = vmatprep.subr.mxu0 %v2400
    %2579 = vmatpush1.msra.mxu0 %v2399
    %2580 = vmatprep.subr.mxu0 %v2406
    %2581 = vmatpush1.msra.mxu0 %v2405
    %2582 = vmatprep.subr.mxu0 %v2412
    %2583 = vmatpush1.msra.mxu0 %v2411
    %2584 = vmatprep.subr.mxu0 %v2418
    %2585 = vmatpush1.msra.mxu0 %v2417
    %2586 = vmatprep.subr.mxu0 %v2424
    %2587 = vmatpush1.msra.mxu0 %v2423
    %2588 = vmatprep.subr.mxu0 %v2430
    %2589 = vmatpush1.msra.mxu0 %v2429
    %2590 = vmatprep.subr.mxu0 %v2436
    %2591 = vmatpush1.msra.mxu0 %v2435
    %2592 = vmatprep.mubr.f32.mxu0 %v2240
    %2593 = vmatmul.mubr.f32.gmra.mrb[0].mxu0 %v2239
    %v2594 = vpop.f32.mrb[0].mxu0
    %v2595 = vadd.f32 0.0, %v2594
    %v2596 = vpop.f32.mrb[0].mxu0
    %v2597 = vadd.f32 0.0, %v2596
    %2598 = vmatprep.mubr.f32.mxu0 %v2242
    %2599 = vmatmul.mubr.f32.gmra.mrb[0].mxu0 %v2241
    %v2600 = vpop.f32.mrb[0].mxu0
    %v2601 = vadd.f32 0.0, %v2600
    %v2602 = vpop.f32.mrb[0].mxu0
    %v2603 = vadd.f32 0.0, %v2602
    %2604 = vmatprep.mubr.f32.mxu0 %v2244
    %2605 = vmatmul.mubr.f32.gmra.mrb[0].mxu0 %v2243
    %v2606 = vpop.f32.mrb[0].mxu0
    %v2607 = vadd.f32 0.0, %v2606
    %v2608 = vpop.f32.mrb[0].mxu0
    %v2609 = vadd.f32 0.0, %v2608
    %2610 = vmatprep.mubr.f32.mxu0 %v2246
    %2611 = vmatmul.mubr.f32.gmra.mrb[0].mxu0 %v2245
    %v2612 = vpop.f32.mrb[0].mxu0
    %v2613 = vadd.f32 0.0, %v2612
    %v2614 = vpop.f32.mrb[0].mxu0
    %v2615 = vadd.f32 0.0, %v2614
    %2616 = vdwg.mxu0
    %2617 = vmatprep.subr.mxu0 %v2252
    %2618 = vmatpush1.msra.mxu0 %v2251
    %2619 = vmatprep.subr.mxu0 %v2258
    %2620 = vmatpush1.msra.mxu0 %v2257
    %2621 = vmatprep.subr.mxu0 %v2264
    %2622 = vmatpush1.msra.mxu0 %v2263
    %2623 = vmatprep.subr.mxu0 %v2270
    %2624 = vmatpush1.msra.mxu0 %v2269
    %2625 = vmatprep.subr.mxu0 %v2276
    %2626 = vmatpush1.msra.mxu0 %v2275
    %2627 = vmatprep.subr.mxu0 %v2282
    %2628 = vmatpush1.msra.mxu0 %v2281
    %2629 = vmatprep.subr.mxu0 %v2288
    %2630 = vmatpush1.msra.mxu0 %v2287
    %2631 = vmatprep.subr.mxu0 %v2294
    %2632 = vmatpush1.msra.mxu0 %v2293
    %2633 = vmatprep.subr.mxu0 %v2300
    %2634 = vmatpush1.msra.mxu0 %v2299
    %2635 = vmatprep.subr.mxu0 %v2306
    %2636 = vmatpush1.msra.mxu0 %v2305
    %2637 = vmatprep.subr.mxu0 %v2312
    %2638 = vmatpush1.msra.mxu0 %v2311
    %2639 = vmatprep.subr.mxu0 %v2318
    %2640 = vmatpush1.msra.mxu0 %v2317
    %2641 = vmatprep.subr.mxu0 %v2324
    %2642 = vmatpush1.msra.mxu0 %v2323
    %2643 = vmatprep.subr.mxu0 %v2330
    %2644 = vmatpush1.msra.mxu0 %v2329
    %2645 = vmatprep.subr.mxu0 %v2336
    %2646 = vmatpush1.msra.mxu0 %v2335
    %2647 = vmatprep.subr.mxu0 %v2342
    %2648 = vmatpush1.msra.mxu0 %v2341
    %2649 = vmatprep.subr.mxu0 %v2348
    %2650 = vmatpush1.msra.mxu0 %v2347
    %2651 = vmatprep.subr.mxu0 %v2354
    %2652 = vmatpush1.msra.mxu0 %v2353
    %2653 = vmatprep.subr.mxu0 %v2360
    %2654 = vmatpush1.msra.mxu0 %v2359
    %2655 = vmatprep.subr.mxu0 %v2366
    %2656 = vmatpush1.msra.mxu0 %v2365
    %2657 = vmatprep.subr.mxu0 %v2372
    %2658 = vmatpush1.msra.mxu0 %v2371
    %2659 = vmatprep.subr.mxu0 %v2378
    %2660 = vmatpush1.msra.mxu0 %v2377
    %2661 = vmatprep.subr.mxu0 %v2384
    %2662 = vmatpush1.msra.mxu0 %v2383
    %2663 = vmatprep.subr.mxu0 %v2390
    %2664 = vmatpush1.msra.mxu0 %v2389
    %2665 = vmatprep.subr.mxu0 %v2396
    %2666 = vmatpush1.msra.mxu0 %v2395
    %2667 = vmatprep.subr.mxu0 %v2402
    %2668 = vmatpush1.msra.mxu0 %v2401
    %2669 = vmatprep.subr.mxu0 %v2408
    %2670 = vmatpush1.msra.mxu0 %v2407
    %2671 = vmatprep.subr.mxu0 %v2414
    %2672 = vmatpush1.msra.mxu0 %v2413
    %2673 = vmatprep.subr.mxu0 %v2420
    %2674 = vmatpush1.msra.mxu0 %v2419
    %2675 = vmatprep.subr.mxu0 %v2426
    %2676 = vmatpush1.msra.mxu0 %v2425
    %2677 = vmatprep.subr.mxu0 %v2432
    %2678 = vmatpush1.msra.mxu0 %v2431
    %2679 = vmatprep.subr.mxu0 %v2438
    %2680 = vmatpush1.msra.mxu0 %v2437
    %2681 = vmatprep.mubr.f32.mxu0 %v2240
    %2682 = vmatmul.mubr.f32.gmra.mrb[0].mxu0 %v2239
    %v2683 = vpop.f32.mrb[0].mxu0
    %v2684 = vadd.f32 0.0, %v2683
    %v2685 = vpop.f32.mrb[0].mxu0
    %v2686 = vadd.f32 0.0, %v2685
    %2687 = vmatprep.mubr.f32.mxu0 %v2242
    %2688 = vmatmul.mubr.f32.gmra.mrb[0].mxu0 %v2241
    %v2689 = vpop.f32.mrb[0].mxu0
    %v2690 = vadd.f32 0.0, %v2689
    %v2691 = vpop.f32.mrb[0].mxu0
    %v2692 = vadd.f32 0.0, %v2691
    %2693 = vmatprep.mubr.f32.mxu0 %v2244
    %2694 = vmatmul.mubr.f32.gmra.mrb[0].mxu0 %v2243
    %v2695 = vpop.f32.mrb[0].mxu0
    %v2696 = vadd.f32 0.0, %v2695
    %v2697 = vpop.f32.mrb[0].mxu0
    %v2698 = vadd.f32 0.0, %v2697
    %2699 = vmatprep.mubr.f32.mxu0 %v2246
    %2700 = vmatmul.mubr.f32.gmra.mrb[0].mxu0 %v2245
    %v2701 = vpop.f32.mrb[0].mxu0
    %v2702 = vadd.f32 0.0, %v2701
    %v2703 = vpop.f32.mrb[0].mxu0
    %v2704 = vadd.f32 0.0, %v2703
    %2705 = vdwg.mxu0
    %2706 = vst [vmem:[#allocation2 + $0x30] sm:$0xff] %v2506
    %2707 = vst [vmem:[#allocation2 + $0x38] sm:$0xff] %v2508
    %2708 = vst [vmem:[#allocation2 + $0x40] sm:$0xff] %v2595
    %2709 = vst [vmem:[#allocation2 + $0x48] sm:$0xff] %v2597
    %2710 = vst [vmem:[#allocation2 + $0x60] sm:$0xff] %v2512
    %2711 = vst [vmem:[#allocation2 + $0x68] sm:$0xff] %v2514
    %2712 = vst [vmem:[#allocation2 + $0x70] sm:$0xff] %v2601
    %2713 = vst [vmem:[#allocation2 + $0x78] sm:$0xff] %v2603
    %2714 = vst [vmem:[#allocation2 + $0x90] sm:$0xff] %v2518
    %2715 = vst [vmem:[#allocation2 + $0x98] sm:$0xff] %v2520
    %2716 = vst [vmem:[#allocation2 + $0xa0] sm:$0xff] %v2607
    %2717 = vst [vmem:[#allocation2 + $0xa8] sm:$0xff] %v2609
    %2718 = vst [vmem:[#allocation2 + $0xc0] sm:$0xff] %v2524
    %2719 = vst [vmem:[#allocation2 + $0xc8] sm:$0xff] %v2526
    %2720 = vst [vmem:[#allocation2 + $0xd0] sm:$0xff] %v2613
    %2721 = vst [vmem:[#allocation2 + $0xd8] sm:$0xff] %v2615
    %v2722 = vld [vmem:[#allocation2] sm:$0x80]
    %v2723 = vld [vmem:[#allocation2 + $0x8] sm:$0x80]
    %v2724 = vld [vmem:[#allocation2 + $0x30] sm:$0xff]
    %v2725 = vld [vmem:[#allocation2 + $0x38] sm:$0xff]
    %v2726 = vld [vmem:[#allocation2 + $0x60] sm:$0xff]
    %v2727 = vld [vmem:[#allocation2 + $0x68] sm:$0xff]
    %v2728 = vld [vmem:[#allocation2 + $0x90] sm:$0xff]
    %v2729 = vld [vmem:[#allocation2 + $0x98] sm:$0xff]
    %v2730 = vld [vmem:[#allocation2 + $0xc0] sm:$0x7f]
    %v2731 = vld [vmem:[#allocation2 + $0xc8] sm:$0x7f]
    %v2732 = vld [vmem:[#allocation2 + $0x40] sm:$0xfe]
    %v2733 = vld [vmem:[#allocation2 + $0x48] sm:$0xfe]
    %v2734 = vld [vmem:[#allocation2 + $0x70] sm:$0xff]
    %v2735 = vld [vmem:[#allocation2 + $0x78] sm:$0xff]
    %v2736 = vld [vmem:[#allocation2 + $0xa0] sm:$0xff]
    %v2737 = vld [vmem:[#allocation2 + $0xa8] sm:$0xff]
    %v2738 = vld [vmem:[#allocation2 + $0xd0] sm:$0xff]
    %v2739 = vld [vmem:[#allocation2 + $0xd8] sm:$0xff]
    %v2740 = vld [vmem:[#allocation2 + $0x100] sm:$0x1]
    %v2741 = vld [vmem:[#allocation2 + $0x108] sm:$0x1]
    %v2752 = vrot.slane %v2722, 7
    %v2753 = vrot.slane %v2724, 7
    %v2754 = vsel %vm1524, %v2752, %v2753
    %v2755 = vrot.slane %v2723, 7
    %v2756 = vrot.slane %v2725, 7
    %v2757 = vsel %vm1524, %v2755, %v2756
    %v2758 = vrot.slane %v2726, 7
    %v2759 = vsel %vm1524, %v2753, %v2758
    %v2760 = vrot.slane %v2727, 7
    %v2761 = vsel %vm1524, %v2756, %v2760
    %v2762 = vrot.slane %v2728, 7
    %v2763 = vsel %vm1524, %v2758, %v2762
    %v2764 = vrot.slane %v2729, 7
    %v2765 = vsel %vm1524, %v2760, %v2764
    %v2766 = vrot.slane %v2730, 7
    %v2767 = vsel %vm1524, %v2762, %v2766
    %v2768 = vrot.slane %v2731, 7
    %v2769 = vsel %vm1524, %v2764, %v2768
    %v2778 = vsel %vm1510, %v2754, 0.0
    %v2779 = vsel %vm1510, %v2757, 0.0
    %v2780 = vsel %vm1511, %v2759, 0.0
    %v2781 = vsel %vm1511, %v2761, 0.0
    %v2782 = vsel %vm1512, %v2763, 0.0
    %v2783 = vsel %vm1512, %v2765, 0.0
    %v2784 = vsel %vm1513, %v2767, 0.0
    %v2785 = vsel %vm1513, %v2769, 0.0
    %v2786 = vadd.f32 %v2684, %v2778
    %v2787 = vadd.f32 %v2686, %v2779
    %v2788 = vadd.f32 %v2690, %v2780
    %v2789 = vadd.f32 %v2692, %v2781
    %v2790 = vadd.f32 %v2696, %v2782
    %v2791 = vadd.f32 %v2698, %v2783
    %v2792 = vadd.f32 %v2702, %v2784
    %v2793 = vadd.f32 %v2704, %v2785
    %v2804 = vrot.slane %v2732, 1
    %v2805 = vrot.slane %v2734, 1
    %v2806 = vsel %vm1585, %v2804, %v2805
    %v2807 = vrot.slane %v2733, 1
    %v2808 = vrot.slane %v2735, 1
    %v2809 = vsel %vm1585, %v2807, %v2808
    %v2810 = vrot.slane %v2736, 1
    %v2811 = vsel %vm1585, %v2805, %v2810
    %v2812 = vrot.slane %v2737, 1
    %v2813 = vsel %vm1585, %v2808, %v2812
    %v2814 = vrot.slane %v2738, 1
    %v2815 = vsel %vm1585, %v2810, %v2814
    %v2816 = vrot.slane %v2739, 1
    %v2817 = vsel %vm1585, %v2812, %v2816
    %v2818 = vrot.slane %v2740, 1
    %v2819 = vsel %vm1585, %v2814, %v2818
    %v2820 = vrot.slane %v2741, 1
    %v2821 = vsel %vm1585, %v2816, %v2820
    %v2830 = vsel %vm1571, %v2806, 0.0
    %v2831 = vsel %vm1571, %v2809, 0.0
    %v2832 = vsel %vm1572, %v2811, 0.0
    %v2833 = vsel %vm1572, %v2813, 0.0
    %v2834 = vsel %vm1573, %v2815, 0.0
    %v2835 = vsel %vm1573, %v2817, 0.0
    %v2836 = vsel %vm1574, %v2819, 0.0
    %v2837 = vsel %vm1574, %v2821, 0.0
    %v2838 = vadd.f32 %v2786, %v2830
    %v2839 = vadd.f32 %v2787, %v2831
    %v2840 = vadd.f32 %v2788, %v2832
    %v2841 = vadd.f32 %v2789, %v2833
    %v2842 = vadd.f32 %v2790, %v2834
    %v2843 = vadd.f32 %v2791, %v2835
    %v2844 = vadd.f32 %v2792, %v2836
    %v2845 = vadd.f32 %v2793, %v2837
    %v2846 = vld [vmem:[#allocation12] sm:$0x3]
    %v2848 = vlaneseq
    %v2849 = vshrl.u32 %v2848, 7
    %v2850 = vsub.s32 0, %v2849
    %v2851 = vrot.slane %v2846, %v2850
    %v2852 = vlaneseq
    %v2853 = vshrl.u32 %v2852, 7
    %v2854 = vsub.s32 1, %v2853
    %v2855 = vrot.slane %v2846, %v2854
    %v2858 = vadd.f32 %v2838, %v2851
    %v2859 = vadd.f32 %v2839, %v2855
    %v2860 = vadd.f32 %v2840, %v2851
    %v2861 = vadd.f32 %v2841, %v2855
    %v2862 = vadd.f32 %v2842, %v2851
    %v2863 = vadd.f32 %v2843, %v2855
    %v2864 = vadd.f32 %v2844, %v2851
    %v2865 = vadd.f32 %v2845, %v2855
    %v2866 = vld [vmem:[#allocation2 + $0x50] sm:$0xff]
    %v2867 = vld [vmem:[#allocation2 + $0x58] sm:$0xff]
    %v2868 = vld [vmem:[#allocation2 + $0x80] sm:$0xff]
    %v2869 = vld [vmem:[#allocation2 + $0x88] sm:$0xff]
    %v2870 = vld [vmem:[#allocation2 + $0xb0] sm:$0xff]
    %v2871 = vld [vmem:[#allocation2 + $0xb8] sm:$0xff]
    %v2872 = vld [vmem:[#allocation2 + $0xe0] sm:$0xff]
    %v2873 = vld [vmem:[#allocation2 + $0xe8] sm:$0xff]
    %v2874 = vadd.f32 %v2866, %v2868
    %v2875 = vrot.slane %v2874, 4
    %v2876 = vadd.f32 %v2874, %v2875
    %v2877 = vrot.slane %v2876, 2
    %v2878 = vadd.f32 %v2876, %v2877
    %v2879 = vrot.slane %v2878, 1
    %v2880 = vadd.f32 %v2878, %v2879
    %v2881 = vadd.f32 %v2867, %v2869
    %v2882 = vrot.slane %v2881, 4
    %v2883 = vadd.f32 %v2881, %v2882
    %v2884 = vrot.slane %v2883, 2
    %v2885 = vadd.f32 %v2883, %v2884
    %v2886 = vrot.slane %v2885, 1
    %v2887 = vadd.f32 %v2885, %v2886
    %v2888 = vadd.f32 %v2870, %v2872
    %v2889 = vrot.slane %v2888, 4
    %v2890 = vadd.f32 %v2888, %v2889
    %v2891 = vrot.slane %v2890, 2
    %v2892 = vadd.f32 %v2890, %v2891
    %v2893 = vrot.slane %v2892, 1
    %v2894 = vadd.f32 %v2892, %v2893
    %v2895 = vadd.f32 %v2871, %v2873
    %v2896 = vrot.slane %v2895, 4
    %v2897 = vadd.f32 %v2895, %v2896
    %v2898 = vrot.slane %v2897, 2
    %v2899 = vadd.f32 %v2897, %v2898
    %v2900 = vrot.slane %v2899, 1
    %v2901 = vadd.f32 %v2899, %v2900
    %v2902 = vld [vmem:[#allocation14] sm:$0xff]
    %v2903 = vld [vmem:[#allocation14 + $0x8] sm:$0xff]
    %v2904 = vld [vmem:[#allocation14 + $0x10] sm:$0xff]
    %v2905 = vld [vmem:[#allocation14 + $0x18] sm:$0xff]
    %v2906 = vld [vmem:[#allocation14 + $0x20] sm:$0xff]
    %v2907 = vld [vmem:[#allocation14 + $0x28] sm:$0xff]
    %v2908 = vld [vmem:[#allocation14 + $0x30] sm:$0xff]
    %v2909 = vld [vmem:[#allocation14 + $0x38] sm:$0xff]
    %v2910 = vld [vmem:[#allocation14 + $0x40] sm:$0xff]
    %v2911 = vld [vmem:[#allocation14 + $0x48] sm:$0xff]
    %v2912 = vld [vmem:[#allocation14 + $0x50] sm:$0xff]
    %v2913 = vld [vmem:[#allocation14 + $0x58] sm:$0xff]
    %v2914 = vld [vmem:[#allocation14 + $0x60] sm:$0xff]
    %v2915 = vld [vmem:[#allocation14 + $0x68] sm:$0xff]
    %v2916 = vld [vmem:[#allocation14 + $0x70] sm:$0xff]
    %v2917 = vld [vmem:[#allocation14 + $0x78] sm:$0xff]
    %v2918 = vld [vmem:[#allocation14 + $0x80] sm:$0xff]
    %v2919 = vld [vmem:[#allocation14 + $0x88] sm:$0xff]
    %v2920 = vld [vmem:[#allocation14 + $0x90] sm:$0xff]
    %v2921 = vld [vmem:[#allocation14 + $0x98] sm:$0xff]
    %v2922 = vld [vmem:[#allocation14 + $0xa0] sm:$0xff]
    %v2923 = vld [vmem:[#allocation14 + $0xa8] sm:$0xff]
    %v2924 = vld [vmem:[#allocation14 + $0xb0] sm:$0xff]
    %v2925 = vld [vmem:[#allocation14 + $0xb8] sm:$0xff]
    %v2926 = vld [vmem:[#allocation14 + $0xc0] sm:$0xff]
    %v2927 = vld [vmem:[#allocation14 + $0xc8] sm:$0xff]
    %v2928 = vld [vmem:[#allocation14 + $0xd0] sm:$0xff]
    %v2929 = vld [vmem:[#allocation14 + $0xd8] sm:$0xff]
    %v2930 = vld [vmem:[#allocation14 + $0xe0] sm:$0xff]
    %v2931 = vld [vmem:[#allocation14 + $0xe8] sm:$0xff]
    %v2932 = vld [vmem:[#allocation14 + $0xf0] sm:$0xff]
    %v2933 = vld [vmem:[#allocation14 + $0xf8] sm:$0xff]
    %v2934 = vld [vmem:[#allocation14 + $0x100] sm:$0xff]
    %v2935 = vld [vmem:[#allocation14 + $0x108] sm:$0xff]
    %v2936 = vld [vmem:[#allocation14 + $0x110] sm:$0xff]
    %v2937 = vld [vmem:[#allocation14 + $0x118] sm:$0xff]
    %v2938 = vld [vmem:[#allocation14 + $0x120] sm:$0xff]
    %v2939 = vld [vmem:[#allocation14 + $0x128] sm:$0xff]
    %v2940 = vld [vmem:[#allocation14 + $0x130] sm:$0xff]
    %v2941 = vld [vmem:[#allocation14 + $0x138] sm:$0xff]
    %v2942 = vld [vmem:[#allocation14 + $0x140] sm:$0xff]
    %v2943 = vld [vmem:[#allocation14 + $0x148] sm:$0xff]
    %v2944 = vld [vmem:[#allocation14 + $0x150] sm:$0xff]
    %v2945 = vld [vmem:[#allocation14 + $0x158] sm:$0xff]
    %v2946 = vld [vmem:[#allocation14 + $0x160] sm:$0xff]
    %v2947 = vld [vmem:[#allocation14 + $0x168] sm:$0xff]
    %v2948 = vld [vmem:[#allocation14 + $0x170] sm:$0xff]
    %v2949 = vld [vmem:[#allocation14 + $0x178] sm:$0xff]
    %v2950 = vld [vmem:[#allocation14 + $0x180] sm:$0xff]
    %v2951 = vld [vmem:[#allocation14 + $0x188] sm:$0xff]
    %v2952 = vld [vmem:[#allocation14 + $0x190] sm:$0xff]
    %v2953 = vld [vmem:[#allocation14 + $0x198] sm:$0xff]
    %v2954 = vld [vmem:[#allocation14 + $0x1a0] sm:$0xff]
    %v2955 = vld [vmem:[#allocation14 + $0x1a8] sm:$0xff]
    %v2956 = vld [vmem:[#allocation14 + $0x1b0] sm:$0xff]
    %v2957 = vld [vmem:[#allocation14 + $0x1b8] sm:$0xff]
    %v2958 = vld [vmem:[#allocation14 + $0x1c0] sm:$0xff]
    %v2959 = vld [vmem:[#allocation14 + $0x1c8] sm:$0xff]
    %v2960 = vld [vmem:[#allocation14 + $0x1d0] sm:$0xff]
    %v2961 = vld [vmem:[#allocation14 + $0x1d8] sm:$0xff]
    %v2962 = vld [vmem:[#allocation14 + $0x1e0] sm:$0xff]
    %v2963 = vld [vmem:[#allocation14 + $0x1e8] sm:$0xff]
    %v2964 = vld [vmem:[#allocation14 + $0x1f0] sm:$0xff]
    %v2965 = vld [vmem:[#allocation14 + $0x1f8] sm:$0xff]
    %vm2970 = vcmask 1041409
    %v2971 = vsel %vm2970, %v2894, %v2880
    %v2972 = vsel %vm2970, %v2901, %v2887
    %2975 = vmatprep.subr.mxu0 %v2903
    %2976 = vmatpush1.msra.mxu0 %v2902
    %2977 = vmatprep.subr.mxu0 %v2905
    %2978 = vmatpush1.msra.mxu0 %v2904
    %2979 = vmatprep.subr.mxu0 %v2907
    %2980 = vmatpush1.msra.mxu0 %v2906
    %2981 = vmatprep.subr.mxu0 %v2909
    %2982 = vmatpush1.msra.mxu0 %v2908
    %2983 = vmatprep.subr.mxu0 %v2911
    %2984 = vmatpush1.msra.mxu0 %v2910
    %2985 = vmatprep.subr.mxu0 %v2913
    %2986 = vmatpush1.msra.mxu0 %v2912
    %2987 = vmatprep.subr.mxu0 %v2915
    %2988 = vmatpush1.msra.mxu0 %v2914
    %2989 = vmatprep.subr.mxu0 %v2917
    %2990 = vmatpush1.msra.mxu0 %v2916
    %2991 = vmatprep.subr.mxu0 %v2919
    %2992 = vmatpush1.msra.mxu0 %v2918
    %2993 = vmatprep.subr.mxu0 %v2921
    %2994 = vmatpush1.msra.mxu0 %v2920
    %2995 = vmatprep.subr.mxu0 %v2923
    %2996 = vmatpush1.msra.mxu0 %v2922
    %2997 = vmatprep.subr.mxu0 %v2925
    %2998 = vmatpush1.msra.mxu0 %v2924
    %2999 = vmatprep.subr.mxu0 %v2927
    %3000 = vmatpush1.msra.mxu0 %v2926
    %3001 = vmatprep.subr.mxu0 %v2929
    %3002 = vmatpush1.msra.mxu0 %v2928
    %3003 = vmatprep.subr.mxu0 %v2931
    %3004 = vmatpush1.msra.mxu0 %v2930
    %3005 = vmatprep.subr.mxu0 %v2933
    %3006 = vmatpush1.msra.mxu0 %v2932
    %3007 = vmatprep.subr.mxu0 %v2935
    %3008 = vmatpush1.msra.mxu0 %v2934
    %3009 = vmatprep.subr.mxu0 %v2937
    %3010 = vmatpush1.msra.mxu0 %v2936
    %3011 = vmatprep.subr.mxu0 %v2939
    %3012 = vmatpush1.msra.mxu0 %v2938
    %3013 = vmatprep.subr.mxu0 %v2941
    %3014 = vmatpush1.msra.mxu0 %v2940
    %3015 = vmatprep.subr.mxu0 %v2943
    %3016 = vmatpush1.msra.mxu0 %v2942
    %3017 = vmatprep.subr.mxu0 %v2945
    %3018 = vmatpush1.msra.mxu0 %v2944
    %3019 = vmatprep.subr.mxu0 %v2947
    %3020 = vmatpush1.msra.mxu0 %v2946
    %3021 = vmatprep.subr.mxu0 %v2949
    %3022 = vmatpush1.msra.mxu0 %v2948
    %3023 = vmatprep.subr.mxu0 %v2951
    %3024 = vmatpush1.msra.mxu0 %v2950
    %3025 = vmatprep.subr.mxu0 %v2953
    %3026 = vmatpush1.msra.mxu0 %v2952
    %3027 = vmatprep.subr.mxu0 %v2955
    %3028 = vmatpush1.msra.mxu0 %v2954
    %3029 = vmatprep.subr.mxu0 %v2957
    %3030 = vmatpush1.msra.mxu0 %v2956
    %3031 = vmatprep.subr.mxu0 %v2959
    %3032 = vmatpush1.msra.mxu0 %v2958
    %3033 = vmatprep.subr.mxu0 %v2961
    %3034 = vmatpush1.msra.mxu0 %v2960
    %3035 = vmatprep.subr.mxu0 %v2963
    %3036 = vmatpush1.msra.mxu0 %v2962
    %3037 = vmatprep.subr.mxu0 %v2965
    %3038 = vmatpush1.msra.mxu0 %v2964
    %3039 = vmatprep.mubr.f32.mxu0 %v2972
    %3040 = vmatmul.mubr.f32.gmra.mrb[0].mxu0 %v2971
    %v3041 = vpop.f32.mrb[0].mxu0
    %v3042 = vadd.f32 0.0, %v3041
    %v3043 = vpop.f32.mrb[0].mxu0
    %v3044 = vadd.f32 0.0, %v3043
    %3045 = vdwg.mxu0
    %v3048 = vcombine.low %v3042, %v3044
    %v3050 = vunpack.c.l.s4 1966171168
    %v3051 = vunpack.c.0.s8 %v3050
    %v3052 = vlaneseq
    %v3053 = vshrl.u32 %v3052, 7
    %v3054 = vsub.s32 %v3051, %v3053
    %v3055 = vrot.slane %v3048, %v3054
    %v3056 = vcombine.high %v3055, %v3055
    %v3058 = vunpack.c.l.s4 1966171168
    %v3059 = vunpack.c.0.s8 %v3058
    %v3060 = vlaneseq
    %v3061 = vshrl.u32 %v3060, 7
    %v3062 = vsub.s32 %v3059, %v3061
    %v3063 = vrot.slane %v3055, %v3062
    %v3065 = vunpack.c.l.s4 1966171168
    %v3066 = vunpack.c.0.s8 %v3065
    %v3067 = vlaneseq
    %v3068 = vshrl.u32 %v3067, 7
    %v3069 = vsub.s32 %v3066, %v3068
    %v3070 = vrot.slane %v3056, %v3069
    %v3071 = vlaneseq
    %v3072 = vshrl.u32 %v3071, 7
    %v3073 = vsub.s32 0, %v3072
    %v3074 = vrot.slane %v3063, %v3073
    %v3075 = vlaneseq
    %v3076 = vshrl.u32 %v3075, 7
    %v3077 = vsub.s32 1, %v3076
    %v3078 = vrot.slane %v3063, %v3077
    %v3079 = vlaneseq
    %v3080 = vshrl.u32 %v3079, 7
    %v3081 = vsub.s32 0, %v3080
    %v3082 = vrot.slane %v3070, %v3081
    %v3083 = vlaneseq
    %v3084 = vshrl.u32 %v3083, 7
    %v3085 = vsub.s32 1, %v3084
    %v3086 = vrot.slane %v3070, %v3085
    %v3091 = vsub.f32 %v2866, %v3074
    %v3092 = vsub.f32 %v2867, %v3078
    %v3093 = vsub.f32 %v2868, %v3074
    %v3094 = vsub.f32 %v2869, %v3078
    %v3095 = vsub.f32 %v2870, %v3082
    %v3096 = vsub.f32 %v2871, %v3086
    %v3097 = vsub.f32 %v2872, %v3082
    %v3098 = vsub.f32 %v2873, %v3086
    %v3099 = vmul.f32 %v3091, %v3091
    %v3100 = vmul.f32 %v3092, %v3092
    %v3101 = vmul.f32 %v3093, %v3093
    %v3102 = vmul.f32 %v3094, %v3094
    %v3103 = vmul.f32 %v3095, %v3095
    %v3104 = vmul.f32 %v3096, %v3096
    %v3105 = vmul.f32 %v3097, %v3097
    %v3106 = vmul.f32 %v3098, %v3098
    %v3107 = vadd.f32 %v3099, %v3101
    %v3108 = vrot.slane %v3107, 4
    %v3109 = vadd.f32 %v3107, %v3108
    %v3110 = vrot.slane %v3109, 2
    %v3111 = vadd.f32 %v3109, %v3110
    %v3112 = vrot.slane %v3111, 1
    %v3113 = vadd.f32 %v3111, %v3112
    %v3114 = vadd.f32 %v3100, %v3102
    %v3115 = vrot.slane %v3114, 4
    %v3116 = vadd.f32 %v3114, %v3115
    %v3117 = vrot.slane %v3116, 2
    %v3118 = vadd.f32 %v3116, %v3117
    %v3119 = vrot.slane %v3118, 1
    %v3120 = vadd.f32 %v3118, %v3119
    %v3121 = vadd.f32 %v3103, %v3105
    %v3122 = vrot.slane %v3121, 4
    %v3123 = vadd.f32 %v3121, %v3122
    %v3124 = vrot.slane %v3123, 2
    %v3125 = vadd.f32 %v3123, %v3124
    %v3126 = vrot.slane %v3125, 1
    %v3127 = vadd.f32 %v3125, %v3126
    %v3128 = vadd.f32 %v3104, %v3106
    %v3129 = vrot.slane %v3128, 4
    %v3130 = vadd.f32 %v3128, %v3129
    %v3131 = vrot.slane %v3130, 2
    %v3132 = vadd.f32 %v3130, %v3131
    %v3133 = vrot.slane %v3132, 1
    %v3134 = vadd.f32 %v3132, %v3133
    %v3139 = vsel %vm2970, %v3127, %v3113
    %v3140 = vsel %vm2970, %v3134, %v3120
    %3143 = vmatprep.subr.mxu0 %v2903
    %3144 = vmatpush1.msra.mxu0 %v2902
    %3145 = vmatprep.subr.mxu0 %v2905
    %3146 = vmatpush1.msra.mxu0 %v2904
    %3147 = vmatprep.subr.mxu0 %v2907
    %3148 = vmatpush1.msra.mxu0 %v2906
    %3149 = vmatprep.subr.mxu0 %v2909
    %3150 = vmatpush1.msra.mxu0 %v2908
    %3151 = vmatprep.subr.mxu0 %v2911
    %3152 = vmatpush1.msra.mxu0 %v2910
    %3153 = vmatprep.subr.mxu0 %v2913
    %3154 = vmatpush1.msra.mxu0 %v2912
    %3155 = vmatprep.subr.mxu0 %v2915
    %3156 = vmatpush1.msra.mxu0 %v2914
    %3157 = vmatprep.subr.mxu0 %v2917
    %3158 = vmatpush1.msra.mxu0 %v2916
    %3159 = vmatprep.subr.mxu0 %v2919
    %3160 = vmatpush1.msra.mxu0 %v2918
    %3161 = vmatprep.subr.mxu0 %v2921
    %3162 = vmatpush1.msra.mxu0 %v2920
    %3163 = vmatprep.subr.mxu0 %v2923
    %3164 = vmatpush1.msra.mxu0 %v2922
    %3165 = vmatprep.subr.mxu0 %v2925
    %3166 = vmatpush1.msra.mxu0 %v2924
    %3167 = vmatprep.subr.mxu0 %v2927
    %3168 = vmatpush1.msra.mxu0 %v2926
    %3169 = vmatprep.subr.mxu0 %v2929
    %3170 = vmatpush1.msra.mxu0 %v2928
    %3171 = vmatprep.subr.mxu0 %v2931
    %3172 = vmatpush1.msra.mxu0 %v2930
    %3173 = vmatprep.subr.mxu0 %v2933
    %3174 = vmatpush1.msra.mxu0 %v2932
    %3175 = vmatprep.subr.mxu0 %v2935
    %3176 = vmatpush1.msra.mxu0 %v2934
    %3177 = vmatprep.subr.mxu0 %v2937
    %3178 = vmatpush1.msra.mxu0 %v2936
    %3179 = vmatprep.subr.mxu0 %v2939
    %3180 = vmatpush1.msra.mxu0 %v2938
    %3181 = vmatprep.subr.mxu0 %v2941
    %3182 = vmatpush1.msra.mxu0 %v2940
    %3183 = vmatprep.subr.mxu0 %v2943
    %3184 = vmatpush1.msra.mxu0 %v2942
    %3185 = vmatprep.subr.mxu0 %v2945
    %3186 = vmatpush1.msra.mxu0 %v2944
    %3187 = vmatprep.subr.mxu0 %v2947
    %3188 = vmatpush1.msra.mxu0 %v2946
    %3189 = vmatprep.subr.mxu0 %v2949
    %3190 = vmatpush1.msra.mxu0 %v2948
    %3191 = vmatprep.subr.mxu0 %v2951
    %3192 = vmatpush1.msra.mxu0 %v2950
    %3193 = vmatprep.subr.mxu0 %v2953
    %3194 = vmatpush1.msra.mxu0 %v2952
    %3195 = vmatprep.subr.mxu0 %v2955
    %3196 = vmatpush1.msra.mxu0 %v2954
    %3197 = vmatprep.subr.mxu0 %v2957
    %3198 = vmatpush1.msra.mxu0 %v2956
    %3199 = vmatprep.subr.mxu0 %v2959
    %3200 = vmatpush1.msra.mxu0 %v2958
    %3201 = vmatprep.subr.mxu0 %v2961
    %3202 = vmatpush1.msra.mxu0 %v2960
    %3203 = vmatprep.subr.mxu0 %v2963
    %3204 = vmatpush1.msra.mxu0 %v2962
    %3205 = vmatprep.subr.mxu0 %v2965
    %3206 = vmatpush1.msra.mxu0 %v2964
    %3207 = vmatprep.mubr.f32.mxu0 %v3140
    %3208 = vmatmul.mubr.f32.gmra.mrb[0].mxu0 %v3139
    %v3209 = vpop.f32.mrb[0].mxu0
    %v3210 = vadd.f32 1e-05, %v3209
    %v3211 = vpop.f32.mrb[0].mxu0
    %v3212 = vadd.f32 1e-05, %v3211
    %3213 = vdwg.mxu0
    %v3214 = vrsqrt.pop %v3210
    %v3215 = vrsqrt.pop %v3212
    %v3218 = vcombine.low %v3214, %v3215
    %v3220 = vunpack.c.l.s4 1966171168
    %v3221 = vunpack.c.0.s8 %v3220
    %v3222 = vlaneseq
    %v3223 = vshrl.u32 %v3222, 7
    %v3224 = vsub.s32 %v3221, %v3223
    %v3225 = vrot.slane %v3218, %v3224
    %v3226 = vcombine.high %v3225, %v3225
    %v3228 = vunpack.c.l.s4 1966171168
    %v3229 = vunpack.c.0.s8 %v3228
    %v3230 = vlaneseq
    %v3231 = vshrl.u32 %v3230, 7
    %v3232 = vsub.s32 %v3229, %v3231
    %v3233 = vrot.slane %v3225, %v3232
    %v3235 = vunpack.c.l.s4 1966171168
    %v3236 = vunpack.c.0.s8 %v3235
    %v3237 = vlaneseq
    %v3238 = vshrl.u32 %v3237, 7
    %v3239 = vsub.s32 %v3236, %v3238
    %v3240 = vrot.slane %v3226, %v3239
    %v3241 = vlaneseq
    %v3242 = vshrl.u32 %v3241, 7
    %v3243 = vsub.s32 0, %v3242
    %v3244 = vrot.slane %v3233, %v3243
    %v3245 = vlaneseq
    %v3246 = vshrl.u32 %v3245, 7
    %v3247 = vsub.s32 1, %v3246
    %v3248 = vrot.slane %v3233, %v3247
    %v3249 = vlaneseq
    %v3250 = vshrl.u32 %v3249, 7
    %v3251 = vsub.s32 0, %v3250
    %v3252 = vrot.slane %v3240, %v3251
    %v3253 = vlaneseq
    %v3254 = vshrl.u32 %v3253, 7
    %v3255 = vsub.s32 1, %v3254
    %v3256 = vrot.slane %v3240, %v3255
    %v3261 = vmul.f32 %v3091, %v3244
    %v3262 = vmul.f32 %v3092, %v3248
    %v3263 = vmul.f32 %v3093, %v3244
    %v3264 = vmul.f32 %v3094, %v3248
    %v3265 = vmul.f32 %v3095, %v3252
    %v3266 = vmul.f32 %v3096, %v3256
    %v3267 = vmul.f32 %v3097, %v3252
    %v3268 = vmul.f32 %v3098, %v3256
    %v3269 = vld [vmem:[#allocation15] sm:$0xff]
    %v3270 = vld [vmem:[#allocation15 + $0x8] sm:$0xff]
    %v3271 = vld [vmem:[#allocation15 + $0x10] sm:$0xff]
    %v3272 = vld [vmem:[#allocation15 + $0x18] sm:$0xff]
    %v3273 = vld [vmem:[#allocation15 + $0x20] sm:$0xff]
    %v3274 = vld [vmem:[#allocation15 + $0x28] sm:$0xff]
    %v3275 = vld [vmem:[#allocation15 + $0x30] sm:$0xff]
    %v3276 = vld [vmem:[#allocation15 + $0x38] sm:$0xff]
    %v3277 = vld [vmem:[#allocation15 + $0x40] sm:$0xff]
    %v3278 = vld [vmem:[#allocation15 + $0x48] sm:$0xff]
    %v3279 = vld [vmem:[#allocation15 + $0x50] sm:$0xff]
    %v3280 = vld [vmem:[#allocation15 + $0x58] sm:$0xff]
    %v3281 = vld [vmem:[#allocation15 + $0x60] sm:$0xff]
    %v3282 = vld [vmem:[#allocation15 + $0x68] sm:$0xff]
    %v3283 = vld [vmem:[#allocation15 + $0x70] sm:$0xff]
    %v3284 = vld [vmem:[#allocation15 + $0x78] sm:$0xff]
    %v3285 = vld [vmem:[#allocation15 + $0x80] sm:$0xff]
    %v3286 = vld [vmem:[#allocation15 + $0x88] sm:$0xff]
    %v3287 = vld [vmem:[#allocation15 + $0x90] sm:$0xff]
    %v3288 = vld [vmem:[#allocation15 + $0x98] sm:$0xff]
    %v3289 = vld [vmem:[#allocation15 + $0xa0] sm:$0xff]
    %v3290 = vld [vmem:[#allocation15 + $0xa8] sm:$0xff]
    %v3291 = vld [vmem:[#allocation15 + $0xb0] sm:$0xff]
    %v3292 = vld [vmem:[#allocation15 + $0xb8] sm:$0xff]
    %v3293 = vld [vmem:[#allocation15 + $0xc0] sm:$0xff]
    %v3294 = vld [vmem:[#allocation15 + $0xc8] sm:$0xff]
    %v3295 = vld [vmem:[#allocation15 + $0xd0] sm:$0xff]
    %v3296 = vld [vmem:[#allocation15 + $0xd8] sm:$0xff]
    %v3297 = vld [vmem:[#allocation15 + $0xe0] sm:$0xff]
    %v3298 = vld [vmem:[#allocation15 + $0xe8] sm:$0xff]
    %v3299 = vld [vmem:[#allocation15 + $0xf0] sm:$0xff]
    %v3300 = vld [vmem:[#allocation15 + $0xf8] sm:$0xff]
    %v3301 = vld [vmem:[#allocation15 + $0x100] sm:$0xff]
    %v3302 = vld [vmem:[#allocation15 + $0x108] sm:$0xff]
    %v3303 = vld [vmem:[#allocation15 + $0x110] sm:$0xff]
    %v3304 = vld [vmem:[#allocation15 + $0x118] sm:$0xff]
    %v3305 = vld [vmem:[#allocation15 + $0x120] sm:$0xff]
    %v3306 = vld [vmem:[#allocation15 + $0x128] sm:$0xff]
    %v3307 = vld [vmem:[#allocation15 + $0x130] sm:$0xff]
    %v3308 = vld [vmem:[#allocation15 + $0x138] sm:$0xff]
    %v3309 = vld [vmem:[#allocation15 + $0x140] sm:$0xff]
    %v3310 = vld [vmem:[#allocation15 + $0x148] sm:$0xff]
    %v3311 = vld [vmem:[#allocation15 + $0x150] sm:$0xff]
    %v3312 = vld [vmem:[#allocation15 + $0x158] sm:$0xff]
    %v3313 = vld [vmem:[#allocation15 + $0x160] sm:$0xff]
    %v3314 = vld [vmem:[#allocation15 + $0x168] sm:$0xff]
    %v3315 = vld [vmem:[#allocation15 + $0x170] sm:$0xff]
    %v3316 = vld [vmem:[#allocation15 + $0x178] sm:$0xff]
    %v3317 = vld [vmem:[#allocation15 + $0x180] sm:$0xff]
    %v3318 = vld [vmem:[#allocation15 + $0x188] sm:$0xff]
    %v3319 = vld [vmem:[#allocation15 + $0x190] sm:$0xff]
    %v3320 = vld [vmem:[#allocation15 + $0x198] sm:$0xff]
    %v3321 = vld [vmem:[#allocation15 + $0x1a0] sm:$0xff]
    %v3322 = vld [vmem:[#allocation15 + $0x1a8] sm:$0xff]
    %v3323 = vld [vmem:[#allocation15 + $0x1b0] sm:$0xff]
    %v3324 = vld [vmem:[#allocation15 + $0x1b8] sm:$0xff]
    %v3325 = vld [vmem:[#allocation15 + $0x1c0] sm:$0xff]
    %v3326 = vld [vmem:[#allocation15 + $0x1c8] sm:$0xff]
    %v3327 = vld [vmem:[#allocation15 + $0x1d0] sm:$0xff]
    %v3328 = vld [vmem:[#allocation15 + $0x1d8] sm:$0xff]
    %v3329 = vld [vmem:[#allocation15 + $0x1e0] sm:$0xff]
    %v3330 = vld [vmem:[#allocation15 + $0x1e8] sm:$0xff]
    %v3331 = vld [vmem:[#allocation15 + $0x1f0] sm:$0xff]
    %v3332 = vld [vmem:[#allocation15 + $0x1f8] sm:$0xff]
    %v3333 = vld [vmem:[#allocation15 + $0x200] sm:$0xff]
    %v3334 = vld [vmem:[#allocation15 + $0x208] sm:$0xff]
    %v3335 = vld [vmem:[#allocation15 + $0x210] sm:$0xff]
    %v3336 = vld [vmem:[#allocation15 + $0x218] sm:$0xff]
    %v3337 = vld [vmem:[#allocation15 + $0x220] sm:$0xff]
    %v3338 = vld [vmem:[#allocation15 + $0x228] sm:$0xff]
    %v3339 = vld [vmem:[#allocation15 + $0x230] sm:$0xff]
    %v3340 = vld [vmem:[#allocation15 + $0x238] sm:$0xff]
    %v3341 = vld [vmem:[#allocation15 + $0x240] sm:$0xff]
    %v3342 = vld [vmem:[#allocation15 + $0x248] sm:$0xff]
    %v3343 = vld [vmem:[#allocation15 + $0x250] sm:$0xff]
    %v3344 = vld [vmem:[#allocation15 + $0x258] sm:$0xff]
    %v3345 = vld [vmem:[#allocation15 + $0x260] sm:$0xff]
    %v3346 = vld [vmem:[#allocation15 + $0x268] sm:$0xff]
    %v3347 = vld [vmem:[#allocation15 + $0x270] sm:$0xff]
    %v3348 = vld [vmem:[#allocation15 + $0x278] sm:$0xff]
    %v3349 = vld [vmem:[#allocation15 + $0x280] sm:$0xff]
    %v3350 = vld [vmem:[#allocation15 + $0x288] sm:$0xff]
    %v3351 = vld [vmem:[#allocation15 + $0x290] sm:$0xff]
    %v3352 = vld [vmem:[#allocation15 + $0x298] sm:$0xff]
    %v3353 = vld [vmem:[#allocation15 + $0x2a0] sm:$0xff]
    %v3354 = vld [vmem:[#allocation15 + $0x2a8] sm:$0xff]
    %v3355 = vld [vmem:[#allocation15 + $0x2b0] sm:$0xff]
    %v3356 = vld [vmem:[#allocation15 + $0x2b8] sm:$0xff]
    %v3357 = vld [vmem:[#allocation15 + $0x2c0] sm:$0xff]
    %v3358 = vld [vmem:[#allocation15 + $0x2c8] sm:$0xff]
    %v3359 = vld [vmem:[#allocation15 + $0x2d0] sm:$0xff]
    %v3360 = vld [vmem:[#allocation15 + $0x2d8] sm:$0xff]
    %v3361 = vld [vmem:[#allocation15 + $0x2e0] sm:$0xff]
    %v3362 = vld [vmem:[#allocation15 + $0x2e8] sm:$0xff]
    %v3363 = vld [vmem:[#allocation15 + $0x2f0] sm:$0xff]
    %v3364 = vld [vmem:[#allocation15 + $0x2f8] sm:$0xff]
    %v3365 = vld [vmem:[#allocation15 + $0x300] sm:$0xff]
    %v3366 = vld [vmem:[#allocation15 + $0x308] sm:$0xff]
    %v3367 = vld [vmem:[#allocation15 + $0x310] sm:$0xff]
    %v3368 = vld [vmem:[#allocation15 + $0x318] sm:$0xff]
    %v3369 = vld [vmem:[#allocation15 + $0x320] sm:$0xff]
    %v3370 = vld [vmem:[#allocation15 + $0x328] sm:$0xff]
    %v3371 = vld [vmem:[#allocation15 + $0x330] sm:$0xff]
    %v3372 = vld [vmem:[#allocation15 + $0x338] sm:$0xff]
    %v3373 = vld [vmem:[#allocation15 + $0x340] sm:$0xff]
    %v3374 = vld [vmem:[#allocation15 + $0x348] sm:$0xff]
    %v3375 = vld [vmem:[#allocation15 + $0x350] sm:$0xff]
    %v3376 = vld [vmem:[#allocation15 + $0x358] sm:$0xff]
    %v3377 = vld [vmem:[#allocation15 + $0x360] sm:$0xff]
    %v3378 = vld [vmem:[#allocation15 + $0x368] sm:$0xff]
    %v3379 = vld [vmem:[#allocation15 + $0x370] sm:$0xff]
    %v3380 = vld [vmem:[#allocation15 + $0x378] sm:$0xff]
    %v3381 = vld [vmem:[#allocation15 + $0x380] sm:$0xff]
    %v3382 = vld [vmem:[#allocation15 + $0x388] sm:$0xff]
    %v3383 = vld [vmem:[#allocation15 + $0x390] sm:$0xff]
    %v3384 = vld [vmem:[#allocation15 + $0x398] sm:$0xff]
    %v3385 = vld [vmem:[#allocation15 + $0x3a0] sm:$0xff]
    %v3386 = vld [vmem:[#allocation15 + $0x3a8] sm:$0xff]
    %v3387 = vld [vmem:[#allocation15 + $0x3b0] sm:$0xff]
    %v3388 = vld [vmem:[#allocation15 + $0x3b8] sm:$0xff]
    %v3389 = vld [vmem:[#allocation15 + $0x3c0] sm:$0xff]
    %v3390 = vld [vmem:[#allocation15 + $0x3c8] sm:$0xff]
    %v3391 = vld [vmem:[#allocation15 + $0x3d0] sm:$0xff]
    %v3392 = vld [vmem:[#allocation15 + $0x3d8] sm:$0xff]
    %v3393 = vld [vmem:[#allocation15 + $0x3e0] sm:$0xff]
    %v3394 = vld [vmem:[#allocation15 + $0x3e8] sm:$0xff]
    %v3395 = vld [vmem:[#allocation15 + $0x3f0] sm:$0xff]
    %v3396 = vld [vmem:[#allocation15 + $0x3f8] sm:$0xff]
    %v3397 = vld [vmem:[#allocation15 + $0x400] sm:$0xff]
    %v3398 = vld [vmem:[#allocation15 + $0x408] sm:$0xff]
    %v3399 = vld [vmem:[#allocation15 + $0x410] sm:$0xff]
    %v3400 = vld [vmem:[#allocation15 + $0x418] sm:$0xff]
    %v3401 = vld [vmem:[#allocation15 + $0x420] sm:$0xff]
    %v3402 = vld [vmem:[#allocation15 + $0x428] sm:$0xff]
    %v3403 = vld [vmem:[#allocation15 + $0x430] sm:$0xff]
    %v3404 = vld [vmem:[#allocation15 + $0x438] sm:$0xff]
    %v3405 = vld [vmem:[#allocation15 + $0x440] sm:$0xff]
    %v3406 = vld [vmem:[#allocation15 + $0x448] sm:$0xff]
    %v3407 = vld [vmem:[#allocation15 + $0x450] sm:$0xff]
    %v3408 = vld [vmem:[#allocation15 + $0x458] sm:$0xff]
    %v3409 = vld [vmem:[#allocation15 + $0x460] sm:$0xff]
    %v3410 = vld [vmem:[#allocation15 + $0x468] sm:$0xff]
    %v3411 = vld [vmem:[#allocation15 + $0x470] sm:$0xff]
    %v3412 = vld [vmem:[#allocation15 + $0x478] sm:$0xff]
    %v3413 = vld [vmem:[#allocation15 + $0x480] sm:$0xff]
    %v3414 = vld [vmem:[#allocation15 + $0x488] sm:$0xff]
    %v3415 = vld [vmem:[#allocation15 + $0x490] sm:$0xff]
    %v3416 = vld [vmem:[#allocation15 + $0x498] sm:$0xff]
    %v3417 = vld [vmem:[#allocation15 + $0x4a0] sm:$0xff]
    %v3418 = vld [vmem:[#allocation15 + $0x4a8] sm:$0xff]
    %v3419 = vld [vmem:[#allocation15 + $0x4b0] sm:$0xff]
    %v3420 = vld [vmem:[#allocation15 + $0x4b8] sm:$0xff]
    %v3421 = vld [vmem:[#allocation15 + $0x4c0] sm:$0xff]
    %v3422 = vld [vmem:[#allocation15 + $0x4c8] sm:$0xff]
    %v3423 = vld [vmem:[#allocation15 + $0x4d0] sm:$0xff]
    %v3424 = vld [vmem:[#allocation15 + $0x4d8] sm:$0xff]
    %v3425 = vld [vmem:[#allocation15 + $0x4e0] sm:$0xff]
    %v3426 = vld [vmem:[#allocation15 + $0x4e8] sm:$0xff]
    %v3427 = vld [vmem:[#allocation15 + $0x4f0] sm:$0xff]
    %v3428 = vld [vmem:[#allocation15 + $0x4f8] sm:$0xff]
    %v3429 = vld [vmem:[#allocation15 + $0x500] sm:$0xff]
    %v3430 = vld [vmem:[#allocation15 + $0x508] sm:$0xff]
    %v3431 = vld [vmem:[#allocation15 + $0x510] sm:$0xff]
    %v3432 = vld [vmem:[#allocation15 + $0x518] sm:$0xff]
    %v3433 = vld [vmem:[#allocation15 + $0x520] sm:$0xff]
    %v3434 = vld [vmem:[#allocation15 + $0x528] sm:$0xff]
    %v3435 = vld [vmem:[#allocation15 + $0x530] sm:$0xff]
    %v3436 = vld [vmem:[#allocation15 + $0x538] sm:$0xff]
    %v3437 = vld [vmem:[#allocation15 + $0x540] sm:$0xff]
    %v3438 = vld [vmem:[#allocation15 + $0x548] sm:$0xff]
    %v3439 = vld [vmem:[#allocation15 + $0x550] sm:$0xff]
    %v3440 = vld [vmem:[#allocation15 + $0x558] sm:$0xff]
    %v3441 = vld [vmem:[#allocation15 + $0x560] sm:$0xff]
    %v3442 = vld [vmem:[#allocation15 + $0x568] sm:$0xff]
    %v3443 = vld [vmem:[#allocation15 + $0x570] sm:$0xff]
    %v3444 = vld [vmem:[#allocation15 + $0x578] sm:$0xff]
    %v3445 = vld [vmem:[#allocation15 + $0x580] sm:$0xff]
    %v3446 = vld [vmem:[#allocation15 + $0x588] sm:$0xff]
    %v3447 = vld [vmem:[#allocation15 + $0x590] sm:$0xff]
    %v3448 = vld [vmem:[#allocation15 + $0x598] sm:$0xff]
    %v3449 = vld [vmem:[#allocation15 + $0x5a0] sm:$0xff]
    %v3450 = vld [vmem:[#allocation15 + $0x5a8] sm:$0xff]
    %v3451 = vld [vmem:[#allocation15 + $0x5b0] sm:$0xff]
    %v3452 = vld [vmem:[#allocation15 + $0x5b8] sm:$0xff]
    %v3453 = vld [vmem:[#allocation15 + $0x5c0] sm:$0xff]
    %v3454 = vld [vmem:[#allocation15 + $0x5c8] sm:$0xff]
    %v3455 = vld [vmem:[#allocation15 + $0x5d0] sm:$0xff]
    %v3456 = vld [vmem:[#allocation15 + $0x5d8] sm:$0xff]
    %v3457 = vld [vmem:[#allocation15 + $0x5e0] sm:$0xff]
    %v3458 = vld [vmem:[#allocation15 + $0x5e8] sm:$0xff]
    %v3459 = vld [vmem:[#allocation15 + $0x5f0] sm:$0xff]
    %v3460 = vld [vmem:[#allocation15 + $0x5f8] sm:$0xff]
    %v3461 = vld [vmem:[#allocation15 + $0x600] sm:$0xff]
    %v3462 = vld [vmem:[#allocation15 + $0x608] sm:$0xff]
    %v3463 = vld [vmem:[#allocation15 + $0x610] sm:$0xff]
    %v3464 = vld [vmem:[#allocation15 + $0x618] sm:$0xff]
    %v3465 = vld [vmem:[#allocation15 + $0x620] sm:$0xff]
    %v3466 = vld [vmem:[#allocation15 + $0x628] sm:$0xff]
    %v3467 = vld [vmem:[#allocation15 + $0x630] sm:$0xff]
    %v3468 = vld [vmem:[#allocation15 + $0x638] sm:$0xff]
    %v3469 = vld [vmem:[#allocation15 + $0x640] sm:$0xff]
    %v3470 = vld [vmem:[#allocation15 + $0x648] sm:$0xff]
    %v3471 = vld [vmem:[#allocation15 + $0x650] sm:$0xff]
    %v3472 = vld [vmem:[#allocation15 + $0x658] sm:$0xff]
    %v3473 = vld [vmem:[#allocation15 + $0x660] sm:$0xff]
    %v3474 = vld [vmem:[#allocation15 + $0x668] sm:$0xff]
    %v3475 = vld [vmem:[#allocation15 + $0x670] sm:$0xff]
    %v3476 = vld [vmem:[#allocation15 + $0x678] sm:$0xff]
    %v3477 = vld [vmem:[#allocation15 + $0x680] sm:$0xff]
    %v3478 = vld [vmem:[#allocation15 + $0x688] sm:$0xff]
    %v3479 = vld [vmem:[#allocation15 + $0x690] sm:$0xff]
    %v3480 = vld [vmem:[#allocation15 + $0x698] sm:$0xff]
    %v3481 = vld [vmem:[#allocation15 + $0x6a0] sm:$0xff]
    %v3482 = vld [vmem:[#allocation15 + $0x6a8] sm:$0xff]
    %v3483 = vld [vmem:[#allocation15 + $0x6b0] sm:$0xff]
    %v3484 = vld [vmem:[#allocation15 + $0x6b8] sm:$0xff]
    %v3485 = vld [vmem:[#allocation15 + $0x6c0] sm:$0xff]
    %v3486 = vld [vmem:[#allocation15 + $0x6c8] sm:$0xff]
    %v3487 = vld [vmem:[#allocation15 + $0x6d0] sm:$0xff]
    %v3488 = vld [vmem:[#allocation15 + $0x6d8] sm:$0xff]
    %v3489 = vld [vmem:[#allocation15 + $0x6e0] sm:$0xff]
    %v3490 = vld [vmem:[#allocation15 + $0x6e8] sm:$0xff]
    %v3491 = vld [vmem:[#allocation15 + $0x6f0] sm:$0xff]
    %v3492 = vld [vmem:[#allocation15 + $0x6f8] sm:$0xff]
    %v3493 = vld [vmem:[#allocation15 + $0x700] sm:$0xff]
    %v3494 = vld [vmem:[#allocation15 + $0x708] sm:$0xff]
    %v3495 = vld [vmem:[#allocation15 + $0x710] sm:$0xff]
    %v3496 = vld [vmem:[#allocation15 + $0x718] sm:$0xff]
    %v3497 = vld [vmem:[#allocation15 + $0x720] sm:$0xff]
    %v3498 = vld [vmem:[#allocation15 + $0x728] sm:$0xff]
    %v3499 = vld [vmem:[#allocation15 + $0x730] sm:$0xff]
    %v3500 = vld [vmem:[#allocation15 + $0x738] sm:$0xff]
    %v3501 = vld [vmem:[#allocation15 + $0x740] sm:$0xff]
    %v3502 = vld [vmem:[#allocation15 + $0x748] sm:$0xff]
    %v3503 = vld [vmem:[#allocation15 + $0x750] sm:$0xff]
    %v3504 = vld [vmem:[#allocation15 + $0x758] sm:$0xff]
    %v3505 = vld [vmem:[#allocation15 + $0x760] sm:$0xff]
    %v3506 = vld [vmem:[#allocation15 + $0x768] sm:$0xff]
    %v3507 = vld [vmem:[#allocation15 + $0x770] sm:$0xff]
    %v3508 = vld [vmem:[#allocation15 + $0x778] sm:$0xff]
    %v3509 = vld [vmem:[#allocation15 + $0x780] sm:$0xff]
    %v3510 = vld [vmem:[#allocation15 + $0x788] sm:$0xff]
    %v3511 = vld [vmem:[#allocation15 + $0x790] sm:$0xff]
    %v3512 = vld [vmem:[#allocation15 + $0x798] sm:$0xff]
    %v3513 = vld [vmem:[#allocation15 + $0x7a0] sm:$0xff]
    %v3514 = vld [vmem:[#allocation15 + $0x7a8] sm:$0xff]
    %v3515 = vld [vmem:[#allocation15 + $0x7b0] sm:$0xff]
    %v3516 = vld [vmem:[#allocation15 + $0x7b8] sm:$0xff]
    %v3517 = vld [vmem:[#allocation15 + $0x7c0] sm:$0xff]
    %v3518 = vld [vmem:[#allocation15 + $0x7c8] sm:$0xff]
    %v3519 = vld [vmem:[#allocation15 + $0x7d0] sm:$0xff]
    %v3520 = vld [vmem:[#allocation15 + $0x7d8] sm:$0xff]
    %v3521 = vld [vmem:[#allocation15 + $0x7e0] sm:$0xff]
    %v3522 = vld [vmem:[#allocation15 + $0x7e8] sm:$0xff]
    %v3523 = vld [vmem:[#allocation15 + $0x7f0] sm:$0xff]
    %v3524 = vld [vmem:[#allocation15 + $0x7f8] sm:$0xff]
    %v3525 = vld [vmem:[#allocation17] sm:$0xf]
    %v3527 = vlaneseq
    %v3528 = vshrl.u32 %v3527, 7
    %v3529 = vsub.s32 0, %v3528
    %v3530 = vrot.slane %v3525, %v3529
    %v3531 = vlaneseq
    %v3532 = vshrl.u32 %v3531, 7
    %v3533 = vsub.s32 1, %v3532
    %v3534 = vrot.slane %v3525, %v3533
    %v3535 = vlaneseq
    %v3536 = vshrl.u32 %v3535, 7
    %v3537 = vsub.s32 2, %v3536
    %v3538 = vrot.slane %v3525, %v3537
    %v3539 = vlaneseq
    %v3540 = vshrl.u32 %v3539, 7
    %v3541 = vsub.s32 3, %v3540
    %v3542 = vrot.slane %v3525, %v3541
    %3547 = vmatprep.subr.mxu0 %v3270
    %3548 = vmatpush1.msra.mxu0 %v3269
    %3549 = vmatprep.subr.mxu0 %v3274
    %3550 = vmatpush1.msra.mxu0 %v3273
    %3551 = vmatprep.subr.mxu0 %v3278
    %3552 = vmatpush1.msra.mxu0 %v3277
    %3553 = vmatprep.subr.mxu0 %v3282
    %3554 = vmatpush1.msra.mxu0 %v3281
    %3555 = vmatprep.subr.mxu0 %v3286
    %3556 = vmatpush1.msra.mxu0 %v3285
    %3557 = vmatprep.subr.mxu0 %v3290
    %3558 = vmatpush1.msra.mxu0 %v3289
    %3559 = vmatprep.subr.mxu0 %v3294
    %3560 = vmatpush1.msra.mxu0 %v3293
    %3561 = vmatprep.subr.mxu0 %v3298
    %3562 = vmatpush1.msra.mxu0 %v3297
    %3563 = vmatprep.subr.mxu0 %v3302
    %3564 = vmatpush1.msra.mxu0 %v3301
    %3565 = vmatprep.subr.mxu0 %v3306
    %3566 = vmatpush1.msra.mxu0 %v3305
    %3567 = vmatprep.subr.mxu0 %v3310
    %3568 = vmatpush1.msra.mxu0 %v3309
    %3569 = vmatprep.subr.mxu0 %v3314
    %3570 = vmatpush1.msra.mxu0 %v3313
    %3571 = vmatprep.subr.mxu0 %v3318
    %3572 = vmatpush1.msra.mxu0 %v3317
    %3573 = vmatprep.subr.mxu0 %v3322
    %3574 = vmatpush1.msra.mxu0 %v3321
    %3575 = vmatprep.subr.mxu0 %v3326
    %3576 = vmatpush1.msra.mxu0 %v3325
    %3577 = vmatprep.subr.mxu0 %v3330
    %3578 = vmatpush1.msra.mxu0 %v3329
    %3579 = vmatprep.subr.mxu0 %v3334
    %3580 = vmatpush1.msra.mxu0 %v3333
    %3581 = vmatprep.subr.mxu0 %v3338
    %3582 = vmatpush1.msra.mxu0 %v3337
    %3583 = vmatprep.subr.mxu0 %v3342
    %3584 = vmatpush1.msra.mxu0 %v3341
    %3585 = vmatprep.subr.mxu0 %v3346
    %3586 = vmatpush1.msra.mxu0 %v3345
    %3587 = vmatprep.subr.mxu0 %v3350
    %3588 = vmatpush1.msra.mxu0 %v3349
    %3589 = vmatprep.subr.mxu0 %v3354
    %3590 = vmatpush1.msra.mxu0 %v3353
    %3591 = vmatprep.subr.mxu0 %v3358
    %3592 = vmatpush1.msra.mxu0 %v3357
    %3593 = vmatprep.subr.mxu0 %v3362
    %3594 = vmatpush1.msra.mxu0 %v3361
    %3595 = vmatprep.subr.mxu0 %v3366
    %3596 = vmatpush1.msra.mxu0 %v3365
    %3597 = vmatprep.subr.mxu0 %v3370
    %3598 = vmatpush1.msra.mxu0 %v3369
    %3599 = vmatprep.subr.mxu0 %v3374
    %3600 = vmatpush1.msra.mxu0 %v3373
    %3601 = vmatprep.subr.mxu0 %v3378
    %3602 = vmatpush1.msra.mxu0 %v3377
    %3603 = vmatprep.subr.mxu0 %v3382
    %3604 = vmatpush1.msra.mxu0 %v3381
    %3605 = vmatprep.subr.mxu0 %v3386
    %3606 = vmatpush1.msra.mxu0 %v3385
    %3607 = vmatprep.subr.mxu0 %v3390
    %3608 = vmatpush1.msra.mxu0 %v3389
    %3609 = vmatprep.subr.mxu0 %v3394
    %3610 = vmatpush1.msra.mxu0 %v3393
    %3611 = vmatprep.mubr.f32.mxu0 %v2859
    %3612 = vmatmul.mubr.f32.gmra.mrb[0].mxu0 %v2858
    %v3613 = vpop.f32.mrb[0].mxu0
    %v3614 = vadd.f32 %v3530, %v3613
    %v3615 = vpop.f32.mrb[0].mxu0
    %v3616 = vadd.f32 %v3534, %v3615
    %3617 = vmatprep.mubr.f32.mxu0 %v2861
    %3618 = vmatmul.mubr.f32.gmra.mrb[0].mxu0 %v2860
    %v3619 = vpop.f32.mrb[0].mxu0
    %v3620 = vadd.f32 %v3530, %v3619
    %v3621 = vpop.f32.mrb[0].mxu0
    %v3622 = vadd.f32 %v3534, %v3621
    %3623 = vmatprep.mubr.f32.mxu0 %v2863
    %3624 = vmatmul.mubr.f32.gmra.mrb[0].mxu0 %v2862
    %v3625 = vpop.f32.mrb[0].mxu0
    %v3626 = vadd.f32 %v3530, %v3625
    %v3627 = vpop.f32.mrb[0].mxu0
    %v3628 = vadd.f32 %v3534, %v3627
    %3629 = vmatprep.mubr.f32.mxu0 %v2865
    %3630 = vmatmul.mubr.f32.gmra.mrb[0].mxu0 %v2864
    %v3631 = vpop.f32.mrb[0].mxu0
    %v3632 = vadd.f32 %v3530, %v3631
    %v3633 = vpop.f32.mrb[0].mxu0
    %v3634 = vadd.f32 %v3534, %v3633
    %3635 = vdwg.mxu0
    %3636 = vmatprep.subr.mxu0 %v3398
    %3637 = vmatpush1.msra.mxu0 %v3397
    %3638 = vmatprep.subr.mxu0 %v3402
    %3639 = vmatpush1.msra.mxu0 %v3401
    %3640 = vmatprep.subr.mxu0 %v3406
    %3641 = vmatpush1.msra.mxu0 %v3405
    %3642 = vmatprep.subr.mxu0 %v3410
    %3643 = vmatpush1.msra.mxu0 %v3409
    %3644 = vmatprep.subr.mxu0 %v3414
    %3645 = vmatpush1.msra.mxu0 %v3413
    %3646 = vmatprep.subr.mxu0 %v3418
    %3647 = vmatpush1.msra.mxu0 %v3417
    %3648 = vmatprep.subr.mxu0 %v3422
    %3649 = vmatpush1.msra.mxu0 %v3421
    %3650 = vmatprep.subr.mxu0 %v3426
    %3651 = vmatpush1.msra.mxu0 %v3425
    %3652 = vmatprep.subr.mxu0 %v3430
    %3653 = vmatpush1.msra.mxu0 %v3429
    %3654 = vmatprep.subr.mxu0 %v3434
    %3655 = vmatpush1.msra.mxu0 %v3433
    %3656 = vmatprep.subr.mxu0 %v3438
    %3657 = vmatpush1.msra.mxu0 %v3437
    %3658 = vmatprep.subr.mxu0 %v3442
    %3659 = vmatpush1.msra.mxu0 %v3441
    %3660 = vmatprep.subr.mxu0 %v3446
    %3661 = vmatpush1.msra.mxu0 %v3445
    %3662 = vmatprep.subr.mxu0 %v3450
    %3663 = vmatpush1.msra.mxu0 %v3449
    %3664 = vmatprep.subr.mxu0 %v3454
    %3665 = vmatpush1.msra.mxu0 %v3453
    %3666 = vmatprep.subr.mxu0 %v3458
    %3667 = vmatpush1.msra.mxu0 %v3457
    %3668 = vmatprep.subr.mxu0 %v3462
    %3669 = vmatpush1.msra.mxu0 %v3461
    %3670 = vmatprep.subr.mxu0 %v3466
    %3671 = vmatpush1.msra.mxu0 %v3465
    %3672 = vmatprep.subr.mxu0 %v3470
    %3673 = vmatpush1.msra.mxu0 %v3469
    %3674 = vmatprep.subr.mxu0 %v3474
    %3675 = vmatpush1.msra.mxu0 %v3473
    %3676 = vmatprep.subr.mxu0 %v3478
    %3677 = vmatpush1.msra.mxu0 %v3477
    %3678 = vmatprep.subr.mxu0 %v3482
    %3679 = vmatpush1.msra.mxu0 %v3481
    %3680 = vmatprep.subr.mxu0 %v3486
    %3681 = vmatpush1.msra.mxu0 %v3485
    %3682 = vmatprep.subr.mxu0 %v3490
    %3683 = vmatpush1.msra.mxu0 %v3489
    %3684 = vmatprep.subr.mxu0 %v3494
    %3685 = vmatpush1.msra.mxu0 %v3493
    %3686 = vmatprep.subr.mxu0 %v3498
    %3687 = vmatpush1.msra.mxu0 %v3497
    %3688 = vmatprep.subr.mxu0 %v3502
    %3689 = vmatpush1.msra.mxu0 %v3501
    %3690 = vmatprep.subr.mxu0 %v3506
    %3691 = vmatpush1.msra.mxu0 %v3505
    %3692 = vmatprep.subr.mxu0 %v3510
    %3693 = vmatpush1.msra.mxu0 %v3509
    %3694 = vmatprep.subr.mxu0 %v3514
    %3695 = vmatpush1.msra.mxu0 %v3513
    %3696 = vmatprep.subr.mxu0 %v3518
    %3697 = vmatpush1.msra.mxu0 %v3517
    %3698 = vmatprep.subr.mxu0 %v3522
    %3699 = vmatpush1.msra.mxu0 %v3521
    %3700 = vmatprep.mubr.f32.mxu0 %v3262
    %3701 = vmatmul.mubr.f32.gmra.mrb[0].mxu0 %v3261
    %v3702 = vpop.f32.mrb[0].mxu0
    %v3703 = vadd.f32 %v3614, %v3702
    %v3704 = vpop.f32.mrb[0].mxu0
    %v3705 = vadd.f32 %v3616, %v3704
    %3706 = vmatprep.mubr.f32.mxu0 %v3264
    %3707 = vmatmul.mubr.f32.gmra.mrb[0].mxu0 %v3263
    %v3708 = vpop.f32.mrb[0].mxu0
    %v3709 = vadd.f32 %v3620, %v3708
    %v3710 = vpop.f32.mrb[0].mxu0
    %v3711 = vadd.f32 %v3622, %v3710
    %3712 = vmatprep.mubr.f32.mxu0 %v3266
    %3713 = vmatmul.mubr.f32.gmra.mrb[0].mxu0 %v3265
    %v3714 = vpop.f32.mrb[0].mxu0
    %v3715 = vadd.f32 %v3626, %v3714
    %v3716 = vpop.f32.mrb[0].mxu0
    %v3717 = vadd.f32 %v3628, %v3716
    %3718 = vmatprep.mubr.f32.mxu0 %v3268
    %3719 = vmatmul.mubr.f32.gmra.mrb[0].mxu0 %v3267
    %v3720 = vpop.f32.mrb[0].mxu0
    %v3721 = vadd.f32 %v3632, %v3720
    %v3722 = vpop.f32.mrb[0].mxu0
    %v3723 = vadd.f32 %v3634, %v3722
    %3724 = vdwg.mxu0
    %3725 = vmatprep.subr.mxu0 %v3272
    %3726 = vmatpush1.msra.mxu0 %v3271
    %3727 = vmatprep.subr.mxu0 %v3276
    %3728 = vmatpush1.msra.mxu0 %v3275
    %3729 = vmatprep.subr.mxu0 %v3280
    %3730 = vmatpush1.msra.mxu0 %v3279
    %3731 = vmatprep.subr.mxu0 %v3284
    %3732 = vmatpush1.msra.mxu0 %v3283
    %3733 = vmatprep.subr.mxu0 %v3288
    %3734 = vmatpush1.msra.mxu0 %v3287
    %3735 = vmatprep.subr.mxu0 %v3292
    %3736 = vmatpush1.msra.mxu0 %v3291
    %3737 = vmatprep.subr.mxu0 %v3296
    %3738 = vmatpush1.msra.mxu0 %v3295
    %3739 = vmatprep.subr.mxu0 %v3300
    %3740 = vmatpush1.msra.mxu0 %v3299
    %3741 = vmatprep.subr.mxu0 %v3304
    %3742 = vmatpush1.msra.mxu0 %v3303
    %3743 = vmatprep.subr.mxu0 %v3308
    %3744 = vmatpush1.msra.mxu0 %v3307
    %3745 = vmatprep.subr.mxu0 %v3312
    %3746 = vmatpush1.msra.mxu0 %v3311
    %3747 = vmatprep.subr.mxu0 %v3316
    %3748 = vmatpush1.msra.mxu0 %v3315
    %3749 = vmatprep.subr.mxu0 %v3320
    %3750 = vmatpush1.msra.mxu0 %v3319
    %3751 = vmatprep.subr.mxu0 %v3324
    %3752 = vmatpush1.msra.mxu0 %v3323
    %3753 = vmatprep.subr.mxu0 %v3328
    %3754 = vmatpush1.msra.mxu0 %v3327
    %3755 = vmatprep.subr.mxu0 %v3332
    %3756 = vmatpush1.msra.mxu0 %v3331
    %3757 = vmatprep.subr.mxu0 %v3336
    %3758 = vmatpush1.msra.mxu0 %v3335
    %3759 = vmatprep.subr.mxu0 %v3340
    %3760 = vmatpush1.msra.mxu0 %v3339
    %3761 = vmatprep.subr.mxu0 %v3344
    %3762 = vmatpush1.msra.mxu0 %v3343
    %3763 = vmatprep.subr.mxu0 %v3348
    %3764 = vmatpush1.msra.mxu0 %v3347
    %3765 = vmatprep.subr.mxu0 %v3352
    %3766 = vmatpush1.msra.mxu0 %v3351
    %3767 = vmatprep.subr.mxu0 %v3356
    %3768 = vmatpush1.msra.mxu0 %v3355
    %3769 = vmatprep.subr.mxu0 %v3360
    %3770 = vmatpush1.msra.mxu0 %v3359
    %3771 = vmatprep.subr.mxu0 %v3364
    %3772 = vmatpush1.msra.mxu0 %v3363
    %3773 = vmatprep.subr.mxu0 %v3368
    %3774 = vmatpush1.msra.mxu0 %v3367
    %3775 = vmatprep.subr.mxu0 %v3372
    %3776 = vmatpush1.msra.mxu0 %v3371
    %3777 = vmatprep.subr.mxu0 %v3376
    %3778 = vmatpush1.msra.mxu0 %v3375
    %3779 = vmatprep.subr.mxu0 %v3380
    %3780 = vmatpush1.msra.mxu0 %v3379
    %3781 = vmatprep.subr.mxu0 %v3384
    %3782 = vmatpush1.msra.mxu0 %v3383
    %3783 = vmatprep.subr.mxu0 %v3388
    %3784 = vmatpush1.msra.mxu0 %v3387
    %3785 = vmatprep.subr.mxu0 %v3392
    %3786 = vmatpush1.msra.mxu0 %v3391
    %3787 = vmatprep.subr.mxu0 %v3396
    %3788 = vmatpush1.msra.mxu0 %v3395
    %3789 = vmatprep.mubr.f32.mxu0 %v2859
    %3790 = vmatmul.mubr.f32.gmra.mrb[0].mxu0 %v2858
    %v3791 = vpop.f32.mrb[0].mxu0
    %v3792 = vadd.f32 %v3538, %v3791
    %v3793 = vpop.f32.mrb[0].mxu0
    %v3794 = vadd.f32 %v3542, %v3793
    %3795 = vmatprep.mubr.f32.mxu0 %v2861
    %3796 = vmatmul.mubr.f32.gmra.mrb[0].mxu0 %v2860
    %v3797 = vpop.f32.mrb[0].mxu0
    %v3798 = vadd.f32 %v3538, %v3797
    %v3799 = vpop.f32.mrb[0].mxu0
    %v3800 = vadd.f32 %v3542, %v3799
    %3801 = vmatprep.mubr.f32.mxu0 %v2863
    %3802 = vmatmul.mubr.f32.gmra.mrb[0].mxu0 %v2862
    %v3803 = vpop.f32.mrb[0].mxu0
    %v3804 = vadd.f32 %v3538, %v3803
    %v3805 = vpop.f32.mrb[0].mxu0
    %v3806 = vadd.f32 %v3542, %v3805
    %3807 = vmatprep.mubr.f32.mxu0 %v2865
    %3808 = vmatmul.mubr.f32.gmra.mrb[0].mxu0 %v2864
    %v3809 = vpop.f32.mrb[0].mxu0
    %v3810 = vadd.f32 %v3538, %v3809
    %v3811 = vpop.f32.mrb[0].mxu0
    %v3812 = vadd.f32 %v3542, %v3811
    %3813 = vdwg.mxu0
    %3814 = vmatprep.subr.mxu0 %v3400
    %3815 = vmatpush1.msra.mxu0 %v3399
    %3816 = vmatprep.subr.mxu0 %v3404
    %3817 = vmatpush1.msra.mxu0 %v3403
    %3818 = vmatprep.subr.mxu0 %v3408
    %3819 = vmatpush1.msra.mxu0 %v3407
    %3820 = vmatprep.subr.mxu0 %v3412
    %3821 = vmatpush1.msra.mxu0 %v3411
    %3822 = vmatprep.subr.mxu0 %v3416
    %3823 = vmatpush1.msra.mxu0 %v3415
    %3824 = vmatprep.subr.mxu0 %v3420
    %3825 = vmatpush1.msra.mxu0 %v3419
    %3826 = vmatprep.subr.mxu0 %v3424
    %3827 = vmatpush1.msra.mxu0 %v3423
    %3828 = vmatprep.subr.mxu0 %v3428
    %3829 = vmatpush1.msra.mxu0 %v3427
    %3830 = vmatprep.subr.mxu0 %v3432
    %3831 = vmatpush1.msra.mxu0 %v3431
    %3832 = vmatprep.subr.mxu0 %v3436
    %3833 = vmatpush1.msra.mxu0 %v3435
    %3834 = vmatprep.subr.mxu0 %v3440
    %3835 = vmatpush1.msra.mxu0 %v3439
    %3836 = vmatprep.subr.mxu0 %v3444
    %3837 = vmatpush1.msra.mxu0 %v3443
    %3838 = vmatprep.subr.mxu0 %v3448
    %3839 = vmatpush1.msra.mxu0 %v3447
    %3840 = vmatprep.subr.mxu0 %v3452
    %3841 = vmatpush1.msra.mxu0 %v3451
    %3842 = vmatprep.subr.mxu0 %v3456
    %3843 = vmatpush1.msra.mxu0 %v3455
    %3844 = vmatprep.subr.mxu0 %v3460
    %3845 = vmatpush1.msra.mxu0 %v3459
    %3846 = vmatprep.subr.mxu0 %v3464
    %3847 = vmatpush1.msra.mxu0 %v3463
    %3848 = vmatprep.subr.mxu0 %v3468
    %3849 = vmatpush1.msra.mxu0 %v3467
    %3850 = vmatprep.subr.mxu0 %v3472
    %3851 = vmatpush1.msra.mxu0 %v3471
    %3852 = vmatprep.subr.mxu0 %v3476
    %3853 = vmatpush1.msra.mxu0 %v3475
    %3854 = vmatprep.subr.mxu0 %v3480
    %3855 = vmatpush1.msra.mxu0 %v3479
    %3856 = vmatprep.subr.mxu0 %v3484
    %3857 = vmatpush1.msra.mxu0 %v3483
    %3858 = vmatprep.subr.mxu0 %v3488
    %3859 = vmatpush1.msra.mxu0 %v3487
    %3860 = vmatprep.subr.mxu0 %v3492
    %3861 = vmatpush1.msra.mxu0 %v3491
    %3862 = vmatprep.subr.mxu0 %v3496
    %3863 = vmatpush1.msra.mxu0 %v3495
    %3864 = vmatprep.subr.mxu0 %v3500
    %3865 = vmatpush1.msra.mxu0 %v3499
    %3866 = vmatprep.subr.mxu0 %v3504
    %3867 = vmatpush1.msra.mxu0 %v3503
    %3868 = vmatprep.subr.mxu0 %v3508
    %3869 = vmatpush1.msra.mxu0 %v3507
    %3870 = vmatprep.subr.mxu0 %v3512
    %3871 = vmatpush1.msra.mxu0 %v3511
    %3872 = vmatprep.subr.mxu0 %v3516
    %3873 = vmatpush1.msra.mxu0 %v3515
    %3874 = vmatprep.subr.mxu0 %v3520
    %3875 = vmatpush1.msra.mxu0 %v3519
    %3876 = vmatprep.subr.mxu0 %v3524
    %3877 = vmatpush1.msra.mxu0 %v3523
    %3878 = vmatprep.mubr.f32.mxu0 %v3262
    %3879 = vmatmul.mubr.f32.gmra.mrb[0].mxu0 %v3261
    %v3880 = vpop.f32.mrb[0].mxu0
    %v3881 = vadd.f32 %v3792, %v3880
    %v3882 = vpop.f32.mrb[0].mxu0
    %v3883 = vadd.f32 %v3794, %v3882
    %3884 = vmatprep.mubr.f32.mxu0 %v3264
    %3885 = vmatmul.mubr.f32.gmra.mrb[0].mxu0 %v3263
    %v3886 = vpop.f32.mrb[0].mxu0
    %v3887 = vadd.f32 %v3798, %v3886
    %v3888 = vpop.f32.mrb[0].mxu0
    %v3889 = vadd.f32 %v3800, %v3888
    %3890 = vmatprep.mubr.f32.mxu0 %v3266
    %3891 = vmatmul.mubr.f32.gmra.mrb[0].mxu0 %v3265
    %v3892 = vpop.f32.mrb[0].mxu0
    %v3893 = vadd.f32 %v3804, %v3892
    %v3894 = vpop.f32.mrb[0].mxu0
    %v3895 = vadd.f32 %v3806, %v3894
    %3896 = vmatprep.mubr.f32.mxu0 %v3268
    %3897 = vmatmul.mubr.f32.gmra.mrb[0].mxu0 %v3267
    %v3898 = vpop.f32.mrb[0].mxu0
    %v3899 = vadd.f32 %v3810, %v3898
    %v3900 = vpop.f32.mrb[0].mxu0
    %v3901 = vadd.f32 %v3812, %v3900
    %3902 = vdwg.mxu0
    %v3903 = vmax.f32 %v3703, 0.0
    %v3904 = vmax.f32 %v3705, 0.0
    %v3905 = vmax.f32 %v3881, 0.0
    %v3906 = vmax.f32 %v3883, 0.0
    %v3907 = vmax.f32 %v3709, 0.0
    %v3908 = vmax.f32 %v3711, 0.0
    %v3909 = vmax.f32 %v3887, 0.0
    %v3910 = vmax.f32 %v3889, 0.0
    %v3911 = vmax.f32 %v3715, 0.0
    %v3912 = vmax.f32 %v3717, 0.0
    %v3913 = vmax.f32 %v3893, 0.0
    %v3914 = vmax.f32 %v3895, 0.0
    %v3915 = vmax.f32 %v3721, 0.0
    %v3916 = vmax.f32 %v3723, 0.0
    %v3917 = vmax.f32 %v3899, 0.0
    %v3918 = vmax.f32 %v3901, 0.0
    %3919 = vst [vmem:[#allocation18] sm:$0xff] %v3903
    %3920 = vst [vmem:[#allocation18 + $0x8] sm:$0xff] %v3904
    %3921 = vst [vmem:[#allocation18 + $0x10] sm:$0xff] %v3905
    %3922 = vst [vmem:[#allocation18 + $0x18] sm:$0xff] %v3906
    %3923 = vst [vmem:[#allocation18 + $0x20] sm:$0xff] %v3907
    %3924 = vst [vmem:[#allocation18 + $0x28] sm:$0xff] %v3908
    %3925 = vst [vmem:[#allocation18 + $0x30] sm:$0xff] %v3909
    %3926 = vst [vmem:[#allocation18 + $0x38] sm:$0xff] %v3910
    %3927 = vst [vmem:[#allocation18 + $0x40] sm:$0xff] %v3911
    %3928 = vst [vmem:[#allocation18 + $0x48] sm:$0xff] %v3912
    %3929 = vst [vmem:[#allocation18 + $0x50] sm:$0xff] %v3913
    %3930 = vst [vmem:[#allocation18 + $0x58] sm:$0xff] %v3914
    %3931 = vst [vmem:[#allocation18 + $0x60] sm:$0xff] %v3915
    %3932 = vst [vmem:[#allocation18 + $0x68] sm:$0xff] %v3916
    %3933 = vst [vmem:[#allocation18 + $0x70] sm:$0xff] %v3917
    %3934 = vst [vmem:[#allocation18 + $0x78] sm:$0xff] %v3918
    // Predicated region
    $region74: #{tpu_custom_call.1} parent=1 // pred_check
      _
    $region75: #{tpu_custom_call.1} parent=1 // pred_check_branch
      %3936 = sbr.rel (0) target = $region77
    $region76: #{tpu_custom_call.1} parent=1 // pred_region
      %s3938 = ssub.s32 2048, 2048
      %3939 = vsyncadd [#allocation5], %s3938
      %s3940 = sshll.u32 [#allocation18], 4
      %s3941 = int_to_ptr.vmem [resolvable:$true] %s3940
      %3946 = dma.vmem_to_hbm [thread:$0]  %s3941, 2048, %s9, [#allocation5], 512, 512, 32
    $region77: #{tpu_custom_call.1} parent=1 // pred_fallthru
      _
    // Predicated region
    $region78: #{tpu_custom_call.1} parent=1 // pred_check
      _
    $region79: #{tpu_custom_call.1} parent=1 // pred_check_branch
      %3948 = sbr.rel (0) target = $region81
    $region80: #{tpu_custom_call.1} parent=1 // pred_region
      %3949 = dma.done [#allocation5], 2048
    $region81: #{tpu_custom_call.1} parent=1 // pred_fallthru
      _
    %3950 = vsyncpa [#allocation4], 1
    %3951 = vsyncpa [#allocation7], 1
    %3952 = vsyncpa [#allocation10], 1
    %3953 = vsyncpa [#allocation13], 1
    %3954 = vsyncpa [#allocation16], 1
    %3955 = vsyncpa [#allocation5], 1

</llo_original>
